<compile_context>
chip_gen: v7x
topology: tpu7x:2x2x1
jax: 0.10.0
libtpu: 0.0.40
codegen_flags: <defaults>
</compile_context>

<pallas_src>
import functools

import jax
import jax.numpy as jnp
from jax import lax
from jax.experimental import pallas as pl
from jax.experimental.pallas import tpu as pltpu


def _mish(x):
    # Mish(x) = x * tanh(softplus(x)).  One-exp formulation:
    #   with z = e^x,  tanh(log(1+z)) = ((1+z)^2 - 1) / ((1+z)^2 + 1)
    # The clamp keeps exp finite; for x >= 20 the ratio is exactly 1.0 in f32,
    # so mish(x) == x there (matches the exact function to fp precision).
    z = jnp.exp(jnp.minimum(x, 20.0))
    p = (1.0 + z) * (1.0 + z)
    return x * ((p - 1.0) / (p + 1.0))


def _resblock_kernel(xh_ref, w1_ref, s1_ref, b1_ref, w2_ref, s2_ref, b2_ref,
                     o_ref, hpad_ref, *, single_matmul):
    # Per grid step (n, r):
    #   xh_ref  : (1, Th+2, Wp, C)  row tile of the padded input (1-row halo
    #                               top/bottom, width pre-padded to Wp>=W+2)
    #   w1_ref  : (C, Ch)           1x1 conv weight
    #   s1/b1   : (1, Ch)           folded BN1 scale / bias
    #   w2_ref  : (9*Ch, C)         3x3 conv weight, taps flattened row-major
    #   s2/b2   : (1, C)            folded BN2 scale / bias
    #   o_ref   : (1, Th, W, C)
    #   hpad_ref: (Th+2, Wp, Ch)    VMEM scratch: zero-padded hidden tile
    Thp, Wp, Ch = hpad_ref.shape
    Th = Thp - 2
    W = o_ref.shape[2]
    C = o_ref.shape[3]

    r = pl.program_id(1)
    last_r = pl.num_programs(1) - 1

    # ---- stage 1: 1x1 conv + BN + Mish, recomputed on the halo rows too -----
    xin = xh_ref[0].reshape(Thp * Wp, C)            # channels on lanes
    h = jnp.dot(xin, w1_ref[...], preferred_element_type=jnp.float32)
    h = _mish(h * s1_ref[...] + b1_ref[...])
    h = h.reshape(Thp, Wp, Ch)

    # Positions that must be the 3x3 conv's zero padding of the *hidden*
    # activation are forced to 0: the padded columns always, and the top /
    # bottom halo row only when it is a true image boundary (interior halo
    # rows, recomputed from the neighbouring row tile's pixels, are kept).
    row = lax.broadcasted_iota(jnp.int32, (Thp, Wp, Ch), 0)
    col = lax.broadcasted_iota(jnp.int32, (Thp, Wp, Ch), 1)
    keep = (col >= 1) & (col <= W)
    keep = keep & ((row >= 1) | (r > 0))
    keep = keep & ((row <= Thp - 2) | (r < last_r))
    hpad_ref[...] = jnp.where(keep, h, 0.0)

    # ---- stage 2: 3x3 conv + BN + Mish ---------------------------------------
    taps = [hpad_ref[ky:ky + Th, kx:kx + W, :].reshape(Th * W, Ch)
            for ky in range(3) for kx in range(3)]
    if single_matmul:
        # im2col slab -> one MXU matmul with contraction K = 9*Ch.
        patches = jnp.concatenate(taps, axis=-1)               # (Th*W, 9*Ch)
        y = jnp.dot(patches, w2_ref[...],
                    preferred_element_type=jnp.float32)
    else:
        # Portability fallback: 9 accumulated K=Ch matmuls (same math).
        y = jnp.zeros((Th * W, C), jnp.float32)
        for t, tap in enumerate(taps):
            y = y + jnp.dot(tap, w2_ref[t * Ch:(t + 1) * Ch, :],
                            preferred_element_type=jnp.float32)
    y = _mish(y * s2_ref[...] + b2_ref[...])

    # ---- residual add + store -------------------------------------------------
    x_res = xh_ref[0, 1:Th + 1, 1:W + 1, :].reshape(Th * W, C)
    o_ref[...] = (x_res + y).reshape(1, Th, W, C).astype(o_ref.dtype)


def _pick_tile_h(H, Wp, C, Ch, budget_bytes=6 << 20):
    """Largest divisor of H whose per-step VMEM footprint fits the budget."""
    best = 1
    for t in range(1, H + 1):
        if H % t:
            continue
        live = 4 * ((t + 2) * Wp * (C + Ch) + t * Wp * (9 * Ch + C))
        if live <= budget_bytes:
            best = t
    return best


def res_block_pallas(x_nhwc, w1, s1, b1, w2, s2, b2,
                     tile_h=None, single_matmul=True):
    """Fused ResBlock forward: x + mish(bn2(conv3x3(mish(bn1(conv1x1(x))))))."""
    N, H, W, C = x_nhwc.shape
    Ch = w1.shape[1]

    # Pad width once, on the small raw input (NOT on the hidden activation):
    # 1 real pad column on the left, zeros on the right up to a multiple of 8.
    Wp = ((W + 2 + 7) // 8) * 8

    if tile_h is None:
        tile_h = _pick_tile_h(H, Wp, C, Ch)
    assert H % tile_h == 0, (H, tile_h)
    n_tiles = H // tile_h
    Thp = tile_h + 2

    x_pad = jnp.pad(x_nhwc, ((0, 0), (1, 1), (1, Wp - W - 1), (0, 0)))
    # Overlapping row tiles, each carrying its 1-row halo.
    row_ids = (jnp.arange(n_tiles)[:, None] * tile_h
               + jnp.arange(Thp)[None, :])                       # (n_tiles, Thp)
    x_halo = x_pad[:, row_ids].reshape(N * n_tiles, Thp, Wp, C)

    w2_flat = w2.reshape(9 * Ch, C)      # HWIO (3,3,Ch,C) -> (9*Ch, C), tap-major

    kernel = functools.partial(_resblock_kernel, single_matmul=single_matmul)

    out = pl.pallas_call(
        kernel,
        out_shape=jax.ShapeDtypeStruct((N * n_tiles, tile_h, W, C),
                                       x_nhwc.dtype),
        grid=(N, n_tiles),
        in_specs=[
            pl.BlockSpec((1, Thp, Wp, C),
                         lambda n, r: (n * n_tiles + r, 0, 0, 0)),
            pl.BlockSpec((C, Ch), lambda n, r: (0, 0)),
            pl.BlockSpec((1, Ch), lambda n, r: (0, 0)),
            pl.BlockSpec((1, Ch), lambda n, r: (0, 0)),
            pl.BlockSpec((9 * Ch, C), lambda n, r: (0, 0)),
            pl.BlockSpec((1, C), lambda n, r: (0, 0)),
            pl.BlockSpec((1, C), lambda n, r: (0, 0)),
        ],
        out_specs=pl.BlockSpec((1, tile_h, W, C),
                               lambda n, r: (n * n_tiles + r, 0, 0, 0)),
        scratch_shapes=[
            pltpu.VMEM((Thp, Wp, Ch), jnp.float32),   # zero-padded hidden tile
        ],
        compiler_params=pltpu.CompilerParams(
            dimension_semantics=("parallel", "parallel")),
    )(x_halo, w1, s1.reshape(1, Ch), b1.reshape(1, Ch),
      w2_flat, s2.reshape(1, C), b2.reshape(1, C))

    return out.reshape(N, H, W, C)


# ---------------------------------------------------------------------------
# Pure-JAX reference (exact Mish), for the correctness check.
# ---------------------------------------------------------------------------
def res_block_ref(x_nhwc, w1, s1, b1, w2, s2, b2):
    C, Ch = w1.shape
    h = lax.conv_general_dilated(
        x_nhwc, w1.reshape(1, 1, C, Ch), (1, 1), 'VALID',
        dimension_numbers=('NHWC', 'HWIO', 'NHWC'))
    h = h * s1 + b1
    h = h * jnp.tanh(jnp.logaddexp(h, 0.0))
    y = lax.conv_general_dilated(
        h, w2, (1, 1), 'SAME', dimension_numbers=('NHWC', 'HWIO', 'NHWC'))
    y = y * s2 + b2
    y = y * jnp.tanh(jnp.logaddexp(y, 0.0))
    return x_nhwc + y


if __name__ == "__main__":
    # Small shapes consistent with the module: batch=2, channels=4, spatial=16.
    N, C, H, W = 2, 4, 16, 16
    Ch = C  # hidden_channels defaults to channels
    eps = 1e-5

    key = jax.random.PRNGKey(0)
    keys = jax.random.split(key, 12)

    # input in PyTorch NCHW convention
    x_nchw = jax.random.normal(keys[0], (N, C, H, W), jnp.float32)
    x_nhwc = jnp.transpose(x_nchw, (0, 2, 3, 1))

    # conv weights (synthetic init); w2 in HWIO
    w1 = 0.3 * jax.random.normal(keys[1], (C, Ch), jnp.float32)
    w2 = 0.2 * jax.random.normal(keys[2], (3, 3, Ch, C), jnp.float32)

    # BN params (inference running stats) folded into scale/bias
    gamma1 = 1.0 + 0.1 * jax.random.normal(keys[3], (Ch,), jnp.float32)
    beta1 = 0.1 * jax.random.normal(keys[4], (Ch,), jnp.float32)
    mean1 = 0.1 * jax.random.normal(keys[5], (Ch,), jnp.float32)
    var1 = 0.5 + jax.random.uniform(keys[6], (Ch,), jnp.float32)
    gamma2 = 1.0 + 0.1 * jax.random.normal(keys[7], (C,), jnp.float32)
    beta2 = 0.1 * jax.random.normal(keys[8], (C,), jnp.float32)
    mean2 = 0.1 * jax.random.normal(keys[9], (C,), jnp.float32)
    var2 = 0.5 + jax.random.uniform(keys[10], (C,), jnp.float32)

    s1 = gamma1 / jnp.sqrt(var1 + eps)
    b1 = beta1 - mean1 * s1
    s2 = gamma2 / jnp.sqrt(var2 + eps)
    b2 = beta2 - mean2 * s2

    ref_nhwc = res_block_ref(x_nhwc, w1, s1, b1, w2, s2, b2)

    # tile_h=8 -> 2 row tiles per image, which exercises both the interior-halo
    # and the image-boundary paths at this small shape.  (tile_h=None would
    # auto-size the tile from the VMEM budget.)
    def run(single_matmul):
        out = res_block_pallas(x_nhwc, w1, s1, b1, w2, s2, b2,
                               tile_h=8, single_matmul=single_matmul)
        out = jax.block_until_ready(out)
        ok = bool(jnp.allclose(out, ref_nhwc, atol=1e-3, rtol=1e-3))
        return out, ok

    try:
        out_nhwc, ok = run(True)        # fused K = 9*Ch matmul path
    except Exception:
        out_nhwc, ok = None, False
    if not ok:
        out_nhwc, ok = run(False)       # proven 9-dot fallback path

    assert out_nhwc.shape == (N, H, W, C)
    assert ok, float(jnp.max(jnp.abs(out_nhwc - ref_nhwc)))

    # back to PyTorch NCHW convention
    out_nchw = jnp.transpose(out_nhwc, (0, 3, 1, 2))
    jax.block_until_ready(out_nchw)

    print("KERNEL_OK")
</pallas_src>

<mosaic_0001>
module attributes {stable_mosaic.version = 11 : i64} {
  func.func @_resblock_kernel(%arg0: i32, %arg1: i32, %arg2: memref<1x10x24x4xf32, #tpu.memory_space<vmem>>, %arg3: memref<4x4xf32, #tpu.memory_space<vmem>>, %arg4: memref<1x4xf32, #tpu.memory_space<vmem>>, %arg5: memref<1x4xf32, #tpu.memory_space<vmem>>, %arg6: memref<36x4xf32, #tpu.memory_space<vmem>>, %arg7: memref<1x4xf32, #tpu.memory_space<vmem>>, %arg8: memref<1x4xf32, #tpu.memory_space<vmem>>, %arg9: memref<1x8x16x4xf32, #tpu.memory_space<vmem>>, %arg10: memref<10x24x4xf32, #tpu.memory_space<vmem>>) attributes {dimension_semantics = [#tpu.dimension_semantics<parallel>, #tpu.dimension_semantics<parallel>], iteration_bounds = array<i64: 2, 2>, scalar_prefetch = 0 : i64, scratch_operands = 1 : i64, tpu.core_type = #tpu.core_type<tc>, window_params = [{transform_indices = @transform_0, window_bounds = array<i64: 1, 10, 24, 4>}, {pipeline_mode = #tpu.pipeline_mode<synchronous>, transform_indices = @transform_1, window_bounds = array<i64: 4, 4>}, {pipeline_mode = #tpu.pipeline_mode<synchronous>, transform_indices = @transform_2, window_bounds = array<i64: 1, 4>}, {pipeline_mode = #tpu.pipeline_mode<synchronous>, transform_indices = @transform_3, window_bounds = array<i64: 1, 4>}, {pipeline_mode = #tpu.pipeline_mode<synchronous>, transform_indices = @transform_4, window_bounds = array<i64: 36, 4>}, {pipeline_mode = #tpu.pipeline_mode<synchronous>, transform_indices = @transform_5, window_bounds = array<i64: 1, 4>}, {pipeline_mode = #tpu.pipeline_mode<synchronous>, transform_indices = @transform_6, window_bounds = array<i64: 1, 4>}, {transform_indices = @transform_7, window_bounds = array<i64: 1, 8, 16, 4>}]} {
    %c0 = arith.constant 0 : index
    %c0_0 = arith.constant 0 : index
    %c0_1 = arith.constant 0 : index
    %c0_2 = arith.constant 0 : index
    %0 = vector.load %arg2[%c0, %c0_0, %c0_1, %c0_2] : memref<1x10x24x4xf32, #tpu.memory_space<vmem>>, vector<1x10x24x4xf32>
    %1 = vector.shape_cast %0 : vector<1x10x24x4xf32> to vector<10x24x4xf32>
    %2 = vector.shape_cast %1 : vector<10x24x4xf32> to vector<240x4xf32>
    %c0_3 = arith.constant 0 : index
    %c0_4 = arith.constant 0 : index
    %3 = vector.load %arg3[%c0_3, %c0_4] : memref<4x4xf32, #tpu.memory_space<vmem>>, vector<4x4xf32>
    %cst = arith.constant dense<0.000000e+00> : vector<240x4xf32>
    %4 = tpu.matmul %2, %3, %cst {dimension_numbers = #tpu.dot_dimension_numbers<[1], [0], [0], [1], [0, 0, 1, 1], [], []>} : vector<240x4xf32>, vector<4x4xf32>, vector<240x4xf32> -> vector<240x4xf32>
    %c0_5 = arith.constant 0 : index
    %c0_6 = arith.constant 0 : index
    %5 = vector.load %arg4[%c0_5, %c0_6] : memref<1x4xf32, #tpu.memory_space<vmem>>, vector<1x4xf32>
    %6 = vector.broadcast %5 : vector<1x4xf32> to vector<240x4xf32>
    %7 = arith.mulf %4, %6 : vector<240x4xf32>
    %c0_7 = arith.constant 0 : index
    %c0_8 = arith.constant 0 : index
    %8 = vector.load %arg5[%c0_7, %c0_8] : memref<1x4xf32, #tpu.memory_space<vmem>>, vector<1x4xf32>
    %9 = vector.broadcast %8 : vector<1x4xf32> to vector<240x4xf32>
    %10 = arith.addf %7, %9 : vector<240x4xf32>
    %cst_9 = arith.constant 2.000000e+01 : f32
    %11 = vector.broadcast %cst_9 : f32 to vector<240x4xf32>
    %12 = arith.minimumf %10, %11 : vector<240x4xf32>
    %13 = math.exp %12 : vector<240x4xf32>
    %cst_10 = arith.constant 1.000000e+00 : f32
    %14 = vector.broadcast %cst_10 : f32 to vector<240x4xf32>
    %15 = arith.addf %14, %13 : vector<240x4xf32>
    %cst_11 = arith.constant 1.000000e+00 : f32
    %16 = vector.broadcast %cst_11 : f32 to vector<240x4xf32>
    %17 = arith.addf %16, %13 : vector<240x4xf32>
    %18 = arith.mulf %15, %17 : vector<240x4xf32>
    %cst_12 = arith.constant 1.000000e+00 : f32
    %19 = vector.broadcast %cst_12 : f32 to vector<240x4xf32>
    %20 = arith.subf %18, %19 : vector<240x4xf32>
    %cst_13 = arith.constant 1.000000e+00 : f32
    %21 = vector.broadcast %cst_13 : f32 to vector<240x4xf32>
    %22 = arith.addf %18, %21 : vector<240x4xf32>
    %23 = arith.divf %20, %22 : vector<240x4xf32>
    %24 = arith.mulf %10, %23 : vector<240x4xf32>
    %25 = vector.shape_cast %24 : vector<240x4xf32> to vector<10x24x4xf32>
    %26 = tpu.iota {dimensions = array<i32: 0>} : vector<10x24x4xi32>
    %27 = tpu.iota {dimensions = array<i32: 1>} : vector<10x24x4xi32>
    %c1_i32 = arith.constant 1 : i32
    %28 = vector.broadcast %c1_i32 : i32 to vector<10x24x4xi32>
    %29 = arith.cmpi sge, %27, %28 : vector<10x24x4xi32>
    %c16_i32 = arith.constant 16 : i32
    %30 = vector.broadcast %c16_i32 : i32 to vector<10x24x4xi32>
    %31 = arith.cmpi sle, %27, %30 : vector<10x24x4xi32>
    %32 = arith.andi %29, %31 : vector<10x24x4xi1>
    %c1_i32_14 = arith.constant 1 : i32
    %33 = vector.broadcast %c1_i32_14 : i32 to vector<10x24x4xi32>
    %34 = arith.cmpi sge, %26, %33 : vector<10x24x4xi32>
    %c0_i32 = arith.constant 0 : i32
    %35 = arith.cmpi sgt, %arg1, %c0_i32 : i32
    %36 = vector.broadcast %35 : i1 to vector<10x24x4xi1>
    %37 = arith.ori %34, %36 : vector<10x24x4xi1>
    %38 = arith.andi %32, %37 : vector<10x24x4xi1>
    %c8_i32 = arith.constant 8 : i32
    %39 = vector.broadcast %c8_i32 : i32 to vector<10x24x4xi32>
    %40 = arith.cmpi sle, %26, %39 : vector<10x24x4xi32>
    %c1_i32_15 = arith.constant 1 : i32
    %41 = arith.cmpi slt, %arg1, %c1_i32_15 : i32
    %42 = vector.broadcast %41 : i1 to vector<10x24x4xi1>
    %43 = arith.ori %40, %42 : vector<10x24x4xi1>
    %44 = arith.andi %38, %43 : vector<10x24x4xi1>
    %cst_16 = arith.constant 0.000000e+00 : f32
    %45 = vector.broadcast %cst_16 : f32 to vector<10x24x4xf32>
    %46 = arith.select %44, %25, %45 : vector<10x24x4xi1>, vector<10x24x4xf32>
    %c0_17 = arith.constant 0 : index
    %c0_18 = arith.constant 0 : index
    %c0_19 = arith.constant 0 : index
    %47 = vector.load %arg10[%c0_17, %c0_18, %c0_19] : memref<10x24x4xf32, #tpu.memory_space<vmem>>, vector<10x24x4xf32>
    tpu.vector_store %arg10[%c0_17, %c0_18, %c0_19], %46 {strides = array<i32>} : memref<10x24x4xf32, #tpu.memory_space<vmem>>, vector<10x24x4xf32>,
    %c0_20 = arith.constant 0 : index
    %c0_21 = arith.constant 0 : index
    %c0_22 = arith.constant 0 : index
    %48 = vector.load %arg10[%c0_20, %c0_21, %c0_22] : memref<10x24x4xf32, #tpu.memory_space<vmem>>, vector<8x16x4xf32>
    %49 = vector.shape_cast %48 : vector<8x16x4xf32> to vector<128x4xf32>
    %c0_23 = arith.constant 0 : index
    %c1 = arith.constant 1 : index
    %c0_24 = arith.constant 0 : index
    %50 = vector.load %arg10[%c0_23, %c1, %c0_24] : memref<10x24x4xf32, #tpu.memory_space<vmem>>, vector<8x16x4xf32>
    %51 = vector.shape_cast %50 : vector<8x16x4xf32> to vector<128x4xf32>
    %c0_25 = arith.constant 0 : index
    %c2 = arith.constant 2 : index
    %c0_26 = arith.constant 0 : index
    %52 = vector.load %arg10[%c0_25, %c2, %c0_26] : memref<10x24x4xf32, #tpu.memory_space<vmem>>, vector<8x16x4xf32>
    %53 = vector.shape_cast %52 : vector<8x16x4xf32> to vector<128x4xf32>
    %c1_27 = arith.constant 1 : index
    %c0_28 = arith.constant 0 : index
    %c0_29 = arith.constant 0 : index
    %54 = vector.load %arg10[%c1_27, %c0_28, %c0_29] : memref<10x24x4xf32, #tpu.memory_space<vmem>>, vector<8x16x4xf32>
    %55 = vector.shape_cast %54 : vector<8x16x4xf32> to vector<128x4xf32>
    %c1_30 = arith.constant 1 : index
    %c1_31 = arith.constant 1 : index
    %c0_32 = arith.constant 0 : index
    %56 = vector.load %arg10[%c1_30, %c1_31, %c0_32] : memref<10x24x4xf32, #tpu.memory_space<vmem>>, vector<8x16x4xf32>
    %57 = vector.shape_cast %56 : vector<8x16x4xf32> to vector<128x4xf32>
    %c1_33 = arith.constant 1 : index
    %c2_34 = arith.constant 2 : index
    %c0_35 = arith.constant 0 : index
    %58 = vector.load %arg10[%c1_33, %c2_34, %c0_35] : memref<10x24x4xf32, #tpu.memory_space<vmem>>, vector<8x16x4xf32>
    %59 = vector.shape_cast %58 : vector<8x16x4xf32> to vector<128x4xf32>
    %c2_36 = arith.constant 2 : index
    %c0_37 = arith.constant 0 : index
    %c0_38 = arith.constant 0 : index
    %60 = vector.load %arg10[%c2_36, %c0_37, %c0_38] : memref<10x24x4xf32, #tpu.memory_space<vmem>>, vector<8x16x4xf32>
    %61 = vector.shape_cast %60 : vector<8x16x4xf32> to vector<128x4xf32>
    %c2_39 = arith.constant 2 : index
    %c1_40 = arith.constant 1 : index
    %c0_41 = arith.constant 0 : index
    %62 = vector.load %arg10[%c2_39, %c1_40, %c0_41] : memref<10x24x4xf32, #tpu.memory_space<vmem>>, vector<8x16x4xf32>
    %63 = vector.shape_cast %62 : vector<8x16x4xf32> to vector<128x4xf32>
    %c2_42 = arith.constant 2 : index
    %c2_43 = arith.constant 2 : index
    %c0_44 = arith.constant 0 : index
    %64 = vector.load %arg10[%c2_42, %c2_43, %c0_44] : memref<10x24x4xf32, #tpu.memory_space<vmem>>, vector<8x16x4xf32>
    %65 = vector.shape_cast %64 : vector<8x16x4xf32> to vector<128x4xf32>
    %66 = tpu.concatenate %49, %51, %53, %55, %57, %59, %61, %63, %65 in 1 : vector<128x4xf32>, vector<128x4xf32>, vector<128x4xf32>, vector<128x4xf32>, vector<128x4xf32>, vector<128x4xf32>, vector<128x4xf32>, vector<128x4xf32>, vector<128x4xf32> -> vector<128x36xf32>
    %c0_45 = arith.constant 0 : index
    %c0_46 = arith.constant 0 : index
    %67 = vector.load %arg6[%c0_45, %c0_46] : memref<36x4xf32, #tpu.memory_space<vmem>>, vector<36x4xf32>
    %cst_47 = arith.constant dense<0.000000e+00> : vector<128x4xf32>
    %68 = tpu.matmul %66, %67, %cst_47 {dimension_numbers = #tpu.dot_dimension_numbers<[1], [0], [0], [1], [0, 0, 1, 1], [], []>} : vector<128x36xf32>, vector<36x4xf32>, vector<128x4xf32> -> vector<128x4xf32>
    %c0_48 = arith.constant 0 : index
    %c0_49 = arith.constant 0 : index
    %69 = vector.load %arg7[%c0_48, %c0_49] : memref<1x4xf32, #tpu.memory_space<vmem>>, vector<1x4xf32>
    %70 = vector.broadcast %69 : vector<1x4xf32> to vector<128x4xf32>
    %71 = arith.mulf %68, %70 : vector<128x4xf32>
    %c0_50 = arith.constant 0 : index
    %c0_51 = arith.constant 0 : index
    %72 = vector.load %arg8[%c0_50, %c0_51] : memref<1x4xf32, #tpu.memory_space<vmem>>, vector<1x4xf32>
    %73 = vector.broadcast %72 : vector<1x4xf32> to vector<128x4xf32>
    %74 = arith.addf %71, %73 : vector<128x4xf32>
    %cst_52 = arith.constant 2.000000e+01 : f32
    %75 = vector.broadcast %cst_52 : f32 to vector<128x4xf32>
    %76 = arith.minimumf %74, %75 : vector<128x4xf32>
    %77 = math.exp %76 : vector<128x4xf32>
    %cst_53 = arith.constant 1.000000e+00 : f32
    %78 = vector.broadcast %cst_53 : f32 to vector<128x4xf32>
    %79 = arith.addf %78, %77 : vector<128x4xf32>
    %cst_54 = arith.constant 1.000000e+00 : f32
    %80 = vector.broadcast %cst_54 : f32 to vector<128x4xf32>
    %81 = arith.addf %80, %77 : vector<128x4xf32>
    %82 = arith.mulf %79, %81 : vector<128x4xf32>
    %cst_55 = arith.constant 1.000000e+00 : f32
    %83 = vector.broadcast %cst_55 : f32 to vector<128x4xf32>
    %84 = arith.subf %82, %83 : vector<128x4xf32>
    %cst_56 = arith.constant 1.000000e+00 : f32
    %85 = vector.broadcast %cst_56 : f32 to vector<128x4xf32>
    %86 = arith.addf %82, %85 : vector<128x4xf32>
    %87 = arith.divf %84, %86 : vector<128x4xf32>
    %88 = arith.mulf %74, %87 : vector<128x4xf32>
    %c0_57 = arith.constant 0 : index
    %c1_58 = arith.constant 1 : index
    %c1_59 = arith.constant 1 : index
    %c0_60 = arith.constant 0 : index
    %89 = vector.load %arg2[%c0_57, %c1_58, %c1_59, %c0_60] : memref<1x10x24x4xf32, #tpu.memory_space<vmem>>, vector<1x8x16x4xf32>
    %90 = vector.shape_cast %89 : vector<1x8x16x4xf32> to vector<8x16x4xf32>
    %91 = vector.shape_cast %90 : vector<8x16x4xf32> to vector<128x4xf32>
    %92 = arith.addf %91, %88 : vector<128x4xf32>
    %93 = vector.shape_cast %92 : vector<128x4xf32> to vector<1x8x16x4xf32>
    %c0_61 = arith.constant 0 : index
    %c0_62 = arith.constant 0 : index
    %c0_63 = arith.constant 0 : index
    %c0_64 = arith.constant 0 : index
    %94 = vector.load %arg9[%c0_61, %c0_62, %c0_63, %c0_64] : memref<1x8x16x4xf32, #tpu.memory_space<vmem>>, vector<1x8x16x4xf32>
    tpu.vector_store %arg9[%c0_61, %c0_62, %c0_63, %c0_64], %93 {strides = array<i32>} : memref<1x8x16x4xf32, #tpu.memory_space<vmem>>, vector<1x8x16x4xf32>,
    return
  }
  func.func @transform_0(%arg0: i32, %arg1: i32) -> (i32, i32, i32, i32) {
    %c2_i32 = arith.constant 2 : i32
    %0 = arith.muli %arg0, %c2_i32 : i32
    %1 = arith.addi %0, %arg1 : i32
    %c0_i32 = arith.constant 0 : i32
    %c0_i32_0 = arith.constant 0 : i32
    %c0_i32_1 = arith.constant 0 : i32
    %c0_i32_2 = arith.constant 0 : i32
    return %1, %c0_i32, %c0_i32_0, %c0_i32_1 : i32, i32, i32, i32
  }
  func.func @transform_1(%arg0: i32, %arg1: i32) -> (i32, i32) {
    %c0_i32 = arith.constant 0 : i32
    %c0_i32_0 = arith.constant 0 : i32
    %c0_i32_1 = arith.constant 0 : i32
    return %c0_i32, %c0_i32_0 : i32, i32
  }
  func.func @transform_2(%arg0: i32, %arg1: i32) -> (i32, i32) {
    %c0_i32 = arith.constant 0 : i32
    %c0_i32_0 = arith.constant 0 : i32
    %c0_i32_1 = arith.constant 0 : i32
    return %c0_i32, %c0_i32_0 : i32, i32
  }
  func.func @transform_3(%arg0: i32, %arg1: i32) -> (i32, i32) {
    %c0_i32 = arith.constant 0 : i32
    %c0_i32_0 = arith.constant 0 : i32
    %c0_i32_1 = arith.constant 0 : i32
    return %c0_i32, %c0_i32_0 : i32, i32
  }
  func.func @transform_4(%arg0: i32, %arg1: i32) -> (i32, i32) {
    %c0_i32 = arith.constant 0 : i32
    %c0_i32_0 = arith.constant 0 : i32
    %c0_i32_1 = arith.constant 0 : i32
    return %c0_i32, %c0_i32_0 : i32, i32
  }
  func.func @transform_5(%arg0: i32, %arg1: i32) -> (i32, i32) {
    %c0_i32 = arith.constant 0 : i32
    %c0_i32_0 = arith.constant 0 : i32
    %c0_i32_1 = arith.constant 0 : i32
    return %c0_i32, %c0_i32_0 : i32, i32
  }
  func.func @transform_6(%arg0: i32, %arg1: i32) -> (i32, i32) {
    %c0_i32 = arith.constant 0 : i32
    %c0_i32_0 = arith.constant 0 : i32
    %c0_i32_1 = arith.constant 0 : i32
    return %c0_i32, %c0_i32_0 : i32, i32
  }
  func.func @transform_7(%arg0: i32, %arg1: i32) -> (i32, i32, i32, i32) {
    %c2_i32 = arith.constant 2 : i32
    %0 = arith.muli %arg0, %c2_i32 : i32
    %1 = arith.addi %0, %arg1 : i32
    %c0_i32 = arith.constant 0 : i32
    %c0_i32_0 = arith.constant 0 : i32
    %c0_i32_1 = arith.constant 0 : i32
    %c0_i32_2 = arith.constant 0 : i32
    return %1, %c0_i32, %c0_i32_0, %c0_i32_1 : i32, i32, i32, i32
  }
}

module attributes {stable_mosaic.version = 11 : i64} {
  func.func @_resblock_kernel(%arg0: i32, %arg1: i32, %arg2: memref<1x10x24x4xf32, #tpu.memory_space<vmem>>, %arg3: memref<4x4xf32, #tpu.memory_space<vmem>>, %arg4: memref<1x4xf32, #tpu.memory_space<vmem>>, %arg5: memref<1x4xf32, #tpu.memory_space<vmem>>, %arg6: memref<36x4xf32, #tpu.memory_space<vmem>>, %arg7: memref<1x4xf32, #tpu.memory_space<vmem>>, %arg8: memref<1x4xf32, #tpu.memory_space<vmem>>, %arg9: memref<1x8x16x4xf32, #tpu.memory_space<vmem>>, %arg10: memref<10x24x4xf32, #tpu.memory_space<vmem>>) attributes {dimension_semantics = [#tpu.dimension_semantics<parallel>, #tpu.dimension_semantics<parallel>], iteration_bounds = array<i64: 2, 2>, scalar_prefetch = 0 : i64, scratch_operands = 1 : i64, tpu.core_type = #tpu.core_type<tc>, window_params = [{transform_indices = @transform_0, window_bounds = array<i64: 1, 10, 24, 4>}, {pipeline_mode = #tpu.pipeline_mode<synchronous>, transform_indices = @transform_1, window_bounds = array<i64: 4, 4>}, {pipeline_mode = #tpu.pipeline_mode<synchronous>, transform_indices = @transform_2, window_bounds = array<i64: 1, 4>}, {pipeline_mode = #tpu.pipeline_mode<synchronous>, transform_indices = @transform_3, window_bounds = array<i64: 1, 4>}, {pipeline_mode = #tpu.pipeline_mode<synchronous>, transform_indices = @transform_4, window_bounds = array<i64: 36, 4>}, {pipeline_mode = #tpu.pipeline_mode<synchronous>, transform_indices = @transform_5, window_bounds = array<i64: 1, 4>}, {pipeline_mode = #tpu.pipeline_mode<synchronous>, transform_indices = @transform_6, window_bounds = array<i64: 1, 4>}, {transform_indices = @transform_7, window_bounds = array<i64: 1, 8, 16, 4>}]} {
    %c0 = arith.constant 0 : index
    %c0_0 = arith.constant 0 : index
    %c0_1 = arith.constant 0 : index
    %c0_2 = arith.constant 0 : index
    %0 = vector.load %arg2[%c0, %c0_0, %c0_1, %c0_2] : memref<1x10x24x4xf32, #tpu.memory_space<vmem>>, vector<1x10x24x4xf32>
    %1 = vector.shape_cast %0 : vector<1x10x24x4xf32> to vector<10x24x4xf32>
    %2 = vector.shape_cast %1 : vector<10x24x4xf32> to vector<240x4xf32>
    %c0_3 = arith.constant 0 : index
    %c0_4 = arith.constant 0 : index
    %3 = vector.load %arg3[%c0_3, %c0_4] : memref<4x4xf32, #tpu.memory_space<vmem>>, vector<4x4xf32>
    %cst = arith.constant dense<0.000000e+00> : vector<240x4xf32>
    %4 = tpu.matmul %2, %3, %cst {dimension_numbers = #tpu.dot_dimension_numbers<[1], [0], [0], [1], [0, 0, 1, 1], [], []>} : vector<240x4xf32>, vector<4x4xf32>, vector<240x4xf32> -> vector<240x4xf32>
    %c0_5 = arith.constant 0 : index
    %c0_6 = arith.constant 0 : index
    %5 = vector.load %arg4[%c0_5, %c0_6] : memref<1x4xf32, #tpu.memory_space<vmem>>, vector<1x4xf32>
    %6 = vector.broadcast %5 : vector<1x4xf32> to vector<240x4xf32>
    %7 = arith.mulf %4, %6 : vector<240x4xf32>
    %c0_7 = arith.constant 0 : index
    %c0_8 = arith.constant 0 : index
    %8 = vector.load %arg5[%c0_7, %c0_8] : memref<1x4xf32, #tpu.memory_space<vmem>>, vector<1x4xf32>
    %9 = vector.broadcast %8 : vector<1x4xf32> to vector<240x4xf32>
    %10 = arith.addf %7, %9 : vector<240x4xf32>
    %cst_9 = arith.constant 2.000000e+01 : f32
    %11 = vector.broadcast %cst_9 : f32 to vector<240x4xf32>
    %12 = arith.minimumf %10, %11 : vector<240x4xf32>
    %13 = math.exp %12 : vector<240x4xf32>
    %cst_10 = arith.constant 1.000000e+00 : f32
    %14 = vector.broadcast %cst_10 : f32 to vector<240x4xf32>
    %15 = arith.addf %14, %13 : vector<240x4xf32>
    %cst_11 = arith.constant 1.000000e+00 : f32
    %16 = vector.broadcast %cst_11 : f32 to vector<240x4xf32>
    %17 = arith.addf %16, %13 : vector<240x4xf32>
    %18 = arith.mulf %15, %17 : vector<240x4xf32>
    %cst_12 = arith.constant 1.000000e+00 : f32
    %19 = vector.broadcast %cst_12 : f32 to vector<240x4xf32>
    %20 = arith.subf %18, %19 : vector<240x4xf32>
    %cst_13 = arith.constant 1.000000e+00 : f32
    %21 = vector.broadcast %cst_13 : f32 to vector<240x4xf32>
    %22 = arith.addf %18, %21 : vector<240x4xf32>
    %23 = arith.divf %20, %22 : vector<240x4xf32>
    %24 = arith.mulf %10, %23 : vector<240x4xf32>
    %25 = vector.shape_cast %24 : vector<240x4xf32> to vector<10x24x4xf32>
    %26 = tpu.iota {dimensions = array<i32: 0>} : vector<10x24x4xi32>
    %27 = tpu.iota {dimensions = array<i32: 1>} : vector<10x24x4xi32>
    %c1_i32 = arith.constant 1 : i32
    %28 = vector.broadcast %c1_i32 : i32 to vector<10x24x4xi32>
    %29 = arith.cmpi sge, %27, %28 : vector<10x24x4xi32>
    %c16_i32 = arith.constant 16 : i32
    %30 = vector.broadcast %c16_i32 : i32 to vector<10x24x4xi32>
    %31 = arith.cmpi sle, %27, %30 : vector<10x24x4xi32>
    %32 = arith.andi %29, %31 : vector<10x24x4xi1>
    %c1_i32_14 = arith.constant 1 : i32
    %33 = vector.broadcast %c1_i32_14 : i32 to vector<10x24x4xi32>
    %34 = arith.cmpi sge, %26, %33 : vector<10x24x4xi32>
    %c0_i32 = arith.constant 0 : i32
    %35 = arith.cmpi sgt, %arg1, %c0_i32 : i32
    %36 = vector.broadcast %35 : i1 to vector<10x24x4xi1>
    %37 = arith.ori %34, %36 : vector<10x24x4xi1>
    %38 = arith.andi %32, %37 : vector<10x24x4xi1>
    %c8_i32 = arith.constant 8 : i32
    %39 = vector.broadcast %c8_i32 : i32 to vector<10x24x4xi32>
    %40 = arith.cmpi sle, %26, %39 : vector<10x24x4xi32>
    %c1_i32_15 = arith.constant 1 : i32
    %41 = arith.cmpi slt, %arg1, %c1_i32_15 : i32
    %42 = vector.broadcast %41 : i1 to vector<10x24x4xi1>
    %43 = arith.ori %40, %42 : vector<10x24x4xi1>
    %44 = arith.andi %38, %43 : vector<10x24x4xi1>
    %cst_16 = arith.constant 0.000000e+00 : f32
    %45 = vector.broadcast %cst_16 : f32 to vector<10x24x4xf32>
    %46 = arith.select %44, %25, %45 : vector<10x24x4xi1>, vector<10x24x4xf32>
    %c0_17 = arith.constant 0 : index
    %c0_18 = arith.constant 0 : index
    %c0_19 = arith.constant 0 : index
    %47 = vector.load %arg10[%c0_17, %c0_18, %c0_19] : memref<10x24x4xf32, #tpu.memory_space<vmem>>, vector<10x24x4xf32>
    tpu.vector_store %arg10[%c0_17, %c0_18, %c0_19], %46 {strides = array<i32>} : memref<10x24x4xf32, #tpu.memory_space<vmem>>, vector<10x24x4xf32>,
    %c0_20 = arith.constant 0 : index
    %c0_21 = arith.constant 0 : index
    %c0_22 = arith.constant 0 : index
    %48 = vector.load %arg10[%c0_20, %c0_21, %c0_22] : memref<10x24x4xf32, #tpu.memory_space<vmem>>, vector<8x16x4xf32>
    %49 = vector.shape_cast %48 : vector<8x16x4xf32> to vector<128x4xf32>
    %c0_23 = arith.constant 0 : index
    %c1 = arith.constant 1 : index
    %c0_24 = arith.constant 0 : index
    %50 = vector.load %arg10[%c0_23, %c1, %c0_24] : memref<10x24x4xf32, #tpu.memory_space<vmem>>, vector<8x16x4xf32>
    %51 = vector.shape_cast %50 : vector<8x16x4xf32> to vector<128x4xf32>
    %c0_25 = arith.constant 0 : index
    %c2 = arith.constant 2 : index
    %c0_26 = arith.constant 0 : index
    %52 = vector.load %arg10[%c0_25, %c2, %c0_26] : memref<10x24x4xf32, #tpu.memory_space<vmem>>, vector<8x16x4xf32>
    %53 = vector.shape_cast %52 : vector<8x16x4xf32> to vector<128x4xf32>
    %c1_27 = arith.constant 1 : index
    %c0_28 = arith.constant 0 : index
    %c0_29 = arith.constant 0 : index
    %54 = vector.load %arg10[%c1_27, %c0_28, %c0_29] : memref<10x24x4xf32, #tpu.memory_space<vmem>>, vector<8x16x4xf32>
    %55 = vector.shape_cast %54 : vector<8x16x4xf32> to vector<128x4xf32>
    %c1_30 = arith.constant 1 : index
    %c1_31 = arith.constant 1 : index
    %c0_32 = arith.constant 0 : index
    %56 = vector.load %arg10[%c1_30, %c1_31, %c0_32] : memref<10x24x4xf32, #tpu.memory_space<vmem>>, vector<8x16x4xf32>
    %57 = vector.shape_cast %56 : vector<8x16x4xf32> to vector<128x4xf32>
    %c1_33 = arith.constant 1 : index
    %c2_34 = arith.constant 2 : index
    %c0_35 = arith.constant 0 : index
    %58 = vector.load %arg10[%c1_33, %c2_34, %c0_35] : memref<10x24x4xf32, #tpu.memory_space<vmem>>, vector<8x16x4xf32>
    %59 = vector.shape_cast %58 : vector<8x16x4xf32> to vector<128x4xf32>
    %c2_36 = arith.constant 2 : index
    %c0_37 = arith.constant 0 : index
    %c0_38 = arith.constant 0 : index
    %60 = vector.load %arg10[%c2_36, %c0_37, %c0_38] : memref<10x24x4xf32, #tpu.memory_space<vmem>>, vector<8x16x4xf32>
    %61 = vector.shape_cast %60 : vector<8x16x4xf32> to vector<128x4xf32>
    %c2_39 = arith.constant 2 : index
    %c1_40 = arith.constant 1 : index
    %c0_41 = arith.constant 0 : index
    %62 = vector.load %arg10[%c2_39, %c1_40, %c0_41] : memref<10x24x4xf32, #tpu.memory_space<vmem>>, vector<8x16x4xf32>
    %63 = vector.shape_cast %62 : vector<8x16x4xf32> to vector<128x4xf32>
    %c2_42 = arith.constant 2 : index
    %c2_43 = arith.constant 2 : index
    %c0_44 = arith.constant 0 : index
    %64 = vector.load %arg10[%c2_42, %c2_43, %c0_44] : memref<10x24x4xf32, #tpu.memory_space<vmem>>, vector<8x16x4xf32>
    %65 = vector.shape_cast %64 : vector<8x16x4xf32> to vector<128x4xf32>
    %cst_45 = arith.constant 0.000000e+00 : f32
    %66 = vector.broadcast %cst_45 : f32 to vector<128x4xf32>
    %c0_46 = arith.constant 0 : index
    %c0_47 = arith.constant 0 : index
    %67 = vector.load %arg6[%c0_46, %c0_47] : memref<36x4xf32, #tpu.memory_space<vmem>>, vector<4x4xf32>
    %cst_48 = arith.constant dense<0.000000e+00> : vector<128x4xf32>
    %68 = tpu.matmul %49, %67, %cst_48 {dimension_numbers = #tpu.dot_dimension_numbers<[1], [0], [0], [1], [0, 0, 1, 1], [], []>} : vector<128x4xf32>, vector<4x4xf32>, vector<128x4xf32> -> vector<128x4xf32>
    %69 = arith.addf %66, %68 : vector<128x4xf32>
    %c4 = arith.constant 4 : index
    %c0_49 = arith.constant 0 : index
    %70 = vector.load %arg6[%c4, %c0_49] : memref<36x4xf32, #tpu.memory_space<vmem>>, vector<4x4xf32>
    %cst_50 = arith.constant dense<0.000000e+00> : vector<128x4xf32>
    %71 = tpu.matmul %51, %70, %cst_50 {dimension_numbers = #tpu.dot_dimension_numbers<[1], [0], [0], [1], [0, 0, 1, 1], [], []>} : vector<128x4xf32>, vector<4x4xf32>, vector<128x4xf32> -> vector<128x4xf32>
    %72 = arith.addf %69, %71 : vector<128x4xf32>
    %c8 = arith.constant 8 : index
    %c0_51 = arith.constant 0 : index
    %73 = vector.load %arg6[%c8, %c0_51] : memref<36x4xf32, #tpu.memory_space<vmem>>, vector<4x4xf32>
    %cst_52 = arith.constant dense<0.000000e+00> : vector<128x4xf32>
    %74 = tpu.matmul %53, %73, %cst_52 {dimension_numbers = #tpu.dot_dimension_numbers<[1], [0], [0], [1], [0, 0, 1, 1], [], []>} : vector<128x4xf32>, vector<4x4xf32>, vector<128x4xf32> -> vector<128x4xf32>
    %75 = arith.addf %72, %74 : vector<128x4xf32>
    %c12 = arith.constant 12 : index
    %c0_53 = arith.constant 0 : index
    %76 = vector.load %arg6[%c12, %c0_53] : memref<36x4xf32, #tpu.memory_space<vmem>>, vector<4x4xf32>
    %cst_54 = arith.constant dense<0.000000e+00> : vector<128x4xf32>
    %77 = tpu.matmul %55, %76, %cst_54 {dimension_numbers = #tpu.dot_dimension_numbers<[1], [0], [0], [1], [0, 0, 1, 1], [], []>} : vector<128x4xf32>, vector<4x4xf32>, vector<128x4xf32> -> vector<128x4xf32>
    %78 = arith.addf %75, %77 : vector<128x4xf32>
    %c16 = arith.constant 16 : index
    %c0_55 = arith.constant 0 : index
    %79 = vector.load %arg6[%c16, %c0_55] : memref<36x4xf32, #tpu.memory_space<vmem>>, vector<4x4xf32>
    %cst_56 = arith.constant dense<0.000000e+00> : vector<128x4xf32>
    %80 = tpu.matmul %57, %79, %cst_56 {dimension_numbers = #tpu.dot_dimension_numbers<[1], [0], [0], [1], [0, 0, 1, 1], [], []>} : vector<128x4xf32>, vector<4x4xf32>, vector<128x4xf32> -> vector<128x4xf32>
    %81 = arith.addf %78, %80 : vector<128x4xf32>
    %c20 = arith.constant 20 : index
    %c0_57 = arith.constant 0 : index
    %82 = vector.load %arg6[%c20, %c0_57] : memref<36x4xf32, #tpu.memory_space<vmem>>, vector<4x4xf32>
    %cst_58 = arith.constant dense<0.000000e+00> : vector<128x4xf32>
    %83 = tpu.matmul %59, %82, %cst_58 {dimension_numbers = #tpu.dot_dimension_numbers<[1], [0], [0], [1], [0, 0, 1, 1], [], []>} : vector<128x4xf32>, vector<4x4xf32>, vector<128x4xf32> -> vector<128x4xf32>
    %84 = arith.addf %81, %83 : vector<128x4xf32>
    %c24 = arith.constant 24 : index
    %c0_59 = arith.constant 0 : index
    %85 = vector.load %arg6[%c24, %c0_59] : memref<36x4xf32, #tpu.memory_space<vmem>>, vector<4x4xf32>
    %cst_60 = arith.constant dense<0.000000e+00> : vector<128x4xf32>
    %86 = tpu.matmul %61, %85, %cst_60 {dimension_numbers = #tpu.dot_dimension_numbers<[1], [0], [0], [1], [0, 0, 1, 1], [], []>} : vector<128x4xf32>, vector<4x4xf32>, vector<128x4xf32> -> vector<128x4xf32>
    %87 = arith.addf %84, %86 : vector<128x4xf32>
    %c28 = arith.constant 28 : index
    %c0_61 = arith.constant 0 : index
    %88 = vector.load %arg6[%c28, %c0_61] : memref<36x4xf32, #tpu.memory_space<vmem>>, vector<4x4xf32>
    %cst_62 = arith.constant dense<0.000000e+00> : vector<128x4xf32>
    %89 = tpu.matmul %63, %88, %cst_62 {dimension_numbers = #tpu.dot_dimension_numbers<[1], [0], [0], [1], [0, 0, 1, 1], [], []>} : vector<128x4xf32>, vector<4x4xf32>, vector<128x4xf32> -> vector<128x4xf32>
    %90 = arith.addf %87, %89 : vector<128x4xf32>
    %c32 = arith.constant 32 : index
    %c0_63 = arith.constant 0 : index
    %91 = vector.load %arg6[%c32, %c0_63] : memref<36x4xf32, #tpu.memory_space<vmem>>, vector<4x4xf32>
    %cst_64 = arith.constant dense<0.000000e+00> : vector<128x4xf32>
    %92 = tpu.matmul %65, %91, %cst_64 {dimension_numbers = #tpu.dot_dimension_numbers<[1], [0], [0], [1], [0, 0, 1, 1], [], []>} : vector<128x4xf32>, vector<4x4xf32>, vector<128x4xf32> -> vector<128x4xf32>
    %93 = arith.addf %90, %92 : vector<128x4xf32>
    %c0_65 = arith.constant 0 : index
    %c0_66 = arith.constant 0 : index
    %94 = vector.load %arg7[%c0_65, %c0_66] : memref<1x4xf32, #tpu.memory_space<vmem>>, vector<1x4xf32>
    %95 = vector.broadcast %94 : vector<1x4xf32> to vector<128x4xf32>
    %96 = arith.mulf %93, %95 : vector<128x4xf32>
    %c0_67 = arith.constant 0 : index
    %c0_68 = arith.constant 0 : index
    %97 = vector.load %arg8[%c0_67, %c0_68] : memref<1x4xf32, #tpu.memory_space<vmem>>, vector<1x4xf32>
    %98 = vector.broadcast %97 : vector<1x4xf32> to vector<128x4xf32>
    %99 = arith.addf %96, %98 : vector<128x4xf32>
    %cst_69 = arith.constant 2.000000e+01 : f32
    %100 = vector.broadcast %cst_69 : f32 to vector<128x4xf32>
    %101 = arith.minimumf %99, %100 : vector<128x4xf32>
    %102 = math.exp %101 : vector<128x4xf32>
    %cst_70 = arith.constant 1.000000e+00 : f32
    %103 = vector.broadcast %cst_70 : f32 to vector<128x4xf32>
    %104 = arith.addf %103, %102 : vector<128x4xf32>
    %cst_71 = arith.constant 1.000000e+00 : f32
    %105 = vector.broadcast %cst_71 : f32 to vector<128x4xf32>
    %106 = arith.addf %105, %102 : vector<128x4xf32>
    %107 = arith.mulf %104, %106 : vector<128x4xf32>
    %cst_72 = arith.constant 1.000000e+00 : f32
    %108 = vector.broadcast %cst_72 : f32 to vector<128x4xf32>
    %109 = arith.subf %107, %108 : vector<128x4xf32>
    %cst_73 = arith.constant 1.000000e+00 : f32
    %110 = vector.broadcast %cst_73 : f32 to vector<128x4xf32>
    %111 = arith.addf %107, %110 : vector<128x4xf32>
    %112 = arith.divf %109, %111 : vector<128x4xf32>
    %113 = arith.mulf %99, %112 : vector<128x4xf32>
    %c0_74 = arith.constant 0 : index
    %c1_75 = arith.constant 1 : index
    %c1_76 = arith.constant 1 : index
    %c0_77 = arith.constant 0 : index
    %114 = vector.load %arg2[%c0_74, %c1_75, %c1_76, %c0_77] : memref<1x10x24x4xf32, #tpu.memory_space<vmem>>, vector<1x8x16x4xf32>
    %115 = vector.shape_cast %114 : vector<1x8x16x4xf32> to vector<8x16x4xf32>
    %116 = vector.shape_cast %115 : vector<8x16x4xf32> to vector<128x4xf32>
    %117 = arith.addf %116, %113 : vector<128x4xf32>
    %118 = vector.shape_cast %117 : vector<128x4xf32> to vector<1x8x16x4xf32>
    %c0_78 = arith.constant 0 : index
    %c0_79 = arith.constant 0 : index
    %c0_80 = arith.constant 0 : index
    %c0_81 = arith.constant 0 : index
    %119 = vector.load %arg9[%c0_78, %c0_79, %c0_80, %c0_81] : memref<1x8x16x4xf32, #tpu.memory_space<vmem>>, vector<1x8x16x4xf32>
    tpu.vector_store %arg9[%c0_78, %c0_79, %c0_80, %c0_81], %118 {strides = array<i32>} : memref<1x8x16x4xf32, #tpu.memory_space<vmem>>, vector<1x8x16x4xf32>,
    return
  }
  func.func @transform_0(%arg0: i32, %arg1: i32) -> (i32, i32, i32, i32) {
    %c2_i32 = arith.constant 2 : i32
    %0 = arith.muli %arg0, %c2_i32 : i32
    %1 = arith.addi %0, %arg1 : i32
    %c0_i32 = arith.constant 0 : i32
    %c0_i32_0 = arith.constant 0 : i32
    %c0_i32_1 = arith.constant 0 : i32
    %c0_i32_2 = arith.constant 0 : i32
    return %1, %c0_i32, %c0_i32_0, %c0_i32_1 : i32, i32, i32, i32
  }
  func.func @transform_1(%arg0: i32, %arg1: i32) -> (i32, i32) {
    %c0_i32 = arith.constant 0 : i32
    %c0_i32_0 = arith.constant 0 : i32
    %c0_i32_1 = arith.constant 0 : i32
    return %c0_i32, %c0_i32_0 : i32, i32
  }
  func.func @transform_2(%arg0: i32, %arg1: i32) -> (i32, i32) {
    %c0_i32 = arith.constant 0 : i32
    %c0_i32_0 = arith.constant 0 : i32
    %c0_i32_1 = arith.constant 0 : i32
    return %c0_i32, %c0_i32_0 : i32, i32
  }
  func.func @transform_3(%arg0: i32, %arg1: i32) -> (i32, i32) {
    %c0_i32 = arith.constant 0 : i32
    %c0_i32_0 = arith.constant 0 : i32
    %c0_i32_1 = arith.constant 0 : i32
    return %c0_i32, %c0_i32_0 : i32, i32
  }
  func.func @transform_4(%arg0: i32, %arg1: i32) -> (i32, i32) {
    %c0_i32 = arith.constant 0 : i32
    %c0_i32_0 = arith.constant 0 : i32
    %c0_i32_1 = arith.constant 0 : i32
    return %c0_i32, %c0_i32_0 : i32, i32
  }
  func.func @transform_5(%arg0: i32, %arg1: i32) -> (i32, i32) {
    %c0_i32 = arith.constant 0 : i32
    %c0_i32_0 = arith.constant 0 : i32
    %c0_i32_1 = arith.constant 0 : i32
    return %c0_i32, %c0_i32_0 : i32, i32
  }
  func.func @transform_6(%arg0: i32, %arg1: i32) -> (i32, i32) {
    %c0_i32 = arith.constant 0 : i32
    %c0_i32_0 = arith.constant 0 : i32
    %c0_i32_1 = arith.constant 0 : i32
    return %c0_i32, %c0_i32_0 : i32, i32
  }
  func.func @transform_7(%arg0: i32, %arg1: i32) -> (i32, i32, i32, i32) {
    %c2_i32 = arith.constant 2 : i32
    %0 = arith.muli %arg0, %c2_i32 : i32
    %1 = arith.addi %0, %arg1 : i32
    %c0_i32 = arith.constant 0 : i32
    %c0_i32_0 = arith.constant 0 : i32
    %c0_i32_1 = arith.constant 0 : i32
    %c0_i32_2 = arith.constant 0 : i32
    return %1, %c0_i32, %c0_i32_0, %c0_i32_1 : i32, i32, i32, i32
  }
}

</mosaic_0001>

<llo_original>
// kernel: tpu_custom_call.1
$region0: #{tpu_custom_call.1}
  #allocation0 [shape = 'u32[]', space=smem, size = 0x4, offset = 0x4, fixed_abs, tag = 'smem constant byte address 0x4 - core index']
  #allocation1 [shape = 'u32[144,128]{1,0:T(1,128)}', space=vmem, size = 0x12000, scoped, tag = 'internal scratch']
  #allocation2 [shape = 'f32[10,24,4]{2,1,0:T(8,128)}', space=vmem, size = 0x1e000, scoped, tag = 'scratch operand']
  %s0 = inlined_call_operand.vmem [shape: f32[4,10,24,4], index: 0, kind: input, shape index: {}]
  %s1 = inlined_call_operand.vmem [shape: f32[4,4], index: 1, kind: input, shape index: {}]
  %s2 = inlined_call_operand.vmem [shape: f32[1,4], index: 2, kind: input, shape index: {}]
  %s3 = inlined_call_operand.vmem [shape: f32[1,4], index: 3, kind: input, shape index: {}]
  %s4 = inlined_call_operand.vmem [shape: f32[36,4], index: 4, kind: input, shape index: {}]
  %s5 = inlined_call_operand.vmem [shape: f32[1,4], index: 5, kind: input, shape index: {}]
  %s6 = inlined_call_operand.vmem [shape: f32[1,4], index: 6, kind: input, shape index: {}]
  %s7 = inlined_call_operand.vmem [shape: f32[4,8,16,4], index: 7, kind: output, shape index: {}]
  %s8 = sld [smem:[#allocation0]]
  $region61: #{tpu_custom_call.1} parent=0
    _
  %s10 = ssub.s32 1, %s8
  %s11 = scalar_select 0, %s10, %s8
  loop: start=0, step=1, limit=6
  $region2: #{tpu_custom_call.1} parent=0 // loop_pre_header
    _
  $region3: #{tpu_custom_call.1} parent=0 // loop_header
    %s13 = sphi 0, %s17
    %p14 = scmp.ge.s32.totalorder %s13, 6
    %s20 = sphi 0, %s32
    %s21 = sphi 0, %s28
    %s22 = sphi 0, %s20
    %s23 = sphi 0, %s21
    %s24 = sphi 0, %s22
    %s25 = sphi 0, %s23
    %s39 = sphi 0, %s41
    %s42 = sphi 0, %s39
    %s43 = sphi 0, %s42
    %s59 = sphi 0, %s43
    %s63 = sphi 0, %s63
    %s65 = sphi 0, %s63
    %s66 = sphi 0, %s65
    %s80 = sphi 0, %s66
    %s84 = sphi 0, %s84
    %s86 = sphi 0, %s84
    %s87 = sphi 0, %s86
    %s101 = sphi 0, %s87
    %s105 = sphi 0, %s105
    %s107 = sphi 0, %s105
    %s108 = sphi 0, %s107
    %s122 = sphi 0, %s108
    %s126 = sphi 0, %s126
    %s128 = sphi 0, %s126
    %s129 = sphi 0, %s128
    %s143 = sphi 0, %s129
    %s147 = sphi 0, %s147
    %s149 = sphi 0, %s147
    %s150 = sphi 0, %s149
    %s164 = sphi 0, %s150
    %s168 = sphi 0, %s168
    %s170 = sphi 0, %s168
    %s171 = sphi 0, %s170
    %s185 = sphi 0, %s171
    %s195 = sphi 0, %s197
    %s198 = sphi 0, %s195
    %s199 = sphi 0, %s198
    %s215 = sphi 0, %s199
  $region4: #{tpu_custom_call.1} parent=0 // loop_header_branch
    %16 = sbr.rel (%p14) target = $region8
  $region5: #{tpu_custom_call.1} parent=0 // loop_body
    %s18 = ssub.s32 %s13, 1
    %s19 = ssub.s32 %s13, 2
    %s26 = sadd.s32 1, %s21
    %p27 = scmp.ge.s32.totalorder %s26, 2
    %s28 = scalar_select %p27, 0, %s26
    %s29 = sadd.s32 1, %s20
    %s30 = scalar_select %p27, %s29, %s20
    %p31 = scmp.ge.s32.totalorder %s30, 2
    %s32 = scalar_select %p31, 0, %s30
    %s33 = smul.u32 %s20, 2
    %s34 = sadd.s32 %s33, %s21
    %s35 = smul.u32 %s32, 2
    %s36 = sadd.s32 %s35, %s28
    %s37 = ssub.s32 %s34, %s36
    %p38 = scmp.eq.s32.totalorder %s37, 0
    %s40 = sadd.s32 %s39, 1
    %s41 = scalar_select %p38, %s39, %s40
    %p44 = pneg %p38
    %p45 = scmp.eq.s32.totalorder %s13, 3
    %p46 = por %p44, %p45
    %p47 = scmp.ne.s32.totalorder %s39, %s42
    %p48 = scmp.eq.s32.totalorder %s13, 0
    %p49 = por %p47, %p48
    %p50 = scmp.ne.s32.totalorder %s39, %s42
    %p51 = scmp.eq.s32.totalorder %s18, 3
    %p52 = por %p50, %p51
    %p53 = scmp.ne.s32.totalorder %s42, %s43
    %p54 = scmp.eq.s32.totalorder %s18, 0
    %p55 = por %p53, %p54
    %p56 = scmp.ne.s32.totalorder %s42, %s43
    %p57 = scmp.eq.s32.totalorder %s19, 3
    %p58 = por %p56, %p57
    %p60 = scmp.ne.s32.totalorder %s43, %s59
    %p61 = scmp.eq.s32.totalorder %s19, 0
    %p62 = por %p60, %p61
    %s64 = sadd.s32 %s63, 1
    %p67 = scmp.eq.s32.totalorder %s13, 3
    %p68 = scmp.ne.s32.totalorder %s63, %s65
    %p69 = scmp.eq.s32.totalorder %s13, 0
    %p70 = por %p68, %p69
    %p71 = scmp.ne.s32.totalorder %s63, %s65
    %p72 = scmp.eq.s32.totalorder %s18, 3
    %p73 = por %p71, %p72
    %p74 = scmp.ne.s32.totalorder %s65, %s66
    %p75 = scmp.eq.s32.totalorder %s18, 0
    %p76 = por %p74, %p75
    %p77 = scmp.ne.s32.totalorder %s65, %s66
    %p78 = scmp.eq.s32.totalorder %s19, 3
    %p79 = por %p77, %p78
    %p81 = scmp.ne.s32.totalorder %s66, %s80
    %p82 = scmp.eq.s32.totalorder %s19, 0
    %p83 = por %p81, %p82
    %s85 = sadd.s32 %s84, 1
    %p88 = scmp.eq.s32.totalorder %s13, 3
    %p89 = scmp.ne.s32.totalorder %s84, %s86
    %p90 = scmp.eq.s32.totalorder %s13, 0
    %p91 = por %p89, %p90
    %p92 = scmp.ne.s32.totalorder %s84, %s86
    %p93 = scmp.eq.s32.totalorder %s18, 3
    %p94 = por %p92, %p93
    %p95 = scmp.ne.s32.totalorder %s86, %s87
    %p96 = scmp.eq.s32.totalorder %s18, 0
    %p97 = por %p95, %p96
    %p98 = scmp.ne.s32.totalorder %s86, %s87
    %p99 = scmp.eq.s32.totalorder %s19, 3
    %p100 = por %p98, %p99
    %p102 = scmp.ne.s32.totalorder %s87, %s101
    %p103 = scmp.eq.s32.totalorder %s19, 0
    %p104 = por %p102, %p103
    %s106 = sadd.s32 %s105, 1
    %p109 = scmp.eq.s32.totalorder %s13, 3
    %p110 = scmp.ne.s32.totalorder %s105, %s107
    %p111 = scmp.eq.s32.totalorder %s13, 0
    %p112 = por %p110, %p111
    %p113 = scmp.ne.s32.totalorder %s105, %s107
    %p114 = scmp.eq.s32.totalorder %s18, 3
    %p115 = por %p113, %p114
    %p116 = scmp.ne.s32.totalorder %s107, %s108
    %p117 = scmp.eq.s32.totalorder %s18, 0
    %p118 = por %p116, %p117
    %p119 = scmp.ne.s32.totalorder %s107, %s108
    %p120 = scmp.eq.s32.totalorder %s19, 3
    %p121 = por %p119, %p120
    %p123 = scmp.ne.s32.totalorder %s108, %s122
    %p124 = scmp.eq.s32.totalorder %s19, 0
    %p125 = por %p123, %p124
    %s127 = sadd.s32 %s126, 1
    %p130 = scmp.eq.s32.totalorder %s13, 3
    %p131 = scmp.ne.s32.totalorder %s126, %s128
    %p132 = scmp.eq.s32.totalorder %s13, 0
    %p133 = por %p131, %p132
    %p134 = scmp.ne.s32.totalorder %s126, %s128
    %p135 = scmp.eq.s32.totalorder %s18, 3
    %p136 = por %p134, %p135
    %p137 = scmp.ne.s32.totalorder %s128, %s129
    %p138 = scmp.eq.s32.totalorder %s18, 0
    %p139 = por %p137, %p138
    %p140 = scmp.ne.s32.totalorder %s128, %s129
    %p141 = scmp.eq.s32.totalorder %s19, 3
    %p142 = por %p140, %p141
    %p144 = scmp.ne.s32.totalorder %s129, %s143
    %p145 = scmp.eq.s32.totalorder %s19, 0
    %p146 = por %p144, %p145
    %s148 = sadd.s32 %s147, 1
    %p151 = scmp.eq.s32.totalorder %s13, 3
    %p152 = scmp.ne.s32.totalorder %s147, %s149
    %p153 = scmp.eq.s32.totalorder %s13, 0
    %p154 = por %p152, %p153
    %p155 = scmp.ne.s32.totalorder %s147, %s149
    %p156 = scmp.eq.s32.totalorder %s18, 3
    %p157 = por %p155, %p156
    %p158 = scmp.ne.s32.totalorder %s149, %s150
    %p159 = scmp.eq.s32.totalorder %s18, 0
    %p160 = por %p158, %p159
    %p161 = scmp.ne.s32.totalorder %s149, %s150
    %p162 = scmp.eq.s32.totalorder %s19, 3
    %p163 = por %p161, %p162
    %p165 = scmp.ne.s32.totalorder %s150, %s164
    %p166 = scmp.eq.s32.totalorder %s19, 0
    %p167 = por %p165, %p166
    %s169 = sadd.s32 %s168, 1
    %p172 = scmp.eq.s32.totalorder %s13, 3
    %p173 = scmp.ne.s32.totalorder %s168, %s170
    %p174 = scmp.eq.s32.totalorder %s13, 0
    %p175 = por %p173, %p174
    %p176 = scmp.ne.s32.totalorder %s168, %s170
    %p177 = scmp.eq.s32.totalorder %s18, 3
    %p178 = por %p176, %p177
    %p179 = scmp.ne.s32.totalorder %s170, %s171
    %p180 = scmp.eq.s32.totalorder %s18, 0
    %p181 = por %p179, %p180
    %p182 = scmp.ne.s32.totalorder %s170, %s171
    %p183 = scmp.eq.s32.totalorder %s19, 3
    %p184 = por %p182, %p183
    %p186 = scmp.ne.s32.totalorder %s171, %s185
    %p187 = scmp.eq.s32.totalorder %s19, 0
    %p188 = por %p186, %p187
    %s189 = smul.u32 %s20, 2
    %s190 = sadd.s32 %s189, %s21
    %s191 = smul.u32 %s32, 2
    %s192 = sadd.s32 %s191, %s28
    %s193 = ssub.s32 %s190, %s192
    %p194 = scmp.eq.s32.totalorder %s193, 0
    %s196 = sadd.s32 %s195, 1
    %s197 = scalar_select %p194, %s195, %s196
    %p200 = pneg %p194
    %p201 = scmp.eq.s32.totalorder %s13, 3
    %p202 = por %p200, %p201
    %p203 = scmp.ne.s32.totalorder %s195, %s198
    %p204 = scmp.eq.s32.totalorder %s13, 0
    %p205 = por %p203, %p204
    %p206 = scmp.ne.s32.totalorder %s195, %s198
    %p207 = scmp.eq.s32.totalorder %s18, 3
    %p208 = por %p206, %p207
    %p209 = scmp.ne.s32.totalorder %s198, %s199
    %p210 = scmp.eq.s32.totalorder %s18, 0
    %p211 = por %p209, %p210
    %p212 = scmp.ne.s32.totalorder %s198, %s199
    %p213 = scmp.eq.s32.totalorder %s19, 3
    %p214 = por %p212, %p213
    %p216 = scmp.ne.s32.totalorder %s199, %s215
    %p217 = scmp.eq.s32.totalorder %s19, 0
    %p218 = por %p216, %p217
    %p219 = scmp.le.s32.totalorder 1, %s13
    %p220 = scmp.lt.s32.totalorder %s13, 5
    %p221 = pnand %p219, %p220
    %p222 = pneg %p221
    // Predicated region
    $region9: #{tpu_custom_call.1} parent=5 // pred_check
      _
    $region10: #{tpu_custom_call.1} parent=5 // pred_check_branch
      %224 = sbr.rel (%p221) target = $region12
    $region11: #{tpu_custom_call.1} parent=5 // pred_region
      %s225 = ssub.s32 %s13, 1
      // Predicated region
      $region13: #{tpu_custom_call.1} parent=11 // pred_check
        %p226 = pneg %p76
      $region14: #{tpu_custom_call.1} parent=11 // pred_check_branch
        %228 = sbr.rel (%p226) target = $region16
      $region15: #{tpu_custom_call.1} parent=11 // pred_region
        _
      $region16: #{tpu_custom_call.1} parent=11 // pred_fallthru
        _
      // Predicated region
      $region17: #{tpu_custom_call.1} parent=11 // pred_check
        %p229 = pneg %p97
      $region18: #{tpu_custom_call.1} parent=11 // pred_check_branch
        %231 = sbr.rel (%p229) target = $region20
      $region19: #{tpu_custom_call.1} parent=11 // pred_region
        _
      $region20: #{tpu_custom_call.1} parent=11 // pred_fallthru
        _
      // Predicated region
      $region21: #{tpu_custom_call.1} parent=11 // pred_check
        %p232 = pneg %p118
      $region22: #{tpu_custom_call.1} parent=11 // pred_check_branch
        %234 = sbr.rel (%p232) target = $region24
      $region23: #{tpu_custom_call.1} parent=11 // pred_region
        _
      $region24: #{tpu_custom_call.1} parent=11 // pred_fallthru
        _
      // Predicated region
      $region25: #{tpu_custom_call.1} parent=11 // pred_check
        %p235 = pneg %p139
      $region26: #{tpu_custom_call.1} parent=11 // pred_check_branch
        %237 = sbr.rel (%p235) target = $region28
      $region27: #{tpu_custom_call.1} parent=11 // pred_region
        _
      $region28: #{tpu_custom_call.1} parent=11 // pred_fallthru
        _
      // Predicated region
      $region29: #{tpu_custom_call.1} parent=11 // pred_check
        %p238 = pneg %p160
      $region30: #{tpu_custom_call.1} parent=11 // pred_check_branch
        %240 = sbr.rel (%p238) target = $region32
      $region31: #{tpu_custom_call.1} parent=11 // pred_region
        _
      $region32: #{tpu_custom_call.1} parent=11 // pred_fallthru
        _
      // Predicated region
      $region33: #{tpu_custom_call.1} parent=11 // pred_check
        %p241 = pneg %p181
      $region34: #{tpu_custom_call.1} parent=11 // pred_check_branch
        %243 = sbr.rel (%p241) target = $region36
      $region35: #{tpu_custom_call.1} parent=11 // pred_region
        _
      $region36: #{tpu_custom_call.1} parent=11 // pred_fallthru
        _
    $region12: #{tpu_custom_call.1} parent=5 // pred_fallthru
      _
    %p244 = scmp.lt.s32.totalorder %s13, 4
    // Predicated region
    $region37: #{tpu_custom_call.1} parent=5 // pred_check
      %p245 = pneg %p244
    $region38: #{tpu_custom_call.1} parent=5 // pred_check_branch
      %247 = sbr.rel (%p245) target = $region40
    $region39: #{tpu_custom_call.1} parent=5 // pred_region
      // Predicated region
      $region41: #{tpu_custom_call.1} parent=39 // pred_check
        %p248 = pneg %p49
      $region42: #{tpu_custom_call.1} parent=39 // pred_check_branch
        %250 = sbr.rel (%p248) target = $region44
      $region43: #{tpu_custom_call.1} parent=39 // pred_region
        %s251 = smul.u32 %s20, 2
        %s252 = sadd.s32 %s251, %s21
        %p253 = scmp.lt.s32.totalorder %s252, 3
        %s254 = scalar_select %p253, %s252, 3
        %s255 = smul.addr %s254, 30
        %s256 = smul.addr %s255, 8
        %s257 = scalar_lea.vmem %s0, %s256
        %s258 = smul.u32 %s20, 2
        %s259 = sadd.s32 %s258, %s21
      $region44: #{tpu_custom_call.1} parent=39 // pred_fallthru
        _
    $region40: #{tpu_custom_call.1} parent=5 // pred_fallthru
      _
    %p260 = scmp.le.s32.totalorder 1, %s13
    %p261 = scmp.lt.s32.totalorder %s13, 5
    %p262 = pnand %p260, %p261
    %p263 = pneg %p262
    // Predicated region
    $region45: #{tpu_custom_call.1} parent=5 // pred_check
      _
    $region46: #{tpu_custom_call.1} parent=5 // pred_check_branch
      %265 = sbr.rel (%p262) target = $region48
    $region47: #{tpu_custom_call.1} parent=5 // pred_region
      %s266 = ssub.s32 %s13, 1
      %s267 = smul.u32 %s22, 2
      %s268 = sadd.s32 %s267, %s23
      %p269 = scmp.lt.s32.totalorder %s268, 3
      %s270 = scalar_select %p269, %s268, 3
      %s271 = smul.addr %s270, 30
      %s272 = smul.addr %s271, 8
      %s273 = scalar_lea.vmem %s0, %s272
      %p274 = pneg %p55
      %p275 = pneg %p52
      %p276 = pneg %p76
      %p277 = pneg %p73
      %p278 = pneg %p97
      %p279 = pneg %p94
      %p280 = pneg %p118
      %p281 = pneg %p115
      %p282 = pneg %p139
      %p283 = pneg %p136
      %p284 = pneg %p160
      %p285 = pneg %p157
      %p286 = pneg %p181
      %p287 = pneg %p178
      %p288 = pneg %p211
      %p289 = pneg %p208
      %s290 = smul.u32 %s22, 2
      %s291 = sadd.s32 %s290, %s23
      %p292 = scmp.lt.s32.totalorder %s291, 3
      %s293 = scalar_select %p292, %s291, 3
      %s294 = smul.addr %s293, 16
      %s295 = smul.addr %s294, 8
      %s296 = scalar_lea.vmem %s7, %s295
      %s297 = smul.u32 %s22, 2
      %s298 = sadd.s32 %s297, %s23
      %p299 = scmp.lt.s32.totalorder %s298, 3
      %s300 = scalar_select %p299, %s298, 3
      %s301 = smul.addr %s300, 30
      %s302 = smul.addr %s301, 8
      %s303 = scalar_lea.vmem %s0, %s302
      %s304 = smul.u32 %s22, 2
      %s305 = sadd.s32 %s304, %s23
      %s306 = smul.u32 %s22, 2
      %s307 = sadd.s32 %s306, %s23
      %p308 = scmp.lt.s32.totalorder %s307, 3
      %s309 = scalar_select %p308, %s307, 3
      %s310 = smul.addr %s309, 16
      %s311 = smul.addr %s310, 8
      %s312 = scalar_lea.vmem %s7, %s311
      %s313 = smul.u32 %s22, 2
      %s314 = sadd.s32 %s313, %s23
      %v315 = vld [vmem:[%s303] sm:$0xff]
      %v316 = vld [vmem:[%s303 + $0x8] sm:$0xff]
      %v317 = vld [vmem:[%s303 + $0x10] sm:$0xff]
      %v318 = vld [vmem:[%s303 + $0x18] sm:$0xff]
      %v319 = vld [vmem:[%s303 + $0x20] sm:$0xff]
      %v320 = vld [vmem:[%s303 + $0x28] sm:$0xff]
      %v321 = vld [vmem:[%s303 + $0x30] sm:$0xff]
      %v322 = vld [vmem:[%s303 + $0x38] sm:$0xff]
      %v323 = vld [vmem:[%s303 + $0x40] sm:$0xff]
      %v324 = vld [vmem:[%s303 + $0x48] sm:$0xff]
      %v325 = vld [vmem:[%s303 + $0x50] sm:$0xff]
      %v326 = vld [vmem:[%s303 + $0x58] sm:$0xff]
      %v327 = vld [vmem:[%s303 + $0x60] sm:$0xff]
      %v328 = vld [vmem:[%s303 + $0x68] sm:$0xff]
      %v329 = vld [vmem:[%s303 + $0x70] sm:$0xff]
      %v330 = vld [vmem:[%s303 + $0x78] sm:$0xff]
      %v331 = vld [vmem:[%s303 + $0x80] sm:$0xff]
      %v332 = vld [vmem:[%s303 + $0x88] sm:$0xff]
      %v333 = vld [vmem:[%s303 + $0x90] sm:$0xff]
      %v334 = vld [vmem:[%s303 + $0x98] sm:$0xff]
      %v335 = vld [vmem:[%s303 + $0xa0] sm:$0xff]
      %v336 = vld [vmem:[%s303 + $0xa8] sm:$0xff]
      %v337 = vld [vmem:[%s303 + $0xb0] sm:$0xff]
      %v338 = vld [vmem:[%s303 + $0xb8] sm:$0xff]
      %v339 = vld [vmem:[%s303 + $0xc0] sm:$0xff]
      %v340 = vld [vmem:[%s303 + $0xc8] sm:$0xff]
      %v341 = vld [vmem:[%s303 + $0xd0] sm:$0xff]
      %v342 = vld [vmem:[%s303 + $0xd8] sm:$0xff]
      %v343 = vld [vmem:[%s303 + $0xe0] sm:$0xff]
      %v344 = vld [vmem:[%s303 + $0xe8] sm:$0xff]
      %v345 = vld [vmem:[%s1] sm:$0xf]
      %vm346 = vcmask 31744
      %v348 = vsel %vm346, %v315, 0
      %v351 = vsel %vm346, %v316, 0
      %v354 = vsel %vm346, %v317, 0
      %v357 = vsel %vm346, %v318, 0
      %v360 = vsel %vm346, %v319, 0
      %v363 = vsel %vm346, %v320, 0
      %v366 = vsel %vm346, %v321, 0
      %v369 = vsel %vm346, %v322, 0
      %v372 = vsel %vm346, %v323, 0
      %v375 = vsel %vm346, %v324, 0
      %v378 = vsel %vm346, %v325, 0
      %v381 = vsel %vm346, %v326, 0
      %v384 = vsel %vm346, %v327, 0
      %v387 = vsel %vm346, %v328, 0
      %v390 = vsel %vm346, %v329, 0
      %v393 = vsel %vm346, %v330, 0
      %v396 = vsel %vm346, %v331, 0
      %v399 = vsel %vm346, %v332, 0
      %v402 = vsel %vm346, %v333, 0
      %v405 = vsel %vm346, %v334, 0
      %v408 = vsel %vm346, %v335, 0
      %v411 = vsel %vm346, %v336, 0
      %v414 = vsel %vm346, %v337, 0
      %v417 = vsel %vm346, %v338, 0
      %v420 = vsel %vm346, %v339, 0
      %v423 = vsel %vm346, %v340, 0
      %v426 = vsel %vm346, %v341, 0
      %v429 = vsel %vm346, %v342, 0
      %v432 = vsel %vm346, %v343, 0
      %v435 = vsel %vm346, %v344, 0
      %vm437 = vcmask 1043456
      %v439 = vsel %vm437, %v345, 0
      %441 = vmatprep.subr.mxu0 0.0
      %442 = vmatpush1.msra.mxu0 %v439
      %443 = vmatprep.subr.mxu0 0.0
      %444 = vmatpush1.msra.mxu0 0.0
      %445 = vmatprep.subr.mxu0 0.0
      %446 = vmatpush1.msra.mxu0 0.0
      %447 = vmatprep.subr.mxu0 0.0
      %448 = vmatpush1.msra.mxu0 0.0
      %449 = vmatprep.subr.mxu0 0.0
      %450 = vmatpush1.msra.mxu0 0.0
      %451 = vmatprep.subr.mxu0 0.0
      %452 = vmatpush1.msra.mxu0 0.0
      %453 = vmatprep.subr.mxu0 0.0
      %454 = vmatpush1.msra.mxu0 0.0
      %455 = vmatprep.subr.mxu0 0.0
      %456 = vmatpush1.msra.mxu0 0.0
      %457 = vmatprep.subr.mxu0 0.0
      %458 = vmatpush1.msra.mxu0 0.0
      %459 = vmatprep.subr.mxu0 0.0
      %460 = vmatpush1.msra.mxu0 0.0
      %461 = vmatprep.subr.mxu0 0.0
      %462 = vmatpush1.msra.mxu0 0.0
      %463 = vmatprep.subr.mxu0 0.0
      %464 = vmatpush1.msra.mxu0 0.0
      %465 = vmatprep.subr.mxu0 0.0
      %466 = vmatpush1.msra.mxu0 0.0
      %467 = vmatprep.subr.mxu0 0.0
      %468 = vmatpush1.msra.mxu0 0.0
      %469 = vmatprep.subr.mxu0 0.0
      %470 = vmatpush1.msra.mxu0 0.0
      %471 = vmatprep.subr.mxu0 0.0
      %472 = vmatpush1.msra.mxu0 0.0
      %473 = vmatprep.subr.mxu0 0.0
      %474 = vmatpush1.msra.mxu0 0.0
      %475 = vmatprep.subr.mxu0 0.0
      %476 = vmatpush1.msra.mxu0 0.0
      %477 = vmatprep.subr.mxu0 0.0
      %478 = vmatpush1.msra.mxu0 0.0
      %479 = vmatprep.subr.mxu0 0.0
      %480 = vmatpush1.msra.mxu0 0.0
      %481 = vmatprep.subr.mxu0 0.0
      %482 = vmatpush1.msra.mxu0 0.0
      %483 = vmatprep.subr.mxu0 0.0
      %484 = vmatpush1.msra.mxu0 0.0
      %485 = vmatprep.subr.mxu0 0.0
      %486 = vmatpush1.msra.mxu0 0.0
      %487 = vmatprep.subr.mxu0 0.0
      %488 = vmatpush1.msra.mxu0 0.0
      %489 = vmatprep.subr.mxu0 0.0
      %490 = vmatpush1.msra.mxu0 0.0
      %491 = vmatprep.subr.mxu0 0.0
      %492 = vmatpush1.msra.mxu0 0.0
      %493 = vmatprep.subr.mxu0 0.0
      %494 = vmatpush1.msra.mxu0 0.0
      %495 = vmatprep.subr.mxu0 0.0
      %496 = vmatpush1.msra.mxu0 0.0
      %497 = vmatprep.subr.mxu0 0.0
      %498 = vmatpush1.msra.mxu0 0.0
      %499 = vmatprep.subr.mxu0 0.0
      %500 = vmatpush1.msra.mxu0 0.0
      %501 = vmatprep.subr.mxu0 0.0
      %502 = vmatpush1.msra.mxu0 0.0
      %503 = vmatprep.subr.mxu0 0.0
      %504 = vmatpush1.msra.mxu0 0.0
      %505 = vmatprep.mubr.f32.mxu0 0.0
      %506 = vmatmul.mubr.f32.gmra.mrb[0].mxu0 %v348
      %v507 = vpop.f32.mrb[0].mxu0
      %v508 = vadd.f32 0.0, %v507
      %v509 = vpop.f32.mrb[0].mxu0
      %510 = vmatprep.mubr.f32.mxu0 0.0
      %511 = vmatmul.mubr.f32.gmra.mrb[0].mxu0 %v351
      %v512 = vpop.f32.mrb[0].mxu0
      %v513 = vadd.f32 0.0, %v512
      %v514 = vpop.f32.mrb[0].mxu0
      %515 = vmatprep.mubr.f32.mxu0 0.0
      %516 = vmatmul.mubr.f32.gmra.mrb[0].mxu0 %v354
      %v517 = vpop.f32.mrb[0].mxu0
      %v518 = vadd.f32 0.0, %v517
      %v519 = vpop.f32.mrb[0].mxu0
      %520 = vmatprep.mubr.f32.mxu0 0.0
      %521 = vmatmul.mubr.f32.gmra.mrb[0].mxu0 %v357
      %v522 = vpop.f32.mrb[0].mxu0
      %v523 = vadd.f32 0.0, %v522
      %v524 = vpop.f32.mrb[0].mxu0
      %525 = vmatprep.mubr.f32.mxu0 0.0
      %526 = vmatmul.mubr.f32.gmra.mrb[0].mxu0 %v360
      %v527 = vpop.f32.mrb[0].mxu0
      %v528 = vadd.f32 0.0, %v527
      %v529 = vpop.f32.mrb[0].mxu0
      %530 = vmatprep.mubr.f32.mxu0 0.0
      %531 = vmatmul.mubr.f32.gmra.mrb[0].mxu0 %v363
      %v532 = vpop.f32.mrb[0].mxu0
      %v533 = vadd.f32 0.0, %v532
      %v534 = vpop.f32.mrb[0].mxu0
      %535 = vmatprep.mubr.f32.mxu0 0.0
      %536 = vmatmul.mubr.f32.gmra.mrb[0].mxu0 %v366
      %v537 = vpop.f32.mrb[0].mxu0
      %v538 = vadd.f32 0.0, %v537
      %v539 = vpop.f32.mrb[0].mxu0
      %540 = vmatprep.mubr.f32.mxu0 0.0
      %541 = vmatmul.mubr.f32.gmra.mrb[0].mxu0 %v369
      %v542 = vpop.f32.mrb[0].mxu0
      %v543 = vadd.f32 0.0, %v542
      %v544 = vpop.f32.mrb[0].mxu0
      %545 = vmatprep.mubr.f32.mxu0 0.0
      %546 = vmatmul.mubr.f32.gmra.mrb[0].mxu0 %v372
      %v547 = vpop.f32.mrb[0].mxu0
      %v548 = vadd.f32 0.0, %v547
      %v549 = vpop.f32.mrb[0].mxu0
      %550 = vmatprep.mubr.f32.mxu0 0.0
      %551 = vmatmul.mubr.f32.gmra.mrb[0].mxu0 %v375
      %v552 = vpop.f32.mrb[0].mxu0
      %v553 = vadd.f32 0.0, %v552
      %v554 = vpop.f32.mrb[0].mxu0
      %555 = vmatprep.mubr.f32.mxu0 0.0
      %556 = vmatmul.mubr.f32.gmra.mrb[0].mxu0 %v378
      %v557 = vpop.f32.mrb[0].mxu0
      %v558 = vadd.f32 0.0, %v557
      %v559 = vpop.f32.mrb[0].mxu0
      %560 = vmatprep.mubr.f32.mxu0 0.0
      %561 = vmatmul.mubr.f32.gmra.mrb[0].mxu0 %v381
      %v562 = vpop.f32.mrb[0].mxu0
      %v563 = vadd.f32 0.0, %v562
      %v564 = vpop.f32.mrb[0].mxu0
      %565 = vmatprep.mubr.f32.mxu0 0.0
      %566 = vmatmul.mubr.f32.gmra.mrb[0].mxu0 %v384
      %v567 = vpop.f32.mrb[0].mxu0
      %v568 = vadd.f32 0.0, %v567
      %v569 = vpop.f32.mrb[0].mxu0
      %570 = vmatprep.mubr.f32.mxu0 0.0
      %571 = vmatmul.mubr.f32.gmra.mrb[0].mxu0 %v387
      %v572 = vpop.f32.mrb[0].mxu0
      %v573 = vadd.f32 0.0, %v572
      %v574 = vpop.f32.mrb[0].mxu0
      %575 = vmatprep.mubr.f32.mxu0 0.0
      %576 = vmatmul.mubr.f32.gmra.mrb[0].mxu0 %v390
      %v577 = vpop.f32.mrb[0].mxu0
      %v578 = vadd.f32 0.0, %v577
      %v579 = vpop.f32.mrb[0].mxu0
      %580 = vmatprep.mubr.f32.mxu0 0.0
      %581 = vmatmul.mubr.f32.gmra.mrb[0].mxu0 %v393
      %v582 = vpop.f32.mrb[0].mxu0
      %v583 = vadd.f32 0.0, %v582
      %v584 = vpop.f32.mrb[0].mxu0
      %585 = vmatprep.mubr.f32.mxu0 0.0
      %586 = vmatmul.mubr.f32.gmra.mrb[0].mxu0 %v396
      %v587 = vpop.f32.mrb[0].mxu0
      %v588 = vadd.f32 0.0, %v587
      %v589 = vpop.f32.mrb[0].mxu0
      %590 = vmatprep.mubr.f32.mxu0 0.0
      %591 = vmatmul.mubr.f32.gmra.mrb[0].mxu0 %v399
      %v592 = vpop.f32.mrb[0].mxu0
      %v593 = vadd.f32 0.0, %v592
      %v594 = vpop.f32.mrb[0].mxu0
      %595 = vmatprep.mubr.f32.mxu0 0.0
      %596 = vmatmul.mubr.f32.gmra.mrb[0].mxu0 %v402
      %v597 = vpop.f32.mrb[0].mxu0
      %v598 = vadd.f32 0.0, %v597
      %v599 = vpop.f32.mrb[0].mxu0
      %600 = vmatprep.mubr.f32.mxu0 0.0
      %601 = vmatmul.mubr.f32.gmra.mrb[0].mxu0 %v405
      %v602 = vpop.f32.mrb[0].mxu0
      %v603 = vadd.f32 0.0, %v602
      %v604 = vpop.f32.mrb[0].mxu0
      %605 = vmatprep.mubr.f32.mxu0 0.0
      %606 = vmatmul.mubr.f32.gmra.mrb[0].mxu0 %v408
      %v607 = vpop.f32.mrb[0].mxu0
      %v608 = vadd.f32 0.0, %v607
      %v609 = vpop.f32.mrb[0].mxu0
      %610 = vmatprep.mubr.f32.mxu0 0.0
      %611 = vmatmul.mubr.f32.gmra.mrb[0].mxu0 %v411
      %v612 = vpop.f32.mrb[0].mxu0
      %v613 = vadd.f32 0.0, %v612
      %v614 = vpop.f32.mrb[0].mxu0
      %615 = vmatprep.mubr.f32.mxu0 0.0
      %616 = vmatmul.mubr.f32.gmra.mrb[0].mxu0 %v414
      %v617 = vpop.f32.mrb[0].mxu0
      %v618 = vadd.f32 0.0, %v617
      %v619 = vpop.f32.mrb[0].mxu0
      %620 = vmatprep.mubr.f32.mxu0 0.0
      %621 = vmatmul.mubr.f32.gmra.mrb[0].mxu0 %v417
      %v622 = vpop.f32.mrb[0].mxu0
      %v623 = vadd.f32 0.0, %v622
      %v624 = vpop.f32.mrb[0].mxu0
      %625 = vmatprep.mubr.f32.mxu0 0.0
      %626 = vmatmul.mubr.f32.gmra.mrb[0].mxu0 %v420
      %v627 = vpop.f32.mrb[0].mxu0
      %v628 = vadd.f32 0.0, %v627
      %v629 = vpop.f32.mrb[0].mxu0
      %630 = vmatprep.mubr.f32.mxu0 0.0
      %631 = vmatmul.mubr.f32.gmra.mrb[0].mxu0 %v423
      %v632 = vpop.f32.mrb[0].mxu0
      %v633 = vadd.f32 0.0, %v632
      %v634 = vpop.f32.mrb[0].mxu0
      %635 = vmatprep.mubr.f32.mxu0 0.0
      %636 = vmatmul.mubr.f32.gmra.mrb[0].mxu0 %v426
      %v637 = vpop.f32.mrb[0].mxu0
      %v638 = vadd.f32 0.0, %v637
      %v639 = vpop.f32.mrb[0].mxu0
      %640 = vmatprep.mubr.f32.mxu0 0.0
      %641 = vmatmul.mubr.f32.gmra.mrb[0].mxu0 %v429
      %v642 = vpop.f32.mrb[0].mxu0
      %v643 = vadd.f32 0.0, %v642
      %v644 = vpop.f32.mrb[0].mxu0
      %645 = vmatprep.mubr.f32.mxu0 0.0
      %646 = vmatmul.mubr.f32.gmra.mrb[0].mxu0 %v432
      %v647 = vpop.f32.mrb[0].mxu0
      %v648 = vadd.f32 0.0, %v647
      %v649 = vpop.f32.mrb[0].mxu0
      %650 = vmatprep.mubr.f32.mxu0 0.0
      %651 = vmatmul.mubr.f32.gmra.mrb[0].mxu0 %v435
      %v652 = vpop.f32.mrb[0].mxu0
      %v653 = vadd.f32 0.0, %v652
      %v654 = vpop.f32.mrb[0].mxu0
      %655 = vdwg.mxu0
      %v656 = vld [vmem:[%s2] sm:$0x1]
      %v658 = vlaneseq
      %v659 = vshrl.u32 %v658, 7
      %v660 = vsub.s32 0, %v659
      %v661 = vrot.slane %v656, %v660
      %v663 = vmul.f32 %v508, %v661
      %v664 = vmul.f32 %v513, %v661
      %v665 = vmul.f32 %v518, %v661
      %v666 = vmul.f32 %v523, %v661
      %v667 = vmul.f32 %v528, %v661
      %v668 = vmul.f32 %v533, %v661
      %v669 = vmul.f32 %v538, %v661
      %v670 = vmul.f32 %v543, %v661
      %v671 = vmul.f32 %v548, %v661
      %v672 = vmul.f32 %v553, %v661
      %v673 = vmul.f32 %v558, %v661
      %v674 = vmul.f32 %v563, %v661
      %v675 = vmul.f32 %v568, %v661
      %v676 = vmul.f32 %v573, %v661
      %v677 = vmul.f32 %v578, %v661
      %v678 = vmul.f32 %v583, %v661
      %v679 = vmul.f32 %v588, %v661
      %v680 = vmul.f32 %v593, %v661
      %v681 = vmul.f32 %v598, %v661
      %v682 = vmul.f32 %v603, %v661
      %v683 = vmul.f32 %v608, %v661
      %v684 = vmul.f32 %v613, %v661
      %v685 = vmul.f32 %v618, %v661
      %v686 = vmul.f32 %v623, %v661
      %v687 = vmul.f32 %v628, %v661
      %v688 = vmul.f32 %v633, %v661
      %v689 = vmul.f32 %v638, %v661
      %v690 = vmul.f32 %v643, %v661
      %v691 = vmul.f32 %v648, %v661
      %v692 = vmul.f32 %v653, %v661
      %v693 = vld [vmem:[%s3] sm:$0x1]
      %v695 = vlaneseq
      %v696 = vshrl.u32 %v695, 7
      %v697 = vsub.s32 0, %v696
      %v698 = vrot.slane %v693, %v697
      %v700 = vadd.f32 %v663, %v698
      %v701 = vadd.f32 %v664, %v698
      %v702 = vadd.f32 %v665, %v698
      %v703 = vadd.f32 %v666, %v698
      %v704 = vadd.f32 %v667, %v698
      %v705 = vadd.f32 %v668, %v698
      %v706 = vadd.f32 %v669, %v698
      %v707 = vadd.f32 %v670, %v698
      %v708 = vadd.f32 %v671, %v698
      %v709 = vadd.f32 %v672, %v698
      %v710 = vadd.f32 %v673, %v698
      %v711 = vadd.f32 %v674, %v698
      %v712 = vadd.f32 %v675, %v698
      %v713 = vadd.f32 %v676, %v698
      %v714 = vadd.f32 %v677, %v698
      %v715 = vadd.f32 %v678, %v698
      %v716 = vadd.f32 %v679, %v698
      %v717 = vadd.f32 %v680, %v698
      %v718 = vadd.f32 %v681, %v698
      %v719 = vadd.f32 %v682, %v698
      %v720 = vadd.f32 %v683, %v698
      %v721 = vadd.f32 %v684, %v698
      %v722 = vadd.f32 %v685, %v698
      %v723 = vadd.f32 %v686, %v698
      %v724 = vadd.f32 %v687, %v698
      %v725 = vadd.f32 %v688, %v698
      %v726 = vadd.f32 %v689, %v698
      %v727 = vadd.f32 %v690, %v698
      %v728 = vadd.f32 %v691, %v698
      %v729 = vadd.f32 %v692, %v698
      %v730 = vmin.f32 %v700, 20.0
      %v731 = vmin.f32 %v701, 20.0
      %v732 = vmin.f32 %v702, 20.0
      %v733 = vmin.f32 %v703, 20.0
      %v734 = vmin.f32 %v704, 20.0
      %v735 = vmin.f32 %v705, 20.0
      %v736 = vmin.f32 %v706, 20.0
      %v737 = vmin.f32 %v707, 20.0
      %v738 = vmin.f32 %v708, 20.0
      %v739 = vmin.f32 %v709, 20.0
      %v740 = vmin.f32 %v710, 20.0
      %v741 = vmin.f32 %v711, 20.0
      %v742 = vmin.f32 %v712, 20.0
      %v743 = vmin.f32 %v713, 20.0
      %v744 = vmin.f32 %v714, 20.0
      %v745 = vmin.f32 %v715, 20.0
      %v746 = vmin.f32 %v716, 20.0
      %v747 = vmin.f32 %v717, 20.0
      %v748 = vmin.f32 %v718, 20.0
      %v749 = vmin.f32 %v719, 20.0
      %v750 = vmin.f32 %v720, 20.0
      %v751 = vmin.f32 %v721, 20.0
      %v752 = vmin.f32 %v722, 20.0
      %v753 = vmin.f32 %v723, 20.0
      %v754 = vmin.f32 %v724, 20.0
      %v755 = vmin.f32 %v725, 20.0
      %v756 = vmin.f32 %v726, 20.0
      %v757 = vmin.f32 %v727, 20.0
      %v758 = vmin.f32 %v728, 20.0
      %v759 = vmin.f32 %v729, 20.0
      %v760 = vmul.f32 %v730, 1.442695
      %v761 = vpow.pop %v760
      %v762 = vmul.f32 %v731, 1.442695
      %v763 = vpow.pop %v762
      %v764 = vmul.f32 %v732, 1.442695
      %v765 = vpow.pop %v764
      %v766 = vmul.f32 %v733, 1.442695
      %v767 = vpow.pop %v766
      %v768 = vmul.f32 %v734, 1.442695
      %v769 = vpow.pop %v768
      %v770 = vmul.f32 %v735, 1.442695
      %v771 = vpow.pop %v770
      %v772 = vmul.f32 %v736, 1.442695
      %v773 = vpow.pop %v772
      %v774 = vmul.f32 %v737, 1.442695
      %v775 = vpow.pop %v774
      %v776 = vmul.f32 %v738, 1.442695
      %v777 = vpow.pop %v776
      %v778 = vmul.f32 %v739, 1.442695
      %v779 = vpow.pop %v778
      %v780 = vmul.f32 %v740, 1.442695
      %v781 = vpow.pop %v780
      %v782 = vmul.f32 %v741, 1.442695
      %v783 = vpow.pop %v782
      %v784 = vmul.f32 %v742, 1.442695
      %v785 = vpow.pop %v784
      %v786 = vmul.f32 %v743, 1.442695
      %v787 = vpow.pop %v786
      %v788 = vmul.f32 %v744, 1.442695
      %v789 = vpow.pop %v788
      %v790 = vmul.f32 %v745, 1.442695
      %v791 = vpow.pop %v790
      %v792 = vmul.f32 %v746, 1.442695
      %v793 = vpow.pop %v792
      %v794 = vmul.f32 %v747, 1.442695
      %v795 = vpow.pop %v794
      %v796 = vmul.f32 %v748, 1.442695
      %v797 = vpow.pop %v796
      %v798 = vmul.f32 %v749, 1.442695
      %v799 = vpow.pop %v798
      %v800 = vmul.f32 %v750, 1.442695
      %v801 = vpow.pop %v800
      %v802 = vmul.f32 %v751, 1.442695
      %v803 = vpow.pop %v802
      %v804 = vmul.f32 %v752, 1.442695
      %v805 = vpow.pop %v804
      %v806 = vmul.f32 %v753, 1.442695
      %v807 = vpow.pop %v806
      %v808 = vmul.f32 %v754, 1.442695
      %v809 = vpow.pop %v808
      %v810 = vmul.f32 %v755, 1.442695
      %v811 = vpow.pop %v810
      %v812 = vmul.f32 %v756, 1.442695
      %v813 = vpow.pop %v812
      %v814 = vmul.f32 %v757, 1.442695
      %v815 = vpow.pop %v814
      %v816 = vmul.f32 %v758, 1.442695
      %v817 = vpow.pop %v816
      %v818 = vmul.f32 %v759, 1.442695
      %v819 = vpow.pop %v818
      %v820 = vadd.f32 %v761, 1.0
      %v821 = vadd.f32 %v763, 1.0
      %v822 = vadd.f32 %v765, 1.0
      %v823 = vadd.f32 %v767, 1.0
      %v824 = vadd.f32 %v769, 1.0
      %v825 = vadd.f32 %v771, 1.0
      %v826 = vadd.f32 %v773, 1.0
      %v827 = vadd.f32 %v775, 1.0
      %v828 = vadd.f32 %v777, 1.0
      %v829 = vadd.f32 %v779, 1.0
      %v830 = vadd.f32 %v781, 1.0
      %v831 = vadd.f32 %v783, 1.0
      %v832 = vadd.f32 %v785, 1.0
      %v833 = vadd.f32 %v787, 1.0
      %v834 = vadd.f32 %v789, 1.0
      %v835 = vadd.f32 %v791, 1.0
      %v836 = vadd.f32 %v793, 1.0
      %v837 = vadd.f32 %v795, 1.0
      %v838 = vadd.f32 %v797, 1.0
      %v839 = vadd.f32 %v799, 1.0
      %v840 = vadd.f32 %v801, 1.0
      %v841 = vadd.f32 %v803, 1.0
      %v842 = vadd.f32 %v805, 1.0
      %v843 = vadd.f32 %v807, 1.0
      %v844 = vadd.f32 %v809, 1.0
      %v845 = vadd.f32 %v811, 1.0
      %v846 = vadd.f32 %v813, 1.0
      %v847 = vadd.f32 %v815, 1.0
      %v848 = vadd.f32 %v817, 1.0
      %v849 = vadd.f32 %v819, 1.0
      %v850 = vmul.f32 %v820, %v820
      %v851 = vmul.f32 %v821, %v821
      %v852 = vmul.f32 %v822, %v822
      %v853 = vmul.f32 %v823, %v823
      %v854 = vmul.f32 %v824, %v824
      %v855 = vmul.f32 %v825, %v825
      %v856 = vmul.f32 %v826, %v826
      %v857 = vmul.f32 %v827, %v827
      %v858 = vmul.f32 %v828, %v828
      %v859 = vmul.f32 %v829, %v829
      %v860 = vmul.f32 %v830, %v830
      %v861 = vmul.f32 %v831, %v831
      %v862 = vmul.f32 %v832, %v832
      %v863 = vmul.f32 %v833, %v833
      %v864 = vmul.f32 %v834, %v834
      %v865 = vmul.f32 %v835, %v835
      %v866 = vmul.f32 %v836, %v836
      %v867 = vmul.f32 %v837, %v837
      %v868 = vmul.f32 %v838, %v838
      %v869 = vmul.f32 %v839, %v839
      %v870 = vmul.f32 %v840, %v840
      %v871 = vmul.f32 %v841, %v841
      %v872 = vmul.f32 %v842, %v842
      %v873 = vmul.f32 %v843, %v843
      %v874 = vmul.f32 %v844, %v844
      %v875 = vmul.f32 %v845, %v845
      %v876 = vmul.f32 %v846, %v846
      %v877 = vmul.f32 %v847, %v847
      %v878 = vmul.f32 %v848, %v848
      %v879 = vmul.f32 %v849, %v849
      %v880 = vsub.f32 %v850, 1.0
      %v881 = vsub.f32 %v851, 1.0
      %v882 = vsub.f32 %v852, 1.0
      %v883 = vsub.f32 %v853, 1.0
      %v884 = vsub.f32 %v854, 1.0
      %v885 = vsub.f32 %v855, 1.0
      %v886 = vsub.f32 %v856, 1.0
      %v887 = vsub.f32 %v857, 1.0
      %v888 = vsub.f32 %v858, 1.0
      %v889 = vsub.f32 %v859, 1.0
      %v890 = vsub.f32 %v860, 1.0
      %v891 = vsub.f32 %v861, 1.0
      %v892 = vsub.f32 %v862, 1.0
      %v893 = vsub.f32 %v863, 1.0
      %v894 = vsub.f32 %v864, 1.0
      %v895 = vsub.f32 %v865, 1.0
      %v896 = vsub.f32 %v866, 1.0
      %v897 = vsub.f32 %v867, 1.0
      %v898 = vsub.f32 %v868, 1.0
      %v899 = vsub.f32 %v869, 1.0
      %v900 = vsub.f32 %v870, 1.0
      %v901 = vsub.f32 %v871, 1.0
      %v902 = vsub.f32 %v872, 1.0
      %v903 = vsub.f32 %v873, 1.0
      %v904 = vsub.f32 %v874, 1.0
      %v905 = vsub.f32 %v875, 1.0
      %v906 = vsub.f32 %v876, 1.0
      %v907 = vsub.f32 %v877, 1.0
      %v908 = vsub.f32 %v878, 1.0
      %v909 = vsub.f32 %v879, 1.0
      %v910 = vadd.f32 %v850, 1.0
      %v911 = vadd.f32 %v851, 1.0
      %v912 = vadd.f32 %v852, 1.0
      %v913 = vadd.f32 %v853, 1.0
      %v914 = vadd.f32 %v854, 1.0
      %v915 = vadd.f32 %v855, 1.0
      %v916 = vadd.f32 %v856, 1.0
      %v917 = vadd.f32 %v857, 1.0
      %v918 = vadd.f32 %v858, 1.0
      %v919 = vadd.f32 %v859, 1.0
      %v920 = vadd.f32 %v860, 1.0
      %v921 = vadd.f32 %v861, 1.0
      %v922 = vadd.f32 %v862, 1.0
      %v923 = vadd.f32 %v863, 1.0
      %v924 = vadd.f32 %v864, 1.0
      %v925 = vadd.f32 %v865, 1.0
      %v926 = vadd.f32 %v866, 1.0
      %v927 = vadd.f32 %v867, 1.0
      %v928 = vadd.f32 %v868, 1.0
      %v929 = vadd.f32 %v869, 1.0
      %v930 = vadd.f32 %v870, 1.0
      %v931 = vadd.f32 %v871, 1.0
      %v932 = vadd.f32 %v872, 1.0
      %v933 = vadd.f32 %v873, 1.0
      %v934 = vadd.f32 %v874, 1.0
      %v935 = vadd.f32 %v875, 1.0
      %v936 = vadd.f32 %v876, 1.0
      %v937 = vadd.f32 %v877, 1.0
      %v938 = vadd.f32 %v878, 1.0
      %v939 = vadd.f32 %v879, 1.0
      %v940 = vrcp.pop %v910
      %v941 = vmul.f32 %v880, %v940
      %v942 = vrcp.pop %v911
      %v943 = vmul.f32 %v881, %v942
      %v944 = vrcp.pop %v912
      %v945 = vmul.f32 %v882, %v944
      %v946 = vrcp.pop %v913
      %v947 = vmul.f32 %v883, %v946
      %v948 = vrcp.pop %v914
      %v949 = vmul.f32 %v884, %v948
      %v950 = vrcp.pop %v915
      %v951 = vmul.f32 %v885, %v950
      %v952 = vrcp.pop %v916
      %v953 = vmul.f32 %v886, %v952
      %v954 = vrcp.pop %v917
      %v955 = vmul.f32 %v887, %v954
      %v956 = vrcp.pop %v918
      %v957 = vmul.f32 %v888, %v956
      %v958 = vrcp.pop %v919
      %v959 = vmul.f32 %v889, %v958
      %v960 = vrcp.pop %v920
      %v961 = vmul.f32 %v890, %v960
      %v962 = vrcp.pop %v921
      %v963 = vmul.f32 %v891, %v962
      %v964 = vrcp.pop %v922
      %v965 = vmul.f32 %v892, %v964
      %v966 = vrcp.pop %v923
      %v967 = vmul.f32 %v893, %v966
      %v968 = vrcp.pop %v924
      %v969 = vmul.f32 %v894, %v968
      %v970 = vrcp.pop %v925
      %v971 = vmul.f32 %v895, %v970
      %v972 = vrcp.pop %v926
      %v973 = vmul.f32 %v896, %v972
      %v974 = vrcp.pop %v927
      %v975 = vmul.f32 %v897, %v974
      %v976 = vrcp.pop %v928
      %v977 = vmul.f32 %v898, %v976
      %v978 = vrcp.pop %v929
      %v979 = vmul.f32 %v899, %v978
      %v980 = vrcp.pop %v930
      %v981 = vmul.f32 %v900, %v980
      %v982 = vrcp.pop %v931
      %v983 = vmul.f32 %v901, %v982
      %v984 = vrcp.pop %v932
      %v985 = vmul.f32 %v902, %v984
      %v986 = vrcp.pop %v933
      %v987 = vmul.f32 %v903, %v986
      %v988 = vrcp.pop %v934
      %v989 = vmul.f32 %v904, %v988
      %v990 = vrcp.pop %v935
      %v991 = vmul.f32 %v905, %v990
      %v992 = vrcp.pop %v936
      %v993 = vmul.f32 %v906, %v992
      %v994 = vrcp.pop %v937
      %v995 = vmul.f32 %v907, %v994
      %v996 = vrcp.pop %v938
      %v997 = vmul.f32 %v908, %v996
      %v998 = vrcp.pop %v939
      %v999 = vmul.f32 %v909, %v998
      %v1000 = vmul.f32 %v700, %v941
      %v1001 = vmul.f32 %v701, %v943
      %v1002 = vmul.f32 %v702, %v945
      %v1003 = vmul.f32 %v703, %v947
      %v1004 = vmul.f32 %v704, %v949
      %v1005 = vmul.f32 %v705, %v951
      %v1006 = vmul.f32 %v706, %v953
      %v1007 = vmul.f32 %v707, %v955
      %v1008 = vmul.f32 %v708, %v957
      %v1009 = vmul.f32 %v709, %v959
      %v1010 = vmul.f32 %v710, %v961
      %v1011 = vmul.f32 %v711, %v963
      %v1012 = vmul.f32 %v712, %v965
      %v1013 = vmul.f32 %v713, %v967
      %v1014 = vmul.f32 %v714, %v969
      %v1015 = vmul.f32 %v715, %v971
      %v1016 = vmul.f32 %v716, %v973
      %v1017 = vmul.f32 %v717, %v975
      %v1018 = vmul.f32 %v718, %v977
      %v1019 = vmul.f32 %v719, %v979
      %v1020 = vmul.f32 %v720, %v981
      %v1021 = vmul.f32 %v721, %v983
      %v1022 = vmul.f32 %v722, %v985
      %v1023 = vmul.f32 %v723, %v987
      %v1024 = vmul.f32 %v724, %v989
      %v1025 = vmul.f32 %v725, %v991
      %v1026 = vmul.f32 %v726, %v993
      %v1027 = vmul.f32 %v727, %v995
      %v1028 = vmul.f32 %v728, %v997
      %v1029 = vmul.f32 %v729, %v999
      %v1030 = vlaneseq
      %v1031 = vshrl.u32 %v1030, 7
      %v1032 = vadd.s32 %v1031, 8
      %v1033 = vadd.s32 %v1031, 16
      %vm1034 = vcmp.ge.s32.totalorder %v1031, 1
      %vm1035 = vcmp.ge.s32.totalorder %v1032, 1
      %vm1036 = vcmp.ge.s32.totalorder %v1033, 1
      %vm1037 = vcmp.le.s32.totalorder %v1031, 16
      %vm1038 = vcmp.le.s32.totalorder %v1032, 16
      %vm1039 = vcmp.le.s32.totalorder %v1033, 16
      %vm1040 = vmand %vm1034, %vm1037
      %vm1041 = vmand %vm1035, %vm1038
      %vm1042 = vmand %vm1036, %vm1039
      %p1043 = scmp.gt.s32.totalorder %s23, 0
      %s1044 = scalar_select %p1043, 1, 0
      %v1045 = vstv %s1044
      %vm1046 = vcmp.eq.s32.totalorder %v1045, 1
      %vm1047 = vmand %vm1040, %vm1046
      %vm1048 = vmand %vm1041, %vm1046
      %vm1049 = vmand %vm1042, %vm1046
      %vm1050 = vmand %vm1040, 1
      %vm1051 = vmand %vm1041, 1
      %vm1052 = vmand %vm1042, 1
      %p1053 = scmp.lt.s32.totalorder %s23, 1
      %s1054 = scalar_select %p1053, 1, 0
      %v1055 = vstv %s1054
      %vm1056 = vcmp.eq.s32.totalorder %v1055, 1
      %vm1057 = vmand %vm1047, 1
      %vm1058 = vmand %vm1048, 1
      %vm1059 = vmand %vm1049, 1
      %vm1060 = vmand %vm1050, %vm1056
      %vm1061 = vmand %vm1051, %vm1056
      %vm1062 = vmand %vm1052, %vm1056
      %v1063 = vsel %vm1057, %v1000, 0.0
      %v1064 = vsel %vm1058, %v1001, 0.0
      %v1065 = vsel %vm1059, %v1002, 0.0
      %v1066 = vsel %vm1050, %v1003, 0.0
      %v1067 = vsel %vm1051, %v1004, 0.0
      %v1068 = vsel %vm1052, %v1005, 0.0
      %v1069 = vsel %vm1050, %v1006, 0.0
      %v1070 = vsel %vm1051, %v1007, 0.0
      %v1071 = vsel %vm1052, %v1008, 0.0
      %v1072 = vsel %vm1050, %v1009, 0.0
      %v1073 = vsel %vm1051, %v1010, 0.0
      %v1074 = vsel %vm1052, %v1011, 0.0
      %v1075 = vsel %vm1050, %v1012, 0.0
      %v1076 = vsel %vm1051, %v1013, 0.0
      %v1077 = vsel %vm1052, %v1014, 0.0
      %v1078 = vsel %vm1050, %v1015, 0.0
      %v1079 = vsel %vm1051, %v1016, 0.0
      %v1080 = vsel %vm1052, %v1017, 0.0
      %v1081 = vsel %vm1050, %v1018, 0.0
      %v1082 = vsel %vm1051, %v1019, 0.0
      %v1083 = vsel %vm1052, %v1020, 0.0
      %v1084 = vsel %vm1050, %v1021, 0.0
      %v1085 = vsel %vm1051, %v1022, 0.0
      %v1086 = vsel %vm1052, %v1023, 0.0
      %v1087 = vsel %vm1050, %v1024, 0.0
      %v1088 = vsel %vm1051, %v1025, 0.0
      %v1089 = vsel %vm1052, %v1026, 0.0
      %v1090 = vsel %vm1060, %v1027, 0.0
      %v1091 = vsel %vm1061, %v1028, 0.0
      %v1092 = vsel %vm1062, %v1029, 0.0
      %1093 = vst.msk [vmem:[#allocation2] sm:$0xff] %vm346, %v1063
      %1094 = vst.msk [vmem:[#allocation2 + $0x8] sm:$0xff] %vm346, %v1064
      %1095 = vst.msk [vmem:[#allocation2 + $0x10] sm:$0xff] %vm346, %v1065
      %1096 = vst.msk [vmem:[#allocation2 + $0x18] sm:$0xff] %vm346, %v1066
      %1097 = vst.msk [vmem:[#allocation2 + $0x20] sm:$0xff] %vm346, %v1067
      %1098 = vst.msk [vmem:[#allocation2 + $0x28] sm:$0xff] %vm346, %v1068
      %1099 = vst.msk [vmem:[#allocation2 + $0x30] sm:$0xff] %vm346, %v1069
      %1100 = vst.msk [vmem:[#allocation2 + $0x38] sm:$0xff] %vm346, %v1070
      %1101 = vst.msk [vmem:[#allocation2 + $0x40] sm:$0xff] %vm346, %v1071
      %1102 = vst.msk [vmem:[#allocation2 + $0x48] sm:$0xff] %vm346, %v1072
      %1103 = vst.msk [vmem:[#allocation2 + $0x50] sm:$0xff] %vm346, %v1073
      %1104 = vst.msk [vmem:[#allocation2 + $0x58] sm:$0xff] %vm346, %v1074
      %1105 = vst.msk [vmem:[#allocation2 + $0x60] sm:$0xff] %vm346, %v1075
      %1106 = vst.msk [vmem:[#allocation2 + $0x68] sm:$0xff] %vm346, %v1076
      %1107 = vst.msk [vmem:[#allocation2 + $0x70] sm:$0xff] %vm346, %v1077
      %1108 = vst.msk [vmem:[#allocation2 + $0x78] sm:$0xff] %vm346, %v1078
      %1109 = vst.msk [vmem:[#allocation2 + $0x80] sm:$0xff] %vm346, %v1079
      %1110 = vst.msk [vmem:[#allocation2 + $0x88] sm:$0xff] %vm346, %v1080
      %1111 = vst.msk [vmem:[#allocation2 + $0x90] sm:$0xff] %vm346, %v1081
      %1112 = vst.msk [vmem:[#allocation2 + $0x98] sm:$0xff] %vm346, %v1082
      %1113 = vst.msk [vmem:[#allocation2 + $0xa0] sm:$0xff] %vm346, %v1083
      %1114 = vst.msk [vmem:[#allocation2 + $0xa8] sm:$0xff] %vm346, %v1084
      %1115 = vst.msk [vmem:[#allocation2 + $0xb0] sm:$0xff] %vm346, %v1085
      %1116 = vst.msk [vmem:[#allocation2 + $0xb8] sm:$0xff] %vm346, %v1086
      %1117 = vst.msk [vmem:[#allocation2 + $0xc0] sm:$0xff] %vm346, %v1087
      %1118 = vst.msk [vmem:[#allocation2 + $0xc8] sm:$0xff] %vm346, %v1088
      %1119 = vst.msk [vmem:[#allocation2 + $0xd0] sm:$0xff] %vm346, %v1089
      %1120 = vst.msk [vmem:[#allocation2 + $0xd8] sm:$0xff] %vm346, %v1090
      %1121 = vst.msk [vmem:[#allocation2 + $0xe0] sm:$0xff] %vm346, %v1091
      %1122 = vst.msk [vmem:[#allocation2 + $0xe8] sm:$0xff] %vm346, %v1092
      %v1123 = vld [vmem:[#allocation2] sm:$0xff]
      %v1124 = vld [vmem:[#allocation2 + $0x8] sm:$0xff]
      %v1125 = vld [vmem:[#allocation2 + $0x18] sm:$0xff]
      %v1126 = vld [vmem:[#allocation2 + $0x20] sm:$0xff]
      %v1127 = vld [vmem:[#allocation2 + $0x30] sm:$0xff]
      %v1128 = vld [vmem:[#allocation2 + $0x38] sm:$0xff]
      %v1129 = vld [vmem:[#allocation2 + $0x48] sm:$0xff]
      %v1130 = vld [vmem:[#allocation2 + $0x50] sm:$0xff]
      %v1131 = vld [vmem:[#allocation2 + $0x60] sm:$0xff]
      %v1132 = vld [vmem:[#allocation2 + $0x68] sm:$0xff]
      %v1133 = vld [vmem:[#allocation2 + $0x78] sm:$0xff]
      %v1134 = vld [vmem:[#allocation2 + $0x80] sm:$0xff]
      %v1135 = vld [vmem:[#allocation2 + $0x90] sm:$0xff]
      %v1136 = vld [vmem:[#allocation2 + $0x98] sm:$0xff]
      %v1137 = vld [vmem:[#allocation2 + $0xa8] sm:$0xff]
      %v1138 = vld [vmem:[#allocation2 + $0xb0] sm:$0xff]
      %v1139 = vld [vmem:[#allocation2 + $0x1] sm:$0xff]
      %v1140 = vld [vmem:[#allocation2 + $0x9] sm:$0xff]
      %v1141 = vld [vmem:[#allocation2 + $0x19] sm:$0xff]
      %v1142 = vld [vmem:[#allocation2 + $0x21] sm:$0xff]
      %v1143 = vld [vmem:[#allocation2 + $0x31] sm:$0xff]
      %v1144 = vld [vmem:[#allocation2 + $0x39] sm:$0xff]
      %v1145 = vld [vmem:[#allocation2 + $0x49] sm:$0xff]
      %v1146 = vld [vmem:[#allocation2 + $0x51] sm:$0xff]
      %v1147 = vld [vmem:[#allocation2 + $0x61] sm:$0xff]
      %v1148 = vld [vmem:[#allocation2 + $0x69] sm:$0xff]
      %v1149 = vld [vmem:[#allocation2 + $0x79] sm:$0xff]
      %v1150 = vld [vmem:[#allocation2 + $0x81] sm:$0xff]
      %v1151 = vld [vmem:[#allocation2 + $0x91] sm:$0xff]
      %v1152 = vld [vmem:[#allocation2 + $0x99] sm:$0xff]
      %v1153 = vld [vmem:[#allocation2 + $0xa9] sm:$0xff]
      %v1154 = vld [vmem:[#allocation2 + $0xb1] sm:$0xff]
      %v1155 = vld [vmem:[#allocation2 + $0x2] sm:$0xff]
      %v1156 = vld [vmem:[#allocation2 + $0xa] sm:$0xff]
      %v1157 = vld [vmem:[#allocation2 + $0x1a] sm:$0xff]
      %v1158 = vld [vmem:[#allocation2 + $0x22] sm:$0xff]
      %v1159 = vld [vmem:[#allocation2 + $0x32] sm:$0xff]
      %v1160 = vld [vmem:[#allocation2 + $0x3a] sm:$0xff]
      %v1161 = vld [vmem:[#allocation2 + $0x4a] sm:$0xff]
      %v1162 = vld [vmem:[#allocation2 + $0x52] sm:$0xff]
      %v1163 = vld [vmem:[#allocation2 + $0x62] sm:$0xff]
      %v1164 = vld [vmem:[#allocation2 + $0x6a] sm:$0xff]
      %v1165 = vld [vmem:[#allocation2 + $0x7a] sm:$0xff]
      %v1166 = vld [vmem:[#allocation2 + $0x82] sm:$0xff]
      %v1167 = vld [vmem:[#allocation2 + $0x92] sm:$0xff]
      %v1168 = vld [vmem:[#allocation2 + $0x9a] sm:$0xff]
      %v1169 = vld [vmem:[#allocation2 + $0xaa] sm:$0xff]
      %v1170 = vld [vmem:[#allocation2 + $0xb2] sm:$0xff]
      %s1171 = scalar_lea.vmem [#allocation2], 24
      %v1172 = vld [vmem:[%s1171] sm:$0xff]
      %v1173 = vld [vmem:[%s1171 + $0x8] sm:$0xff]
      %v1174 = vld [vmem:[%s1171 + $0x18] sm:$0xff]
      %v1175 = vld [vmem:[%s1171 + $0x20] sm:$0xff]
      %v1176 = vld [vmem:[%s1171 + $0x30] sm:$0xff]
      %v1177 = vld [vmem:[%s1171 + $0x38] sm:$0xff]
      %v1178 = vld [vmem:[%s1171 + $0x48] sm:$0xff]
      %v1179 = vld [vmem:[%s1171 + $0x50] sm:$0xff]
      %v1180 = vld [vmem:[%s1171 + $0x60] sm:$0xff]
      %v1181 = vld [vmem:[%s1171 + $0x68] sm:$0xff]
      %v1182 = vld [vmem:[%s1171 + $0x78] sm:$0xff]
      %v1183 = vld [vmem:[%s1171 + $0x80] sm:$0xff]
      %v1184 = vld [vmem:[%s1171 + $0x90] sm:$0xff]
      %v1185 = vld [vmem:[%s1171 + $0x98] sm:$0xff]
      %v1186 = vld [vmem:[%s1171 + $0xa8] sm:$0xff]
      %v1187 = vld [vmem:[%s1171 + $0xb0] sm:$0xff]
      %v1188 = vld [vmem:[%s1171 + $0x1] sm:$0xff]
      %v1189 = vld [vmem:[%s1171 + $0x9] sm:$0xff]
      %v1190 = vld [vmem:[%s1171 + $0x19] sm:$0xff]
      %v1191 = vld [vmem:[%s1171 + $0x21] sm:$0xff]
      %v1192 = vld [vmem:[%s1171 + $0x31] sm:$0xff]
      %v1193 = vld [vmem:[%s1171 + $0x39] sm:$0xff]
      %v1194 = vld [vmem:[%s1171 + $0x49] sm:$0xff]
      %v1195 = vld [vmem:[%s1171 + $0x51] sm:$0xff]
      %v1196 = vld [vmem:[%s1171 + $0x61] sm:$0xff]
      %v1197 = vld [vmem:[%s1171 + $0x69] sm:$0xff]
      %v1198 = vld [vmem:[%s1171 + $0x79] sm:$0xff]
      %v1199 = vld [vmem:[%s1171 + $0x81] sm:$0xff]
      %v1200 = vld [vmem:[%s1171 + $0x91] sm:$0xff]
      %v1201 = vld [vmem:[%s1171 + $0x99] sm:$0xff]
      %v1202 = vld [vmem:[%s1171 + $0xa9] sm:$0xff]
      %v1203 = vld [vmem:[%s1171 + $0xb1] sm:$0xff]
      %v1204 = vld [vmem:[%s1171 + $0x2] sm:$0xff]
      %v1205 = vld [vmem:[%s1171 + $0xa] sm:$0xff]
      %v1206 = vld [vmem:[%s1171 + $0x1a] sm:$0xff]
      %v1207 = vld [vmem:[%s1171 + $0x22] sm:$0xff]
      %v1208 = vld [vmem:[%s1171 + $0x32] sm:$0xff]
      %v1209 = vld [vmem:[%s1171 + $0x3a] sm:$0xff]
      %v1210 = vld [vmem:[%s1171 + $0x4a] sm:$0xff]
      %v1211 = vld [vmem:[%s1171 + $0x52] sm:$0xff]
      %v1212 = vld [vmem:[%s1171 + $0x62] sm:$0xff]
      %v1213 = vld [vmem:[%s1171 + $0x6a] sm:$0xff]
      %v1214 = vld [vmem:[%s1171 + $0x7a] sm:$0xff]
      %v1215 = vld [vmem:[%s1171 + $0x82] sm:$0xff]
      %v1216 = vld [vmem:[%s1171 + $0x92] sm:$0xff]
      %v1217 = vld [vmem:[%s1171 + $0x9a] sm:$0xff]
      %v1218 = vld [vmem:[%s1171 + $0xaa] sm:$0xff]
      %v1219 = vld [vmem:[%s1171 + $0xb2] sm:$0xff]
      %s1220 = scalar_lea.vmem [#allocation2], 48
      %v1221 = vld [vmem:[%s1220] sm:$0xff]
      %v1222 = vld [vmem:[%s1220 + $0x8] sm:$0xff]
      %v1223 = vld [vmem:[%s1220 + $0x18] sm:$0xff]
      %v1224 = vld [vmem:[%s1220 + $0x20] sm:$0xff]
      %v1225 = vld [vmem:[%s1220 + $0x30] sm:$0xff]
      %v1226 = vld [vmem:[%s1220 + $0x38] sm:$0xff]
      %v1227 = vld [vmem:[%s1220 + $0x48] sm:$0xff]
      %v1228 = vld [vmem:[%s1220 + $0x50] sm:$0xff]
      %v1229 = vld [vmem:[%s1220 + $0x60] sm:$0xff]
      %v1230 = vld [vmem:[%s1220 + $0x68] sm:$0xff]
      %v1231 = vld [vmem:[%s1220 + $0x78] sm:$0xff]
      %v1232 = vld [vmem:[%s1220 + $0x80] sm:$0xff]
      %v1233 = vld [vmem:[%s1220 + $0x90] sm:$0xff]
      %v1234 = vld [vmem:[%s1220 + $0x98] sm:$0xff]
      %v1235 = vld [vmem:[%s1220 + $0xa8] sm:$0xff]
      %v1236 = vld [vmem:[%s1220 + $0xb0] sm:$0xff]
      %v1237 = vld [vmem:[%s1220 + $0x1] sm:$0xff]
      %v1238 = vld [vmem:[%s1220 + $0x9] sm:$0xff]
      %v1239 = vld [vmem:[%s1220 + $0x19] sm:$0xff]
      %v1240 = vld [vmem:[%s1220 + $0x21] sm:$0xff]
      %v1241 = vld [vmem:[%s1220 + $0x31] sm:$0xff]
      %v1242 = vld [vmem:[%s1220 + $0x39] sm:$0xff]
      %v1243 = vld [vmem:[%s1220 + $0x49] sm:$0xff]
      %v1244 = vld [vmem:[%s1220 + $0x51] sm:$0xff]
      %v1245 = vld [vmem:[%s1220 + $0x61] sm:$0xff]
      %v1246 = vld [vmem:[%s1220 + $0x69] sm:$0xff]
      %v1247 = vld [vmem:[%s1220 + $0x79] sm:$0xff]
      %v1248 = vld [vmem:[%s1220 + $0x81] sm:$0xff]
      %v1249 = vld [vmem:[%s1220 + $0x91] sm:$0xff]
      %v1250 = vld [vmem:[%s1220 + $0x99] sm:$0xff]
      %v1251 = vld [vmem:[%s1220 + $0xa9] sm:$0xff]
      %v1252 = vld [vmem:[%s1220 + $0xb1] sm:$0xff]
      %v1253 = vld [vmem:[%s1220 + $0x2] sm:$0xff]
      %v1254 = vld [vmem:[%s1220 + $0xa] sm:$0xff]
      %v1255 = vld [vmem:[%s1220 + $0x1a] sm:$0xff]
      %v1256 = vld [vmem:[%s1220 + $0x22] sm:$0xff]
      %v1257 = vld [vmem:[%s1220 + $0x32] sm:$0xff]
      %v1258 = vld [vmem:[%s1220 + $0x3a] sm:$0xff]
      %v1259 = vld [vmem:[%s1220 + $0x4a] sm:$0xff]
      %v1260 = vld [vmem:[%s1220 + $0x52] sm:$0xff]
      %v1261 = vld [vmem:[%s1220 + $0x62] sm:$0xff]
      %v1262 = vld [vmem:[%s1220 + $0x6a] sm:$0xff]
      %v1263 = vld [vmem:[%s1220 + $0x7a] sm:$0xff]
      %v1264 = vld [vmem:[%s1220 + $0x82] sm:$0xff]
      %v1265 = vld [vmem:[%s1220 + $0x92] sm:$0xff]
      %v1266 = vld [vmem:[%s1220 + $0x9a] sm:$0xff]
      %v1267 = vld [vmem:[%s1220 + $0xaa] sm:$0xff]
      %v1268 = vld [vmem:[%s1220 + $0xb2] sm:$0xff]
      %1285 = vrot.lane.b32.xlu0 %v1139, 4
      %v1286 = vpop.permute.xlu0 %1285
      %1287 = vrot.lane.b32.xlu0 %v1140, 4
      %v1288 = vpop.permute.xlu0 %1287
      %1289 = vrot.lane.b32.xlu0 %v1141, 4
      %v1290 = vpop.permute.xlu0 %1289
      %1291 = vrot.lane.b32.xlu0 %v1142, 4
      %v1292 = vpop.permute.xlu0 %1291
      %1293 = vrot.lane.b32.xlu0 %v1143, 4
      %v1294 = vpop.permute.xlu0 %1293
      %1295 = vrot.lane.b32.xlu0 %v1144, 4
      %v1296 = vpop.permute.xlu0 %1295
      %1297 = vrot.lane.b32.xlu0 %v1145, 4
      %v1298 = vpop.permute.xlu0 %1297
      %1299 = vrot.lane.b32.xlu0 %v1146, 4
      %v1300 = vpop.permute.xlu0 %1299
      %1301 = vrot.lane.b32.xlu0 %v1147, 4
      %v1302 = vpop.permute.xlu0 %1301
      %1303 = vrot.lane.b32.xlu0 %v1148, 4
      %v1304 = vpop.permute.xlu0 %1303
      %1305 = vrot.lane.b32.xlu0 %v1149, 4
      %v1306 = vpop.permute.xlu0 %1305
      %1307 = vrot.lane.b32.xlu0 %v1150, 4
      %v1308 = vpop.permute.xlu0 %1307
      %1309 = vrot.lane.b32.xlu0 %v1151, 4
      %v1310 = vpop.permute.xlu0 %1309
      %1311 = vrot.lane.b32.xlu0 %v1152, 4
      %v1312 = vpop.permute.xlu0 %1311
      %1313 = vrot.lane.b32.xlu0 %v1153, 4
      %v1314 = vpop.permute.xlu0 %1313
      %1315 = vrot.lane.b32.xlu0 %v1154, 4
      %v1316 = vpop.permute.xlu0 %1315
      %1349 = vrot.lane.b32.xlu0 %v1155, 8
      %v1350 = vpop.permute.xlu0 %1349
      %1351 = vrot.lane.b32.xlu0 %v1156, 8
      %v1352 = vpop.permute.xlu0 %1351
      %1353 = vrot.lane.b32.xlu0 %v1157, 8
      %v1354 = vpop.permute.xlu0 %1353
      %1355 = vrot.lane.b32.xlu0 %v1158, 8
      %v1356 = vpop.permute.xlu0 %1355
      %1357 = vrot.lane.b32.xlu0 %v1159, 8
      %v1358 = vpop.permute.xlu0 %1357
      %1359 = vrot.lane.b32.xlu0 %v1160, 8
      %v1360 = vpop.permute.xlu0 %1359
      %1361 = vrot.lane.b32.xlu0 %v1161, 8
      %v1362 = vpop.permute.xlu0 %1361
      %1363 = vrot.lane.b32.xlu0 %v1162, 8
      %v1364 = vpop.permute.xlu0 %1363
      %1365 = vrot.lane.b32.xlu0 %v1163, 8
      %v1366 = vpop.permute.xlu0 %1365
      %1367 = vrot.lane.b32.xlu0 %v1164, 8
      %v1368 = vpop.permute.xlu0 %1367
      %1369 = vrot.lane.b32.xlu0 %v1165, 8
      %v1370 = vpop.permute.xlu0 %1369
      %1371 = vrot.lane.b32.xlu0 %v1166, 8
      %v1372 = vpop.permute.xlu0 %1371
      %1373 = vrot.lane.b32.xlu0 %v1167, 8
      %v1374 = vpop.permute.xlu0 %1373
      %1375 = vrot.lane.b32.xlu0 %v1168, 8
      %v1376 = vpop.permute.xlu0 %1375
      %1377 = vrot.lane.b32.xlu0 %v1169, 8
      %v1378 = vpop.permute.xlu0 %1377
      %1379 = vrot.lane.b32.xlu0 %v1170, 8
      %v1380 = vpop.permute.xlu0 %1379
      %1413 = vrot.lane.b32.xlu0 %v1172, 12
      %v1414 = vpop.permute.xlu0 %1413
      %1415 = vrot.lane.b32.xlu0 %v1173, 12
      %v1416 = vpop.permute.xlu0 %1415
      %1417 = vrot.lane.b32.xlu0 %v1174, 12
      %v1418 = vpop.permute.xlu0 %1417
      %1419 = vrot.lane.b32.xlu0 %v1175, 12
      %v1420 = vpop.permute.xlu0 %1419
      %1421 = vrot.lane.b32.xlu0 %v1176, 12
      %v1422 = vpop.permute.xlu0 %1421
      %1423 = vrot.lane.b32.xlu0 %v1177, 12
      %v1424 = vpop.permute.xlu0 %1423
      %1425 = vrot.lane.b32.xlu0 %v1178, 12
      %v1426 = vpop.permute.xlu0 %1425
      %1427 = vrot.lane.b32.xlu0 %v1179, 12
      %v1428 = vpop.permute.xlu0 %1427
      %1429 = vrot.lane.b32.xlu0 %v1180, 12
      %v1430 = vpop.permute.xlu0 %1429
      %1431 = vrot.lane.b32.xlu0 %v1181, 12
      %v1432 = vpop.permute.xlu0 %1431
      %1433 = vrot.lane.b32.xlu0 %v1182, 12
      %v1434 = vpop.permute.xlu0 %1433
      %1435 = vrot.lane.b32.xlu0 %v1183, 12
      %v1436 = vpop.permute.xlu0 %1435
      %1437 = vrot.lane.b32.xlu0 %v1184, 12
      %v1438 = vpop.permute.xlu0 %1437
      %1439 = vrot.lane.b32.xlu0 %v1185, 12
      %v1440 = vpop.permute.xlu0 %1439
      %1441 = vrot.lane.b32.xlu0 %v1186, 12
      %v1442 = vpop.permute.xlu0 %1441
      %1443 = vrot.lane.b32.xlu0 %v1187, 12
      %v1444 = vpop.permute.xlu0 %1443
      %1477 = vrot.lane.b32.xlu0 %v1188, 16
      %v1478 = vpop.permute.xlu0 %1477
      %1479 = vrot.lane.b32.xlu0 %v1189, 16
      %v1480 = vpop.permute.xlu0 %1479
      %1481 = vrot.lane.b32.xlu0 %v1190, 16
      %v1482 = vpop.permute.xlu0 %1481
      %1483 = vrot.lane.b32.xlu0 %v1191, 16
      %v1484 = vpop.permute.xlu0 %1483
      %1485 = vrot.lane.b32.xlu0 %v1192, 16
      %v1486 = vpop.permute.xlu0 %1485
      %1487 = vrot.lane.b32.xlu0 %v1193, 16
      %v1488 = vpop.permute.xlu0 %1487
      %1489 = vrot.lane.b32.xlu0 %v1194, 16
      %v1490 = vpop.permute.xlu0 %1489
      %1491 = vrot.lane.b32.xlu0 %v1195, 16
      %v1492 = vpop.permute.xlu0 %1491
      %1493 = vrot.lane.b32.xlu0 %v1196, 16
      %v1494 = vpop.permute.xlu0 %1493
      %1495 = vrot.lane.b32.xlu0 %v1197, 16
      %v1496 = vpop.permute.xlu0 %1495
      %1497 = vrot.lane.b32.xlu0 %v1198, 16
      %v1498 = vpop.permute.xlu0 %1497
      %1499 = vrot.lane.b32.xlu0 %v1199, 16
      %v1500 = vpop.permute.xlu0 %1499
      %1501 = vrot.lane.b32.xlu0 %v1200, 16
      %v1502 = vpop.permute.xlu0 %1501
      %1503 = vrot.lane.b32.xlu0 %v1201, 16
      %v1504 = vpop.permute.xlu0 %1503
      %1505 = vrot.lane.b32.xlu0 %v1202, 16
      %v1506 = vpop.permute.xlu0 %1505
      %1507 = vrot.lane.b32.xlu0 %v1203, 16
      %v1508 = vpop.permute.xlu0 %1507
      %1541 = vrot.lane.b32.xlu0 %v1204, 20
      %v1542 = vpop.permute.xlu0 %1541
      %1543 = vrot.lane.b32.xlu0 %v1205, 20
      %v1544 = vpop.permute.xlu0 %1543
      %1545 = vrot.lane.b32.xlu0 %v1206, 20
      %v1546 = vpop.permute.xlu0 %1545
      %1547 = vrot.lane.b32.xlu0 %v1207, 20
      %v1548 = vpop.permute.xlu0 %1547
      %1549 = vrot.lane.b32.xlu0 %v1208, 20
      %v1550 = vpop.permute.xlu0 %1549
      %1551 = vrot.lane.b32.xlu0 %v1209, 20
      %v1552 = vpop.permute.xlu0 %1551
      %1553 = vrot.lane.b32.xlu0 %v1210, 20
      %v1554 = vpop.permute.xlu0 %1553
      %1555 = vrot.lane.b32.xlu0 %v1211, 20
      %v1556 = vpop.permute.xlu0 %1555
      %1557 = vrot.lane.b32.xlu0 %v1212, 20
      %v1558 = vpop.permute.xlu0 %1557
      %1559 = vrot.lane.b32.xlu0 %v1213, 20
      %v1560 = vpop.permute.xlu0 %1559
      %1561 = vrot.lane.b32.xlu0 %v1214, 20
      %v1562 = vpop.permute.xlu0 %1561
      %1563 = vrot.lane.b32.xlu0 %v1215, 20
      %v1564 = vpop.permute.xlu0 %1563
      %1565 = vrot.lane.b32.xlu0 %v1216, 20
      %v1566 = vpop.permute.xlu0 %1565
      %1567 = vrot.lane.b32.xlu0 %v1217, 20
      %v1568 = vpop.permute.xlu0 %1567
      %1569 = vrot.lane.b32.xlu0 %v1218, 20
      %v1570 = vpop.permute.xlu0 %1569
      %1571 = vrot.lane.b32.xlu0 %v1219, 20
      %v1572 = vpop.permute.xlu0 %1571
      %1605 = vrot.lane.b32.xlu0 %v1221, 24
      %v1606 = vpop.permute.xlu0 %1605
      %1607 = vrot.lane.b32.xlu0 %v1222, 24
      %v1608 = vpop.permute.xlu0 %1607
      %1609 = vrot.lane.b32.xlu0 %v1223, 24
      %v1610 = vpop.permute.xlu0 %1609
      %1611 = vrot.lane.b32.xlu0 %v1224, 24
      %v1612 = vpop.permute.xlu0 %1611
      %1613 = vrot.lane.b32.xlu0 %v1225, 24
      %v1614 = vpop.permute.xlu0 %1613
      %1615 = vrot.lane.b32.xlu0 %v1226, 24
      %v1616 = vpop.permute.xlu0 %1615
      %1617 = vrot.lane.b32.xlu0 %v1227, 24
      %v1618 = vpop.permute.xlu0 %1617
      %1619 = vrot.lane.b32.xlu0 %v1228, 24
      %v1620 = vpop.permute.xlu0 %1619
      %1621 = vrot.lane.b32.xlu0 %v1229, 24
      %v1622 = vpop.permute.xlu0 %1621
      %1623 = vrot.lane.b32.xlu0 %v1230, 24
      %v1624 = vpop.permute.xlu0 %1623
      %1625 = vrot.lane.b32.xlu0 %v1231, 24
      %v1626 = vpop.permute.xlu0 %1625
      %1627 = vrot.lane.b32.xlu0 %v1232, 24
      %v1628 = vpop.permute.xlu0 %1627
      %1629 = vrot.lane.b32.xlu0 %v1233, 24
      %v1630 = vpop.permute.xlu0 %1629
      %1631 = vrot.lane.b32.xlu0 %v1234, 24
      %v1632 = vpop.permute.xlu0 %1631
      %1633 = vrot.lane.b32.xlu0 %v1235, 24
      %v1634 = vpop.permute.xlu0 %1633
      %1635 = vrot.lane.b32.xlu0 %v1236, 24
      %v1636 = vpop.permute.xlu0 %1635
      %1669 = vrot.lane.b32.xlu0 %v1237, 28
      %v1670 = vpop.permute.xlu0 %1669
      %1671 = vrot.lane.b32.xlu0 %v1238, 28
      %v1672 = vpop.permute.xlu0 %1671
      %1673 = vrot.lane.b32.xlu0 %v1239, 28
      %v1674 = vpop.permute.xlu0 %1673
      %1675 = vrot.lane.b32.xlu0 %v1240, 28
      %v1676 = vpop.permute.xlu0 %1675
      %1677 = vrot.lane.b32.xlu0 %v1241, 28
      %v1678 = vpop.permute.xlu0 %1677
      %1679 = vrot.lane.b32.xlu0 %v1242, 28
      %v1680 = vpop.permute.xlu0 %1679
      %1681 = vrot.lane.b32.xlu0 %v1243, 28
      %v1682 = vpop.permute.xlu0 %1681
      %1683 = vrot.lane.b32.xlu0 %v1244, 28
      %v1684 = vpop.permute.xlu0 %1683
      %1685 = vrot.lane.b32.xlu0 %v1245, 28
      %v1686 = vpop.permute.xlu0 %1685
      %1687 = vrot.lane.b32.xlu0 %v1246, 28
      %v1688 = vpop.permute.xlu0 %1687
      %1689 = vrot.lane.b32.xlu0 %v1247, 28
      %v1690 = vpop.permute.xlu0 %1689
      %1691 = vrot.lane.b32.xlu0 %v1248, 28
      %v1692 = vpop.permute.xlu0 %1691
      %1693 = vrot.lane.b32.xlu0 %v1249, 28
      %v1694 = vpop.permute.xlu0 %1693
      %1695 = vrot.lane.b32.xlu0 %v1250, 28
      %v1696 = vpop.permute.xlu0 %1695
      %1697 = vrot.lane.b32.xlu0 %v1251, 28
      %v1698 = vpop.permute.xlu0 %1697
      %1699 = vrot.lane.b32.xlu0 %v1252, 28
      %v1700 = vpop.permute.xlu0 %1699
      %1733 = vrot.lane.b32.xlu0 %v1253, 32
      %v1734 = vpop.permute.xlu0 %1733
      %1735 = vrot.lane.b32.xlu0 %v1254, 32
      %v1736 = vpop.permute.xlu0 %1735
      %1737 = vrot.lane.b32.xlu0 %v1255, 32
      %v1738 = vpop.permute.xlu0 %1737
      %1739 = vrot.lane.b32.xlu0 %v1256, 32
      %v1740 = vpop.permute.xlu0 %1739
      %1741 = vrot.lane.b32.xlu0 %v1257, 32
      %v1742 = vpop.permute.xlu0 %1741
      %1743 = vrot.lane.b32.xlu0 %v1258, 32
      %v1744 = vpop.permute.xlu0 %1743
      %1745 = vrot.lane.b32.xlu0 %v1259, 32
      %v1746 = vpop.permute.xlu0 %1745
      %1747 = vrot.lane.b32.xlu0 %v1260, 32
      %v1748 = vpop.permute.xlu0 %1747
      %1749 = vrot.lane.b32.xlu0 %v1261, 32
      %v1750 = vpop.permute.xlu0 %1749
      %1751 = vrot.lane.b32.xlu0 %v1262, 32
      %v1752 = vpop.permute.xlu0 %1751
      %1753 = vrot.lane.b32.xlu0 %v1263, 32
      %v1754 = vpop.permute.xlu0 %1753
      %1755 = vrot.lane.b32.xlu0 %v1264, 32
      %v1756 = vpop.permute.xlu0 %1755
      %1757 = vrot.lane.b32.xlu0 %v1265, 32
      %v1758 = vpop.permute.xlu0 %1757
      %1759 = vrot.lane.b32.xlu0 %v1266, 32
      %v1760 = vpop.permute.xlu0 %1759
      %1761 = vrot.lane.b32.xlu0 %v1267, 32
      %v1762 = vpop.permute.xlu0 %1761
      %1763 = vrot.lane.b32.xlu0 %v1268, 32
      %v1764 = vpop.permute.xlu0 %1763
      %v1781 = vsel %vm346, %v1123, %v1286
      %v1782 = vsel %vm346, %v1124, %v1288
      %v1783 = vsel %vm346, %v1125, %v1290
      %v1784 = vsel %vm346, %v1126, %v1292
      %v1785 = vsel %vm346, %v1127, %v1294
      %v1786 = vsel %vm346, %v1128, %v1296
      %v1787 = vsel %vm346, %v1129, %v1298
      %v1788 = vsel %vm346, %v1130, %v1300
      %v1789 = vsel %vm346, %v1131, %v1302
      %v1790 = vsel %vm346, %v1132, %v1304
      %v1791 = vsel %vm346, %v1133, %v1306
      %v1792 = vsel %vm346, %v1134, %v1308
      %v1793 = vsel %vm346, %v1135, %v1310
      %v1794 = vsel %vm346, %v1136, %v1312
      %v1795 = vsel %vm346, %v1137, %v1314
      %v1796 = vsel %vm346, %v1138, %v1316
      %vm1797 = vcmask 64512
      %v1798 = vsel %vm1797, %v1781, %v1350
      %v1799 = vsel %vm1797, %v1782, %v1352
      %v1800 = vsel %vm1797, %v1783, %v1354
      %v1801 = vsel %vm1797, %v1784, %v1356
      %v1802 = vsel %vm1797, %v1785, %v1358
      %v1803 = vsel %vm1797, %v1786, %v1360
      %v1804 = vsel %vm1797, %v1787, %v1362
      %v1805 = vsel %vm1797, %v1788, %v1364
      %v1806 = vsel %vm1797, %v1789, %v1366
      %v1807 = vsel %vm1797, %v1790, %v1368
      %v1808 = vsel %vm1797, %v1791, %v1370
      %v1809 = vsel %vm1797, %v1792, %v1372
      %v1810 = vsel %vm1797, %v1793, %v1374
      %v1811 = vsel %vm1797, %v1794, %v1376
      %v1812 = vsel %vm1797, %v1795, %v1378
      %v1813 = vsel %vm1797, %v1796, %v1380
      %vm1814 = vcmask 97280
      %v1815 = vsel %vm1814, %v1798, %v1414
      %v1816 = vsel %vm1814, %v1799, %v1416
      %v1817 = vsel %vm1814, %v1800, %v1418
      %v1818 = vsel %vm1814, %v1801, %v1420
      %v1819 = vsel %vm1814, %v1802, %v1422
      %v1820 = vsel %vm1814, %v1803, %v1424
      %v1821 = vsel %vm1814, %v1804, %v1426
      %v1822 = vsel %vm1814, %v1805, %v1428
      %v1823 = vsel %vm1814, %v1806, %v1430
      %v1824 = vsel %vm1814, %v1807, %v1432
      %v1825 = vsel %vm1814, %v1808, %v1434
      %v1826 = vsel %vm1814, %v1809, %v1436
      %v1827 = vsel %vm1814, %v1810, %v1438
      %v1828 = vsel %vm1814, %v1811, %v1440
      %v1829 = vsel %vm1814, %v1812, %v1442
      %v1830 = vsel %vm1814, %v1813, %v1444
      %vm1831 = vcmask 130048
      %v1832 = vsel %vm1831, %v1815, %v1478
      %v1833 = vsel %vm1831, %v1816, %v1480
      %v1834 = vsel %vm1831, %v1817, %v1482
      %v1835 = vsel %vm1831, %v1818, %v1484
      %v1836 = vsel %vm1831, %v1819, %v1486
      %v1837 = vsel %vm1831, %v1820, %v1488
      %v1838 = vsel %vm1831, %v1821, %v1490
      %v1839 = vsel %vm1831, %v1822, %v1492
      %v1840 = vsel %vm1831, %v1823, %v1494
      %v1841 = vsel %vm1831, %v1824, %v1496
      %v1842 = vsel %vm1831, %v1825, %v1498
      %v1843 = vsel %vm1831, %v1826, %v1500
      %v1844 = vsel %vm1831, %v1827, %v1502
      %v1845 = vsel %vm1831, %v1828, %v1504
      %v1846 = vsel %vm1831, %v1829, %v1506
      %v1847 = vsel %vm1831, %v1830, %v1508
      %vm1848 = vcmask 162816
      %v1849 = vsel %vm1848, %v1832, %v1542
      %v1850 = vsel %vm1848, %v1833, %v1544
      %v1851 = vsel %vm1848, %v1834, %v1546
      %v1852 = vsel %vm1848, %v1835, %v1548
      %v1853 = vsel %vm1848, %v1836, %v1550
      %v1854 = vsel %vm1848, %v1837, %v1552
      %v1855 = vsel %vm1848, %v1838, %v1554
      %v1856 = vsel %vm1848, %v1839, %v1556
      %v1857 = vsel %vm1848, %v1840, %v1558
      %v1858 = vsel %vm1848, %v1841, %v1560
      %v1859 = vsel %vm1848, %v1842, %v1562
      %v1860 = vsel %vm1848, %v1843, %v1564
      %v1861 = vsel %vm1848, %v1844, %v1566
      %v1862 = vsel %vm1848, %v1845, %v1568
      %v1863 = vsel %vm1848, %v1846, %v1570
      %v1864 = vsel %vm1848, %v1847, %v1572
      %vm1865 = vcmask 195584
      %v1866 = vsel %vm1865, %v1849, %v1606
      %v1867 = vsel %vm1865, %v1850, %v1608
      %v1868 = vsel %vm1865, %v1851, %v1610
      %v1869 = vsel %vm1865, %v1852, %v1612
      %v1870 = vsel %vm1865, %v1853, %v1614
      %v1871 = vsel %vm1865, %v1854, %v1616
      %v1872 = vsel %vm1865, %v1855, %v1618
      %v1873 = vsel %vm1865, %v1856, %v1620
      %v1874 = vsel %vm1865, %v1857, %v1622
      %v1875 = vsel %vm1865, %v1858, %v1624
      %v1876 = vsel %vm1865, %v1859, %v1626
      %v1877 = vsel %vm1865, %v1860, %v1628
      %v1878 = vsel %vm1865, %v1861, %v1630
      %v1879 = vsel %vm1865, %v1862, %v1632
      %v1880 = vsel %vm1865, %v1863, %v1634
      %v1881 = vsel %vm1865, %v1864, %v1636
      %vm1882 = vcmask 228352
      %v1883 = vsel %vm1882, %v1866, %v1670
      %v1884 = vsel %vm1882, %v1867, %v1672
      %v1885 = vsel %vm1882, %v1868, %v1674
      %v1886 = vsel %vm1882, %v1869, %v1676
      %v1887 = vsel %vm1882, %v1870, %v1678
      %v1888 = vsel %vm1882, %v1871, %v1680
      %v1889 = vsel %vm1882, %v1872, %v1682
      %v1890 = vsel %vm1882, %v1873, %v1684
      %v1891 = vsel %vm1882, %v1874, %v1686
      %v1892 = vsel %vm1882, %v1875, %v1688
      %v1893 = vsel %vm1882, %v1876, %v1690
      %v1894 = vsel %vm1882, %v1877, %v1692
      %v1895 = vsel %vm1882, %v1878, %v1694
      %v1896 = vsel %vm1882, %v1879, %v1696
      %v1897 = vsel %vm1882, %v1880, %v1698
      %v1898 = vsel %vm1882, %v1881, %v1700
      %vm1899 = vcmask 261120
      %v1900 = vsel %vm1899, %v1883, %v1734
      %v1901 = vsel %vm1899, %v1884, %v1736
      %v1902 = vsel %vm1899, %v1885, %v1738
      %v1903 = vsel %vm1899, %v1886, %v1740
      %v1904 = vsel %vm1899, %v1887, %v1742
      %v1905 = vsel %vm1899, %v1888, %v1744
      %v1906 = vsel %vm1899, %v1889, %v1746
      %v1907 = vsel %vm1899, %v1890, %v1748
      %v1908 = vsel %vm1899, %v1891, %v1750
      %v1909 = vsel %vm1899, %v1892, %v1752
      %v1910 = vsel %vm1899, %v1893, %v1754
      %v1911 = vsel %vm1899, %v1894, %v1756
      %v1912 = vsel %vm1899, %v1895, %v1758
      %v1913 = vsel %vm1899, %v1896, %v1760
      %v1914 = vsel %vm1899, %v1897, %v1762
      %v1915 = vsel %vm1899, %v1898, %v1764
      %v1916 = vld [vmem:[%s4] sm:$0xff]
      %v1917 = vld [vmem:[%s4 + $0x8] sm:$0xff]
      %v1918 = vld [vmem:[%s4 + $0x10] sm:$0xff]
      %v1919 = vld [vmem:[%s4 + $0x18] sm:$0xff]
      %v1920 = vld [vmem:[%s4 + $0x20] sm:$0xf]
      %vm1921 = vcmask 293888
      %v1923 = vsel %vm1921, %v1900, 0
      %v1926 = vsel %vm1921, %v1901, 0
      %v1929 = vsel %vm1921, %v1902, 0
      %v1932 = vsel %vm1921, %v1903, 0
      %v1935 = vsel %vm1921, %v1904, 0
      %v1938 = vsel %vm1921, %v1905, 0
      %v1941 = vsel %vm1921, %v1906, 0
      %v1944 = vsel %vm1921, %v1907, 0
      %v1947 = vsel %vm1921, %v1908, 0
      %v1950 = vsel %vm1921, %v1909, 0
      %v1953 = vsel %vm1921, %v1910, 0
      %v1956 = vsel %vm1921, %v1911, 0
      %v1959 = vsel %vm1921, %v1912, 0
      %v1962 = vsel %vm1921, %v1913, 0
      %v1965 = vsel %vm1921, %v1914, 0
      %v1968 = vsel %vm1921, %v1915, 0
      %v1971 = vsel %vm437, %v1920, 0
      %1973 = vmatprep.subr.mxu0 0.0
      %1974 = vmatpush1.msra.mxu0 %v1916
      %1975 = vmatprep.subr.mxu0 0.0
      %1976 = vmatpush1.msra.mxu0 %v1917
      %1977 = vmatprep.subr.mxu0 0.0
      %1978 = vmatpush1.msra.mxu0 %v1918
      %1979 = vmatprep.subr.mxu0 0.0
      %1980 = vmatpush1.msra.mxu0 %v1919
      %1981 = vmatprep.subr.mxu0 0.0
      %1982 = vmatpush1.msra.mxu0 %v1971
      %1983 = vmatprep.subr.mxu0 0.0
      %1984 = vmatpush1.msra.mxu0 0.0
      %1985 = vmatprep.subr.mxu0 0.0
      %1986 = vmatpush1.msra.mxu0 0.0
      %1987 = vmatprep.subr.mxu0 0.0
      %1988 = vmatpush1.msra.mxu0 0.0
      %1989 = vmatprep.subr.mxu0 0.0
      %1990 = vmatpush1.msra.mxu0 0.0
      %1991 = vmatprep.subr.mxu0 0.0
      %1992 = vmatpush1.msra.mxu0 0.0
      %1993 = vmatprep.subr.mxu0 0.0
      %1994 = vmatpush1.msra.mxu0 0.0
      %1995 = vmatprep.subr.mxu0 0.0
      %1996 = vmatpush1.msra.mxu0 0.0
      %1997 = vmatprep.subr.mxu0 0.0
      %1998 = vmatpush1.msra.mxu0 0.0
      %1999 = vmatprep.subr.mxu0 0.0
      %2000 = vmatpush1.msra.mxu0 0.0
      %2001 = vmatprep.subr.mxu0 0.0
      %2002 = vmatpush1.msra.mxu0 0.0
      %2003 = vmatprep.subr.mxu0 0.0
      %2004 = vmatpush1.msra.mxu0 0.0
      %2005 = vmatprep.subr.mxu0 0.0
      %2006 = vmatpush1.msra.mxu0 0.0
      %2007 = vmatprep.subr.mxu0 0.0
      %2008 = vmatpush1.msra.mxu0 0.0
      %2009 = vmatprep.subr.mxu0 0.0
      %2010 = vmatpush1.msra.mxu0 0.0
      %2011 = vmatprep.subr.mxu0 0.0
      %2012 = vmatpush1.msra.mxu0 0.0
      %2013 = vmatprep.subr.mxu0 0.0
      %2014 = vmatpush1.msra.mxu0 0.0
      %2015 = vmatprep.subr.mxu0 0.0
      %2016 = vmatpush1.msra.mxu0 0.0
      %2017 = vmatprep.subr.mxu0 0.0
      %2018 = vmatpush1.msra.mxu0 0.0
      %2019 = vmatprep.subr.mxu0 0.0
      %2020 = vmatpush1.msra.mxu0 0.0
      %2021 = vmatprep.subr.mxu0 0.0
      %2022 = vmatpush1.msra.mxu0 0.0
      %2023 = vmatprep.subr.mxu0 0.0
      %2024 = vmatpush1.msra.mxu0 0.0
      %2025 = vmatprep.subr.mxu0 0.0
      %2026 = vmatpush1.msra.mxu0 0.0
      %2027 = vmatprep.subr.mxu0 0.0
      %2028 = vmatpush1.msra.mxu0 0.0
      %2029 = vmatprep.subr.mxu0 0.0
      %2030 = vmatpush1.msra.mxu0 0.0
      %2031 = vmatprep.subr.mxu0 0.0
      %2032 = vmatpush1.msra.mxu0 0.0
      %2033 = vmatprep.subr.mxu0 0.0
      %2034 = vmatpush1.msra.mxu0 0.0
      %2035 = vmatprep.subr.mxu0 0.0
      %2036 = vmatpush1.msra.mxu0 0.0
      %2037 = vmatprep.mubr.f32.mxu0 0.0
      %2038 = vmatmul.mubr.f32.gmra.mrb[0].mxu0 %v1923
      %v2039 = vpop.f32.mrb[0].mxu0
      %v2040 = vadd.f32 0.0, %v2039
      %v2041 = vpop.f32.mrb[0].mxu0
      %2042 = vmatprep.mubr.f32.mxu0 0.0
      %2043 = vmatmul.mubr.f32.gmra.mrb[0].mxu0 %v1926
      %v2044 = vpop.f32.mrb[0].mxu0
      %v2045 = vadd.f32 0.0, %v2044
      %v2046 = vpop.f32.mrb[0].mxu0
      %2047 = vmatprep.mubr.f32.mxu0 0.0
      %2048 = vmatmul.mubr.f32.gmra.mrb[0].mxu0 %v1929
      %v2049 = vpop.f32.mrb[0].mxu0
      %v2050 = vadd.f32 0.0, %v2049
      %v2051 = vpop.f32.mrb[0].mxu0
      %2052 = vmatprep.mubr.f32.mxu0 0.0
      %2053 = vmatmul.mubr.f32.gmra.mrb[0].mxu0 %v1932
      %v2054 = vpop.f32.mrb[0].mxu0
      %v2055 = vadd.f32 0.0, %v2054
      %v2056 = vpop.f32.mrb[0].mxu0
      %2057 = vmatprep.mubr.f32.mxu0 0.0
      %2058 = vmatmul.mubr.f32.gmra.mrb[0].mxu0 %v1935
      %v2059 = vpop.f32.mrb[0].mxu0
      %v2060 = vadd.f32 0.0, %v2059
      %v2061 = vpop.f32.mrb[0].mxu0
      %2062 = vmatprep.mubr.f32.mxu0 0.0
      %2063 = vmatmul.mubr.f32.gmra.mrb[0].mxu0 %v1938
      %v2064 = vpop.f32.mrb[0].mxu0
      %v2065 = vadd.f32 0.0, %v2064
      %v2066 = vpop.f32.mrb[0].mxu0
      %2067 = vmatprep.mubr.f32.mxu0 0.0
      %2068 = vmatmul.mubr.f32.gmra.mrb[0].mxu0 %v1941
      %v2069 = vpop.f32.mrb[0].mxu0
      %v2070 = vadd.f32 0.0, %v2069
      %v2071 = vpop.f32.mrb[0].mxu0
      %2072 = vmatprep.mubr.f32.mxu0 0.0
      %2073 = vmatmul.mubr.f32.gmra.mrb[0].mxu0 %v1944
      %v2074 = vpop.f32.mrb[0].mxu0
      %v2075 = vadd.f32 0.0, %v2074
      %v2076 = vpop.f32.mrb[0].mxu0
      %2077 = vmatprep.mubr.f32.mxu0 0.0
      %2078 = vmatmul.mubr.f32.gmra.mrb[0].mxu0 %v1947
      %v2079 = vpop.f32.mrb[0].mxu0
      %v2080 = vadd.f32 0.0, %v2079
      %v2081 = vpop.f32.mrb[0].mxu0
      %2082 = vmatprep.mubr.f32.mxu0 0.0
      %2083 = vmatmul.mubr.f32.gmra.mrb[0].mxu0 %v1950
      %v2084 = vpop.f32.mrb[0].mxu0
      %v2085 = vadd.f32 0.0, %v2084
      %v2086 = vpop.f32.mrb[0].mxu0
      %2087 = vmatprep.mubr.f32.mxu0 0.0
      %2088 = vmatmul.mubr.f32.gmra.mrb[0].mxu0 %v1953
      %v2089 = vpop.f32.mrb[0].mxu0
      %v2090 = vadd.f32 0.0, %v2089
      %v2091 = vpop.f32.mrb[0].mxu0
      %2092 = vmatprep.mubr.f32.mxu0 0.0
      %2093 = vmatmul.mubr.f32.gmra.mrb[0].mxu0 %v1956
      %v2094 = vpop.f32.mrb[0].mxu0
      %v2095 = vadd.f32 0.0, %v2094
      %v2096 = vpop.f32.mrb[0].mxu0
      %2097 = vmatprep.mubr.f32.mxu0 0.0
      %2098 = vmatmul.mubr.f32.gmra.mrb[0].mxu0 %v1959
      %v2099 = vpop.f32.mrb[0].mxu0
      %v2100 = vadd.f32 0.0, %v2099
      %v2101 = vpop.f32.mrb[0].mxu0
      %2102 = vmatprep.mubr.f32.mxu0 0.0
      %2103 = vmatmul.mubr.f32.gmra.mrb[0].mxu0 %v1962
      %v2104 = vpop.f32.mrb[0].mxu0
      %v2105 = vadd.f32 0.0, %v2104
      %v2106 = vpop.f32.mrb[0].mxu0
      %2107 = vmatprep.mubr.f32.mxu0 0.0
      %2108 = vmatmul.mubr.f32.gmra.mrb[0].mxu0 %v1965
      %v2109 = vpop.f32.mrb[0].mxu0
      %v2110 = vadd.f32 0.0, %v2109
      %v2111 = vpop.f32.mrb[0].mxu0
      %2112 = vmatprep.mubr.f32.mxu0 0.0
      %2113 = vmatmul.mubr.f32.gmra.mrb[0].mxu0 %v1968
      %v2114 = vpop.f32.mrb[0].mxu0
      %v2115 = vadd.f32 0.0, %v2114
      %v2116 = vpop.f32.mrb[0].mxu0
      %2117 = vdwg.mxu0
      %v2118 = vld [vmem:[%s5] sm:$0x1]
      %v2120 = vlaneseq
      %v2121 = vshrl.u32 %v2120, 7
      %v2122 = vsub.s32 0, %v2121
      %v2123 = vrot.slane %v2118, %v2122
      %v2125 = vmul.f32 %v2040, %v2123
      %v2126 = vmul.f32 %v2045, %v2123
      %v2127 = vmul.f32 %v2050, %v2123
      %v2128 = vmul.f32 %v2055, %v2123
      %v2129 = vmul.f32 %v2060, %v2123
      %v2130 = vmul.f32 %v2065, %v2123
      %v2131 = vmul.f32 %v2070, %v2123
      %v2132 = vmul.f32 %v2075, %v2123
      %v2133 = vmul.f32 %v2080, %v2123
      %v2134 = vmul.f32 %v2085, %v2123
      %v2135 = vmul.f32 %v2090, %v2123
      %v2136 = vmul.f32 %v2095, %v2123
      %v2137 = vmul.f32 %v2100, %v2123
      %v2138 = vmul.f32 %v2105, %v2123
      %v2139 = vmul.f32 %v2110, %v2123
      %v2140 = vmul.f32 %v2115, %v2123
      %v2141 = vld [vmem:[%s6] sm:$0x1]
      %v2143 = vlaneseq
      %v2144 = vshrl.u32 %v2143, 7
      %v2145 = vsub.s32 0, %v2144
      %v2146 = vrot.slane %v2141, %v2145
      %v2148 = vadd.f32 %v2125, %v2146
      %v2149 = vadd.f32 %v2126, %v2146
      %v2150 = vadd.f32 %v2127, %v2146
      %v2151 = vadd.f32 %v2128, %v2146
      %v2152 = vadd.f32 %v2129, %v2146
      %v2153 = vadd.f32 %v2130, %v2146
      %v2154 = vadd.f32 %v2131, %v2146
      %v2155 = vadd.f32 %v2132, %v2146
      %v2156 = vadd.f32 %v2133, %v2146
      %v2157 = vadd.f32 %v2134, %v2146
      %v2158 = vadd.f32 %v2135, %v2146
      %v2159 = vadd.f32 %v2136, %v2146
      %v2160 = vadd.f32 %v2137, %v2146
      %v2161 = vadd.f32 %v2138, %v2146
      %v2162 = vadd.f32 %v2139, %v2146
      %v2163 = vadd.f32 %v2140, %v2146
      %v2164 = vmin.f32 %v2148, 20.0
      %v2165 = vmin.f32 %v2149, 20.0
      %v2166 = vmin.f32 %v2150, 20.0
      %v2167 = vmin.f32 %v2151, 20.0
      %v2168 = vmin.f32 %v2152, 20.0
      %v2169 = vmin.f32 %v2153, 20.0
      %v2170 = vmin.f32 %v2154, 20.0
      %v2171 = vmin.f32 %v2155, 20.0
      %v2172 = vmin.f32 %v2156, 20.0
      %v2173 = vmin.f32 %v2157, 20.0
      %v2174 = vmin.f32 %v2158, 20.0
      %v2175 = vmin.f32 %v2159, 20.0
      %v2176 = vmin.f32 %v2160, 20.0
      %v2177 = vmin.f32 %v2161, 20.0
      %v2178 = vmin.f32 %v2162, 20.0
      %v2179 = vmin.f32 %v2163, 20.0
      %v2180 = vmul.f32 %v2164, 1.442695
      %v2181 = vpow.pop %v2180
      %v2182 = vmul.f32 %v2165, 1.442695
      %v2183 = vpow.pop %v2182
      %v2184 = vmul.f32 %v2166, 1.442695
      %v2185 = vpow.pop %v2184
      %v2186 = vmul.f32 %v2167, 1.442695
      %v2187 = vpow.pop %v2186
      %v2188 = vmul.f32 %v2168, 1.442695
      %v2189 = vpow.pop %v2188
      %v2190 = vmul.f32 %v2169, 1.442695
      %v2191 = vpow.pop %v2190
      %v2192 = vmul.f32 %v2170, 1.442695
      %v2193 = vpow.pop %v2192
      %v2194 = vmul.f32 %v2171, 1.442695
      %v2195 = vpow.pop %v2194
      %v2196 = vmul.f32 %v2172, 1.442695
      %v2197 = vpow.pop %v2196
      %v2198 = vmul.f32 %v2173, 1.442695
      %v2199 = vpow.pop %v2198
      %v2200 = vmul.f32 %v2174, 1.442695
      %v2201 = vpow.pop %v2200
      %v2202 = vmul.f32 %v2175, 1.442695
      %v2203 = vpow.pop %v2202
      %v2204 = vmul.f32 %v2176, 1.442695
      %v2205 = vpow.pop %v2204
      %v2206 = vmul.f32 %v2177, 1.442695
      %v2207 = vpow.pop %v2206
      %v2208 = vmul.f32 %v2178, 1.442695
      %v2209 = vpow.pop %v2208
      %v2210 = vmul.f32 %v2179, 1.442695
      %v2211 = vpow.pop %v2210
      %v2212 = vadd.f32 %v2181, 1.0
      %v2213 = vadd.f32 %v2183, 1.0
      %v2214 = vadd.f32 %v2185, 1.0
      %v2215 = vadd.f32 %v2187, 1.0
      %v2216 = vadd.f32 %v2189, 1.0
      %v2217 = vadd.f32 %v2191, 1.0
      %v2218 = vadd.f32 %v2193, 1.0
      %v2219 = vadd.f32 %v2195, 1.0
      %v2220 = vadd.f32 %v2197, 1.0
      %v2221 = vadd.f32 %v2199, 1.0
      %v2222 = vadd.f32 %v2201, 1.0
      %v2223 = vadd.f32 %v2203, 1.0
      %v2224 = vadd.f32 %v2205, 1.0
      %v2225 = vadd.f32 %v2207, 1.0
      %v2226 = vadd.f32 %v2209, 1.0
      %v2227 = vadd.f32 %v2211, 1.0
      %v2228 = vmul.f32 %v2212, %v2212
      %v2229 = vmul.f32 %v2213, %v2213
      %v2230 = vmul.f32 %v2214, %v2214
      %v2231 = vmul.f32 %v2215, %v2215
      %v2232 = vmul.f32 %v2216, %v2216
      %v2233 = vmul.f32 %v2217, %v2217
      %v2234 = vmul.f32 %v2218, %v2218
      %v2235 = vmul.f32 %v2219, %v2219
      %v2236 = vmul.f32 %v2220, %v2220
      %v2237 = vmul.f32 %v2221, %v2221
      %v2238 = vmul.f32 %v2222, %v2222
      %v2239 = vmul.f32 %v2223, %v2223
      %v2240 = vmul.f32 %v2224, %v2224
      %v2241 = vmul.f32 %v2225, %v2225
      %v2242 = vmul.f32 %v2226, %v2226
      %v2243 = vmul.f32 %v2227, %v2227
      %v2244 = vsub.f32 %v2228, 1.0
      %v2245 = vsub.f32 %v2229, 1.0
      %v2246 = vsub.f32 %v2230, 1.0
      %v2247 = vsub.f32 %v2231, 1.0
      %v2248 = vsub.f32 %v2232, 1.0
      %v2249 = vsub.f32 %v2233, 1.0
      %v2250 = vsub.f32 %v2234, 1.0
      %v2251 = vsub.f32 %v2235, 1.0
      %v2252 = vsub.f32 %v2236, 1.0
      %v2253 = vsub.f32 %v2237, 1.0
      %v2254 = vsub.f32 %v2238, 1.0
      %v2255 = vsub.f32 %v2239, 1.0
      %v2256 = vsub.f32 %v2240, 1.0
      %v2257 = vsub.f32 %v2241, 1.0
      %v2258 = vsub.f32 %v2242, 1.0
      %v2259 = vsub.f32 %v2243, 1.0
      %v2260 = vadd.f32 %v2228, 1.0
      %v2261 = vadd.f32 %v2229, 1.0
      %v2262 = vadd.f32 %v2230, 1.0
      %v2263 = vadd.f32 %v2231, 1.0
      %v2264 = vadd.f32 %v2232, 1.0
      %v2265 = vadd.f32 %v2233, 1.0
      %v2266 = vadd.f32 %v2234, 1.0
      %v2267 = vadd.f32 %v2235, 1.0
      %v2268 = vadd.f32 %v2236, 1.0
      %v2269 = vadd.f32 %v2237, 1.0
      %v2270 = vadd.f32 %v2238, 1.0
      %v2271 = vadd.f32 %v2239, 1.0
      %v2272 = vadd.f32 %v2240, 1.0
      %v2273 = vadd.f32 %v2241, 1.0
      %v2274 = vadd.f32 %v2242, 1.0
      %v2275 = vadd.f32 %v2243, 1.0
      %v2276 = vrcp.pop %v2260
      %v2277 = vmul.f32 %v2244, %v2276
      %v2278 = vrcp.pop %v2261
      %v2279 = vmul.f32 %v2245, %v2278
      %v2280 = vrcp.pop %v2262
      %v2281 = vmul.f32 %v2246, %v2280
      %v2282 = vrcp.pop %v2263
      %v2283 = vmul.f32 %v2247, %v2282
      %v2284 = vrcp.pop %v2264
      %v2285 = vmul.f32 %v2248, %v2284
      %v2286 = vrcp.pop %v2265
      %v2287 = vmul.f32 %v2249, %v2286
      %v2288 = vrcp.pop %v2266
      %v2289 = vmul.f32 %v2250, %v2288
      %v2290 = vrcp.pop %v2267
      %v2291 = vmul.f32 %v2251, %v2290
      %v2292 = vrcp.pop %v2268
      %v2293 = vmul.f32 %v2252, %v2292
      %v2294 = vrcp.pop %v2269
      %v2295 = vmul.f32 %v2253, %v2294
      %v2296 = vrcp.pop %v2270
      %v2297 = vmul.f32 %v2254, %v2296
      %v2298 = vrcp.pop %v2271
      %v2299 = vmul.f32 %v2255, %v2298
      %v2300 = vrcp.pop %v2272
      %v2301 = vmul.f32 %v2256, %v2300
      %v2302 = vrcp.pop %v2273
      %v2303 = vmul.f32 %v2257, %v2302
      %v2304 = vrcp.pop %v2274
      %v2305 = vmul.f32 %v2258, %v2304
      %v2306 = vrcp.pop %v2275
      %v2307 = vmul.f32 %v2259, %v2306
      %v2308 = vmul.f32 %v2148, %v2277
      %v2309 = vmul.f32 %v2149, %v2279
      %v2310 = vmul.f32 %v2150, %v2281
      %v2311 = vmul.f32 %v2151, %v2283
      %v2312 = vmul.f32 %v2152, %v2285
      %v2313 = vmul.f32 %v2153, %v2287
      %v2314 = vmul.f32 %v2154, %v2289
      %v2315 = vmul.f32 %v2155, %v2291
      %v2316 = vmul.f32 %v2156, %v2293
      %v2317 = vmul.f32 %v2157, %v2295
      %v2318 = vmul.f32 %v2158, %v2297
      %v2319 = vmul.f32 %v2159, %v2299
      %v2320 = vmul.f32 %v2160, %v2301
      %v2321 = vmul.f32 %v2161, %v2303
      %v2322 = vmul.f32 %v2162, %v2305
      %v2323 = vmul.f32 %v2163, %v2307
      %s2324 = scalar_lea.vmem %s303, 24
      %v2325 = vld [vmem:[%s2324 + $0x1] sm:$0xff]
      %v2326 = vld [vmem:[%s2324 + $0x9] sm:$0xff]
      %v2327 = vld [vmem:[%s2324 + $0x19] sm:$0xff]
      %v2328 = vld [vmem:[%s2324 + $0x21] sm:$0xff]
      %v2329 = vld [vmem:[%s2324 + $0x31] sm:$0xff]
      %v2330 = vld [vmem:[%s2324 + $0x39] sm:$0xff]
      %v2331 = vld [vmem:[%s2324 + $0x49] sm:$0xff]
      %v2332 = vld [vmem:[%s2324 + $0x51] sm:$0xff]
      %v2333 = vld [vmem:[%s2324 + $0x61] sm:$0xff]
      %v2334 = vld [vmem:[%s2324 + $0x69] sm:$0xff]
      %v2335 = vld [vmem:[%s2324 + $0x79] sm:$0xff]
      %v2336 = vld [vmem:[%s2324 + $0x81] sm:$0xff]
      %v2337 = vld [vmem:[%s2324 + $0x91] sm:$0xff]
      %v2338 = vld [vmem:[%s2324 + $0x99] sm:$0xff]
      %v2339 = vld [vmem:[%s2324 + $0xa9] sm:$0xff]
      %v2340 = vld [vmem:[%s2324 + $0xb1] sm:$0xff]
      %v2341 = vadd.f32 %v2325, %v2308
      %v2342 = vadd.f32 %v2326, %v2309
      %v2343 = vadd.f32 %v2327, %v2310
      %v2344 = vadd.f32 %v2328, %v2311
      %v2345 = vadd.f32 %v2329, %v2312
      %v2346 = vadd.f32 %v2330, %v2313
      %v2347 = vadd.f32 %v2331, %v2314
      %v2348 = vadd.f32 %v2332, %v2315
      %v2349 = vadd.f32 %v2333, %v2316
      %v2350 = vadd.f32 %v2334, %v2317
      %v2351 = vadd.f32 %v2335, %v2318
      %v2352 = vadd.f32 %v2336, %v2319
      %v2353 = vadd.f32 %v2337, %v2320
      %v2354 = vadd.f32 %v2338, %v2321
      %v2355 = vadd.f32 %v2339, %v2322
      %v2356 = vadd.f32 %v2340, %v2323
      %2357 = vst.msk [vmem:[%s312] sm:$0xff] %vm346, %v2341
      %2358 = vst.msk [vmem:[%s312 + $0x8] sm:$0xff] %vm346, %v2342
      %2359 = vst.msk [vmem:[%s312 + $0x10] sm:$0xff] %vm346, %v2343
      %2360 = vst.msk [vmem:[%s312 + $0x18] sm:$0xff] %vm346, %v2344
      %2361 = vst.msk [vmem:[%s312 + $0x20] sm:$0xff] %vm346, %v2345
      %2362 = vst.msk [vmem:[%s312 + $0x28] sm:$0xff] %vm346, %v2346
      %2363 = vst.msk [vmem:[%s312 + $0x30] sm:$0xff] %vm346, %v2347
      %2364 = vst.msk [vmem:[%s312 + $0x38] sm:$0xff] %vm346, %v2348
      %2365 = vst.msk [vmem:[%s312 + $0x40] sm:$0xff] %vm346, %v2349
      %2366 = vst.msk [vmem:[%s312 + $0x48] sm:$0xff] %vm346, %v2350
      %2367 = vst.msk [vmem:[%s312 + $0x50] sm:$0xff] %vm346, %v2351
      %2368 = vst.msk [vmem:[%s312 + $0x58] sm:$0xff] %vm346, %v2352
      %2369 = vst.msk [vmem:[%s312 + $0x60] sm:$0xff] %vm346, %v2353
      %2370 = vst.msk [vmem:[%s312 + $0x68] sm:$0xff] %vm346, %v2354
      %2371 = vst.msk [vmem:[%s312 + $0x70] sm:$0xff] %vm346, %v2355
      %2372 = vst.msk [vmem:[%s312 + $0x78] sm:$0xff] %vm346, %v2356
      %s2373 = smul.u32 %s22, 2
      %s2374 = sadd.s32 %s2373, %s23
      %p2375 = scmp.lt.s32.totalorder %s2374, 3
      %s2376 = scalar_select %p2375, %s2374, 3
      %s2377 = smul.addr %s2376, 16
      %s2378 = smul.addr %s2377, 8
      %s2379 = scalar_lea.vmem %s7, %s2378
      // Predicated region
      $region49: #{tpu_custom_call.1} parent=47 // pred_check
        %p2380 = pneg %p208
      $region50: #{tpu_custom_call.1} parent=47 // pred_check_branch
        %2382 = sbr.rel (%p2380) target = $region52
      $region51: #{tpu_custom_call.1} parent=47 // pred_region
        %s2383 = smul.u32 %s22, 2
        %s2384 = sadd.s32 %s2383, %s23
      $region52: #{tpu_custom_call.1} parent=47 // pred_fallthru
        _
    $region48: #{tpu_custom_call.1} parent=5 // pred_fallthru
      _
    %p2385 = scmp.le.s32.totalorder 2, %s13
    // Predicated region
    $region53: #{tpu_custom_call.1} parent=5 // pred_check
      %p2386 = pneg %p2385
    $region54: #{tpu_custom_call.1} parent=5 // pred_check_branch
      %2388 = sbr.rel (%p2386) target = $region56
    $region55: #{tpu_custom_call.1} parent=5 // pred_region
      %s2389 = ssub.s32 %s13, 2
      // Predicated region
      $region57: #{tpu_custom_call.1} parent=55 // pred_check
        %p2390 = pneg %p214
      $region58: #{tpu_custom_call.1} parent=55 // pred_check_branch
        %2392 = sbr.rel (%p2390) target = $region60
      $region59: #{tpu_custom_call.1} parent=55 // pred_region
        %s2393 = smul.u32 %s24, 2
        %s2394 = sadd.s32 %s2393, %s25
        %p2395 = scmp.lt.s32.totalorder %s2394, 3
        %s2396 = scalar_select %p2395, %s2394, 3
        %s2397 = smul.addr %s2396, 16
        %s2398 = smul.addr %s2397, 8
        %s2399 = scalar_lea.vmem %s7, %s2398
      $region60: #{tpu_custom_call.1} parent=55 // pred_fallthru
        _
    $region56: #{tpu_custom_call.1} parent=5 // pred_fallthru
      _
  $region6: #{tpu_custom_call.1} parent=0 // loop_footer
    %s17 = sadd.s32 1, %s13
  $region7: #{tpu_custom_call.1} parent=0 // loop_footer_branch
    %12 = sbr.rel target = $region3
  $region8: #{tpu_custom_call.1} parent=0 // loop_exit
    _

// kernel: tpu_custom_call.1
$region0: #{tpu_custom_call.1}
  #allocation0 [shape = 'u32[]', space=smem, size = 0x4, offset = 0x4, fixed_abs, tag = 'smem constant byte address 0x4 - core index']
  #allocation1 [shape = 'u32[144,128]{1,0:T(1,128)}', space=vmem, size = 0x12000, scoped, tag = 'internal scratch']
  #allocation2 [shape = 'f32[10,24,4]{2,1,0:T(8,128)}', space=vmem, size = 0x1e000, scoped, tag = 'scratch operand']
  %s0 = inlined_call_operand.vmem [shape: f32[4,10,24,4], index: 0, kind: input, shape index: {}]
  %s1 = inlined_call_operand.vmem [shape: f32[4,4], index: 1, kind: input, shape index: {}]
  %s2 = inlined_call_operand.vmem [shape: f32[1,4], index: 2, kind: input, shape index: {}]
  %s3 = inlined_call_operand.vmem [shape: f32[1,4], index: 3, kind: input, shape index: {}]
  %s4 = inlined_call_operand.vmem [shape: f32[36,4], index: 4, kind: input, shape index: {}]
  %s5 = inlined_call_operand.vmem [shape: f32[1,4], index: 5, kind: input, shape index: {}]
  %s6 = inlined_call_operand.vmem [shape: f32[1,4], index: 6, kind: input, shape index: {}]
  %s7 = inlined_call_operand.vmem [shape: f32[4,8,16,4], index: 7, kind: output, shape index: {}]
  %s8 = sld [smem:[#allocation0]]
  $region61: #{tpu_custom_call.1} parent=0
    _
  %s10 = ssub.s32 1, %s8
  %s11 = scalar_select 0, %s10, %s8
  loop: start=0, step=1, limit=6
  $region2: #{tpu_custom_call.1} parent=0 // loop_pre_header
    _
  $region3: #{tpu_custom_call.1} parent=0 // loop_header
    %s13 = sphi 0, %s17
    %p14 = scmp.ge.s32.totalorder %s13, 6
    %s20 = sphi 0, %s32
    %s21 = sphi 0, %s28
    %s22 = sphi 0, %s20
    %s23 = sphi 0, %s21
    %s24 = sphi 0, %s22
    %s25 = sphi 0, %s23
    %s39 = sphi 0, %s41
    %s42 = sphi 0, %s39
    %s43 = sphi 0, %s42
    %s59 = sphi 0, %s43
    %s63 = sphi 0, %s63
    %s65 = sphi 0, %s63
    %s66 = sphi 0, %s65
    %s80 = sphi 0, %s66
    %s84 = sphi 0, %s84
    %s86 = sphi 0, %s84
    %s87 = sphi 0, %s86
    %s101 = sphi 0, %s87
    %s105 = sphi 0, %s105
    %s107 = sphi 0, %s105
    %s108 = sphi 0, %s107
    %s122 = sphi 0, %s108
    %s126 = sphi 0, %s126
    %s128 = sphi 0, %s126
    %s129 = sphi 0, %s128
    %s143 = sphi 0, %s129
    %s147 = sphi 0, %s147
    %s149 = sphi 0, %s147
    %s150 = sphi 0, %s149
    %s164 = sphi 0, %s150
    %s168 = sphi 0, %s168
    %s170 = sphi 0, %s168
    %s171 = sphi 0, %s170
    %s185 = sphi 0, %s171
    %s195 = sphi 0, %s197
    %s198 = sphi 0, %s195
    %s199 = sphi 0, %s198
    %s215 = sphi 0, %s199
  $region4: #{tpu_custom_call.1} parent=0 // loop_header_branch
    %16 = sbr.rel (%p14) target = $region8
  $region5: #{tpu_custom_call.1} parent=0 // loop_body
    %s18 = ssub.s32 %s13, 1
    %s19 = ssub.s32 %s13, 2
    %s26 = sadd.s32 1, %s21
    %p27 = scmp.ge.s32.totalorder %s26, 2
    %s28 = scalar_select %p27, 0, %s26
    %s29 = sadd.s32 1, %s20
    %s30 = scalar_select %p27, %s29, %s20
    %p31 = scmp.ge.s32.totalorder %s30, 2
    %s32 = scalar_select %p31, 0, %s30
    %s33 = smul.u32 %s20, 2
    %s34 = sadd.s32 %s33, %s21
    %s35 = smul.u32 %s32, 2
    %s36 = sadd.s32 %s35, %s28
    %s37 = ssub.s32 %s34, %s36
    %p38 = scmp.eq.s32.totalorder %s37, 0
    %s40 = sadd.s32 %s39, 1
    %s41 = scalar_select %p38, %s39, %s40
    %p44 = pneg %p38
    %p45 = scmp.eq.s32.totalorder %s13, 3
    %p46 = por %p44, %p45
    %p47 = scmp.ne.s32.totalorder %s39, %s42
    %p48 = scmp.eq.s32.totalorder %s13, 0
    %p49 = por %p47, %p48
    %p50 = scmp.ne.s32.totalorder %s39, %s42
    %p51 = scmp.eq.s32.totalorder %s18, 3
    %p52 = por %p50, %p51
    %p53 = scmp.ne.s32.totalorder %s42, %s43
    %p54 = scmp.eq.s32.totalorder %s18, 0
    %p55 = por %p53, %p54
    %p56 = scmp.ne.s32.totalorder %s42, %s43
    %p57 = scmp.eq.s32.totalorder %s19, 3
    %p58 = por %p56, %p57
    %p60 = scmp.ne.s32.totalorder %s43, %s59
    %p61 = scmp.eq.s32.totalorder %s19, 0
    %p62 = por %p60, %p61
    %s64 = sadd.s32 %s63, 1
    %p67 = scmp.eq.s32.totalorder %s13, 3
    %p68 = scmp.ne.s32.totalorder %s63, %s65
    %p69 = scmp.eq.s32.totalorder %s13, 0
    %p70 = por %p68, %p69
    %p71 = scmp.ne.s32.totalorder %s63, %s65
    %p72 = scmp.eq.s32.totalorder %s18, 3
    %p73 = por %p71, %p72
    %p74 = scmp.ne.s32.totalorder %s65, %s66
    %p75 = scmp.eq.s32.totalorder %s18, 0
    %p76 = por %p74, %p75
    %p77 = scmp.ne.s32.totalorder %s65, %s66
    %p78 = scmp.eq.s32.totalorder %s19, 3
    %p79 = por %p77, %p78
    %p81 = scmp.ne.s32.totalorder %s66, %s80
    %p82 = scmp.eq.s32.totalorder %s19, 0
    %p83 = por %p81, %p82
    %s85 = sadd.s32 %s84, 1
    %p88 = scmp.eq.s32.totalorder %s13, 3
    %p89 = scmp.ne.s32.totalorder %s84, %s86
    %p90 = scmp.eq.s32.totalorder %s13, 0
    %p91 = por %p89, %p90
    %p92 = scmp.ne.s32.totalorder %s84, %s86
    %p93 = scmp.eq.s32.totalorder %s18, 3
    %p94 = por %p92, %p93
    %p95 = scmp.ne.s32.totalorder %s86, %s87
    %p96 = scmp.eq.s32.totalorder %s18, 0
    %p97 = por %p95, %p96
    %p98 = scmp.ne.s32.totalorder %s86, %s87
    %p99 = scmp.eq.s32.totalorder %s19, 3
    %p100 = por %p98, %p99
    %p102 = scmp.ne.s32.totalorder %s87, %s101
    %p103 = scmp.eq.s32.totalorder %s19, 0
    %p104 = por %p102, %p103
    %s106 = sadd.s32 %s105, 1
    %p109 = scmp.eq.s32.totalorder %s13, 3
    %p110 = scmp.ne.s32.totalorder %s105, %s107
    %p111 = scmp.eq.s32.totalorder %s13, 0
    %p112 = por %p110, %p111
    %p113 = scmp.ne.s32.totalorder %s105, %s107
    %p114 = scmp.eq.s32.totalorder %s18, 3
    %p115 = por %p113, %p114
    %p116 = scmp.ne.s32.totalorder %s107, %s108
    %p117 = scmp.eq.s32.totalorder %s18, 0
    %p118 = por %p116, %p117
    %p119 = scmp.ne.s32.totalorder %s107, %s108
    %p120 = scmp.eq.s32.totalorder %s19, 3
    %p121 = por %p119, %p120
    %p123 = scmp.ne.s32.totalorder %s108, %s122
    %p124 = scmp.eq.s32.totalorder %s19, 0
    %p125 = por %p123, %p124
    %s127 = sadd.s32 %s126, 1
    %p130 = scmp.eq.s32.totalorder %s13, 3
    %p131 = scmp.ne.s32.totalorder %s126, %s128
    %p132 = scmp.eq.s32.totalorder %s13, 0
    %p133 = por %p131, %p132
    %p134 = scmp.ne.s32.totalorder %s126, %s128
    %p135 = scmp.eq.s32.totalorder %s18, 3
    %p136 = por %p134, %p135
    %p137 = scmp.ne.s32.totalorder %s128, %s129
    %p138 = scmp.eq.s32.totalorder %s18, 0
    %p139 = por %p137, %p138
    %p140 = scmp.ne.s32.totalorder %s128, %s129
    %p141 = scmp.eq.s32.totalorder %s19, 3
    %p142 = por %p140, %p141
    %p144 = scmp.ne.s32.totalorder %s129, %s143
    %p145 = scmp.eq.s32.totalorder %s19, 0
    %p146 = por %p144, %p145
    %s148 = sadd.s32 %s147, 1
    %p151 = scmp.eq.s32.totalorder %s13, 3
    %p152 = scmp.ne.s32.totalorder %s147, %s149
    %p153 = scmp.eq.s32.totalorder %s13, 0
    %p154 = por %p152, %p153
    %p155 = scmp.ne.s32.totalorder %s147, %s149
    %p156 = scmp.eq.s32.totalorder %s18, 3
    %p157 = por %p155, %p156
    %p158 = scmp.ne.s32.totalorder %s149, %s150
    %p159 = scmp.eq.s32.totalorder %s18, 0
    %p160 = por %p158, %p159
    %p161 = scmp.ne.s32.totalorder %s149, %s150
    %p162 = scmp.eq.s32.totalorder %s19, 3
    %p163 = por %p161, %p162
    %p165 = scmp.ne.s32.totalorder %s150, %s164
    %p166 = scmp.eq.s32.totalorder %s19, 0
    %p167 = por %p165, %p166
    %s169 = sadd.s32 %s168, 1
    %p172 = scmp.eq.s32.totalorder %s13, 3
    %p173 = scmp.ne.s32.totalorder %s168, %s170
    %p174 = scmp.eq.s32.totalorder %s13, 0
    %p175 = por %p173, %p174
    %p176 = scmp.ne.s32.totalorder %s168, %s170
    %p177 = scmp.eq.s32.totalorder %s18, 3
    %p178 = por %p176, %p177
    %p179 = scmp.ne.s32.totalorder %s170, %s171
    %p180 = scmp.eq.s32.totalorder %s18, 0
    %p181 = por %p179, %p180
    %p182 = scmp.ne.s32.totalorder %s170, %s171
    %p183 = scmp.eq.s32.totalorder %s19, 3
    %p184 = por %p182, %p183
    %p186 = scmp.ne.s32.totalorder %s171, %s185
    %p187 = scmp.eq.s32.totalorder %s19, 0
    %p188 = por %p186, %p187
    %s189 = smul.u32 %s20, 2
    %s190 = sadd.s32 %s189, %s21
    %s191 = smul.u32 %s32, 2
    %s192 = sadd.s32 %s191, %s28
    %s193 = ssub.s32 %s190, %s192
    %p194 = scmp.eq.s32.totalorder %s193, 0
    %s196 = sadd.s32 %s195, 1
    %s197 = scalar_select %p194, %s195, %s196
    %p200 = pneg %p194
    %p201 = scmp.eq.s32.totalorder %s13, 3
    %p202 = por %p200, %p201
    %p203 = scmp.ne.s32.totalorder %s195, %s198
    %p204 = scmp.eq.s32.totalorder %s13, 0
    %p205 = por %p203, %p204
    %p206 = scmp.ne.s32.totalorder %s195, %s198
    %p207 = scmp.eq.s32.totalorder %s18, 3
    %p208 = por %p206, %p207
    %p209 = scmp.ne.s32.totalorder %s198, %s199
    %p210 = scmp.eq.s32.totalorder %s18, 0
    %p211 = por %p209, %p210
    %p212 = scmp.ne.s32.totalorder %s198, %s199
    %p213 = scmp.eq.s32.totalorder %s19, 3
    %p214 = por %p212, %p213
    %p216 = scmp.ne.s32.totalorder %s199, %s215
    %p217 = scmp.eq.s32.totalorder %s19, 0
    %p218 = por %p216, %p217
    %p219 = scmp.le.s32.totalorder 1, %s13
    %p220 = scmp.lt.s32.totalorder %s13, 5
    %p221 = pnand %p219, %p220
    %p222 = pneg %p221
    // Predicated region
    $region9: #{tpu_custom_call.1} parent=5 // pred_check
      _
    $region10: #{tpu_custom_call.1} parent=5 // pred_check_branch
      %224 = sbr.rel (%p221) target = $region12
    $region11: #{tpu_custom_call.1} parent=5 // pred_region
      %s225 = ssub.s32 %s13, 1
      // Predicated region
      $region13: #{tpu_custom_call.1} parent=11 // pred_check
        %p226 = pneg %p76
      $region14: #{tpu_custom_call.1} parent=11 // pred_check_branch
        %228 = sbr.rel (%p226) target = $region16
      $region15: #{tpu_custom_call.1} parent=11 // pred_region
        _
      $region16: #{tpu_custom_call.1} parent=11 // pred_fallthru
        _
      // Predicated region
      $region17: #{tpu_custom_call.1} parent=11 // pred_check
        %p229 = pneg %p97
      $region18: #{tpu_custom_call.1} parent=11 // pred_check_branch
        %231 = sbr.rel (%p229) target = $region20
      $region19: #{tpu_custom_call.1} parent=11 // pred_region
        _
      $region20: #{tpu_custom_call.1} parent=11 // pred_fallthru
        _
      // Predicated region
      $region21: #{tpu_custom_call.1} parent=11 // pred_check
        %p232 = pneg %p118
      $region22: #{tpu_custom_call.1} parent=11 // pred_check_branch
        %234 = sbr.rel (%p232) target = $region24
      $region23: #{tpu_custom_call.1} parent=11 // pred_region
        _
      $region24: #{tpu_custom_call.1} parent=11 // pred_fallthru
        _
      // Predicated region
      $region25: #{tpu_custom_call.1} parent=11 // pred_check
        %p235 = pneg %p139
      $region26: #{tpu_custom_call.1} parent=11 // pred_check_branch
        %237 = sbr.rel (%p235) target = $region28
      $region27: #{tpu_custom_call.1} parent=11 // pred_region
        _
      $region28: #{tpu_custom_call.1} parent=11 // pred_fallthru
        _
      // Predicated region
      $region29: #{tpu_custom_call.1} parent=11 // pred_check
        %p238 = pneg %p160
      $region30: #{tpu_custom_call.1} parent=11 // pred_check_branch
        %240 = sbr.rel (%p238) target = $region32
      $region31: #{tpu_custom_call.1} parent=11 // pred_region
        _
      $region32: #{tpu_custom_call.1} parent=11 // pred_fallthru
        _
      // Predicated region
      $region33: #{tpu_custom_call.1} parent=11 // pred_check
        %p241 = pneg %p181
      $region34: #{tpu_custom_call.1} parent=11 // pred_check_branch
        %243 = sbr.rel (%p241) target = $region36
      $region35: #{tpu_custom_call.1} parent=11 // pred_region
        _
      $region36: #{tpu_custom_call.1} parent=11 // pred_fallthru
        _
    $region12: #{tpu_custom_call.1} parent=5 // pred_fallthru
      _
    %p244 = scmp.lt.s32.totalorder %s13, 4
    // Predicated region
    $region37: #{tpu_custom_call.1} parent=5 // pred_check
      %p245 = pneg %p244
    $region38: #{tpu_custom_call.1} parent=5 // pred_check_branch
      %247 = sbr.rel (%p245) target = $region40
    $region39: #{tpu_custom_call.1} parent=5 // pred_region
      // Predicated region
      $region41: #{tpu_custom_call.1} parent=39 // pred_check
        %p248 = pneg %p49
      $region42: #{tpu_custom_call.1} parent=39 // pred_check_branch
        %250 = sbr.rel (%p248) target = $region44
      $region43: #{tpu_custom_call.1} parent=39 // pred_region
        %s251 = smul.u32 %s20, 2
        %s252 = sadd.s32 %s251, %s21
        %p253 = scmp.lt.s32.totalorder %s252, 3
        %s254 = scalar_select %p253, %s252, 3
        %s255 = smul.addr %s254, 30
        %s256 = smul.addr %s255, 8
        %s257 = scalar_lea.vmem %s0, %s256
        %s258 = smul.u32 %s20, 2
        %s259 = sadd.s32 %s258, %s21
      $region44: #{tpu_custom_call.1} parent=39 // pred_fallthru
        _
    $region40: #{tpu_custom_call.1} parent=5 // pred_fallthru
      _
    %p260 = scmp.le.s32.totalorder 1, %s13
    %p261 = scmp.lt.s32.totalorder %s13, 5
    %p262 = pnand %p260, %p261
    %p263 = pneg %p262
    // Predicated region
    $region45: #{tpu_custom_call.1} parent=5 // pred_check
      _
    $region46: #{tpu_custom_call.1} parent=5 // pred_check_branch
      %265 = sbr.rel (%p262) target = $region48
    $region47: #{tpu_custom_call.1} parent=5 // pred_region
      %s266 = ssub.s32 %s13, 1
      %s267 = smul.u32 %s22, 2
      %s268 = sadd.s32 %s267, %s23
      %p269 = scmp.lt.s32.totalorder %s268, 3
      %s270 = scalar_select %p269, %s268, 3
      %s271 = smul.addr %s270, 30
      %s272 = smul.addr %s271, 8
      %s273 = scalar_lea.vmem %s0, %s272
      %p274 = pneg %p55
      %p275 = pneg %p52
      %p276 = pneg %p76
      %p277 = pneg %p73
      %p278 = pneg %p97
      %p279 = pneg %p94
      %p280 = pneg %p118
      %p281 = pneg %p115
      %p282 = pneg %p139
      %p283 = pneg %p136
      %p284 = pneg %p160
      %p285 = pneg %p157
      %p286 = pneg %p181
      %p287 = pneg %p178
      %p288 = pneg %p211
      %p289 = pneg %p208
      %s290 = smul.u32 %s22, 2
      %s291 = sadd.s32 %s290, %s23
      %p292 = scmp.lt.s32.totalorder %s291, 3
      %s293 = scalar_select %p292, %s291, 3
      %s294 = smul.addr %s293, 16
      %s295 = smul.addr %s294, 8
      %s296 = scalar_lea.vmem %s7, %s295
      %s297 = smul.u32 %s22, 2
      %s298 = sadd.s32 %s297, %s23
      %p299 = scmp.lt.s32.totalorder %s298, 3
      %s300 = scalar_select %p299, %s298, 3
      %s301 = smul.addr %s300, 30
      %s302 = smul.addr %s301, 8
      %s303 = scalar_lea.vmem %s0, %s302
      %s304 = smul.u32 %s22, 2
      %s305 = sadd.s32 %s304, %s23
      %s306 = smul.u32 %s22, 2
      %s307 = sadd.s32 %s306, %s23
      %p308 = scmp.lt.s32.totalorder %s307, 3
      %s309 = scalar_select %p308, %s307, 3
      %s310 = smul.addr %s309, 16
      %s311 = smul.addr %s310, 8
      %s312 = scalar_lea.vmem %s7, %s311
      %s313 = smul.u32 %s22, 2
      %s314 = sadd.s32 %s313, %s23
      %v315 = vld [vmem:[%s303] sm:$0xff]
      %v316 = vld [vmem:[%s303 + $0x8] sm:$0xff]
      %v317 = vld [vmem:[%s303 + $0x10] sm:$0xff]
      %v318 = vld [vmem:[%s303 + $0x18] sm:$0xff]
      %v319 = vld [vmem:[%s303 + $0x20] sm:$0xff]
      %v320 = vld [vmem:[%s303 + $0x28] sm:$0xff]
      %v321 = vld [vmem:[%s303 + $0x30] sm:$0xff]
      %v322 = vld [vmem:[%s303 + $0x38] sm:$0xff]
      %v323 = vld [vmem:[%s303 + $0x40] sm:$0xff]
      %v324 = vld [vmem:[%s303 + $0x48] sm:$0xff]
      %v325 = vld [vmem:[%s303 + $0x50] sm:$0xff]
      %v326 = vld [vmem:[%s303 + $0x58] sm:$0xff]
      %v327 = vld [vmem:[%s303 + $0x60] sm:$0xff]
      %v328 = vld [vmem:[%s303 + $0x68] sm:$0xff]
      %v329 = vld [vmem:[%s303 + $0x70] sm:$0xff]
      %v330 = vld [vmem:[%s303 + $0x78] sm:$0xff]
      %v331 = vld [vmem:[%s303 + $0x80] sm:$0xff]
      %v332 = vld [vmem:[%s303 + $0x88] sm:$0xff]
      %v333 = vld [vmem:[%s303 + $0x90] sm:$0xff]
      %v334 = vld [vmem:[%s303 + $0x98] sm:$0xff]
      %v335 = vld [vmem:[%s303 + $0xa0] sm:$0xff]
      %v336 = vld [vmem:[%s303 + $0xa8] sm:$0xff]
      %v337 = vld [vmem:[%s303 + $0xb0] sm:$0xff]
      %v338 = vld [vmem:[%s303 + $0xb8] sm:$0xff]
      %v339 = vld [vmem:[%s303 + $0xc0] sm:$0xff]
      %v340 = vld [vmem:[%s303 + $0xc8] sm:$0xff]
      %v341 = vld [vmem:[%s303 + $0xd0] sm:$0xff]
      %v342 = vld [vmem:[%s303 + $0xd8] sm:$0xff]
      %v343 = vld [vmem:[%s303 + $0xe0] sm:$0xff]
      %v344 = vld [vmem:[%s303 + $0xe8] sm:$0xff]
      %v345 = vld [vmem:[%s1] sm:$0xf]
      %vm346 = vcmask 31744
      %v348 = vsel %vm346, %v315, 0
      %v351 = vsel %vm346, %v316, 0
      %v354 = vsel %vm346, %v317, 0
      %v357 = vsel %vm346, %v318, 0
      %v360 = vsel %vm346, %v319, 0
      %v363 = vsel %vm346, %v320, 0
      %v366 = vsel %vm346, %v321, 0
      %v369 = vsel %vm346, %v322, 0
      %v372 = vsel %vm346, %v323, 0
      %v375 = vsel %vm346, %v324, 0
      %v378 = vsel %vm346, %v325, 0
      %v381 = vsel %vm346, %v326, 0
      %v384 = vsel %vm346, %v327, 0
      %v387 = vsel %vm346, %v328, 0
      %v390 = vsel %vm346, %v329, 0
      %v393 = vsel %vm346, %v330, 0
      %v396 = vsel %vm346, %v331, 0
      %v399 = vsel %vm346, %v332, 0
      %v402 = vsel %vm346, %v333, 0
      %v405 = vsel %vm346, %v334, 0
      %v408 = vsel %vm346, %v335, 0
      %v411 = vsel %vm346, %v336, 0
      %v414 = vsel %vm346, %v337, 0
      %v417 = vsel %vm346, %v338, 0
      %v420 = vsel %vm346, %v339, 0
      %v423 = vsel %vm346, %v340, 0
      %v426 = vsel %vm346, %v341, 0
      %v429 = vsel %vm346, %v342, 0
      %v432 = vsel %vm346, %v343, 0
      %v435 = vsel %vm346, %v344, 0
      %vm437 = vcmask 1043456
      %v439 = vsel %vm437, %v345, 0
      %441 = vmatprep.subr.mxu0 0.0
      %442 = vmatpush1.msra.mxu0 %v439
      %443 = vmatprep.subr.mxu0 0.0
      %444 = vmatpush1.msra.mxu0 0.0
      %445 = vmatprep.subr.mxu0 0.0
      %446 = vmatpush1.msra.mxu0 0.0
      %447 = vmatprep.subr.mxu0 0.0
      %448 = vmatpush1.msra.mxu0 0.0
      %449 = vmatprep.subr.mxu0 0.0
      %450 = vmatpush1.msra.mxu0 0.0
      %451 = vmatprep.subr.mxu0 0.0
      %452 = vmatpush1.msra.mxu0 0.0
      %453 = vmatprep.subr.mxu0 0.0
      %454 = vmatpush1.msra.mxu0 0.0
      %455 = vmatprep.subr.mxu0 0.0
      %456 = vmatpush1.msra.mxu0 0.0
      %457 = vmatprep.subr.mxu0 0.0
      %458 = vmatpush1.msra.mxu0 0.0
      %459 = vmatprep.subr.mxu0 0.0
      %460 = vmatpush1.msra.mxu0 0.0
      %461 = vmatprep.subr.mxu0 0.0
      %462 = vmatpush1.msra.mxu0 0.0
      %463 = vmatprep.subr.mxu0 0.0
      %464 = vmatpush1.msra.mxu0 0.0
      %465 = vmatprep.subr.mxu0 0.0
      %466 = vmatpush1.msra.mxu0 0.0
      %467 = vmatprep.subr.mxu0 0.0
      %468 = vmatpush1.msra.mxu0 0.0
      %469 = vmatprep.subr.mxu0 0.0
      %470 = vmatpush1.msra.mxu0 0.0
      %471 = vmatprep.subr.mxu0 0.0
      %472 = vmatpush1.msra.mxu0 0.0
      %473 = vmatprep.subr.mxu0 0.0
      %474 = vmatpush1.msra.mxu0 0.0
      %475 = vmatprep.subr.mxu0 0.0
      %476 = vmatpush1.msra.mxu0 0.0
      %477 = vmatprep.subr.mxu0 0.0
      %478 = vmatpush1.msra.mxu0 0.0
      %479 = vmatprep.subr.mxu0 0.0
      %480 = vmatpush1.msra.mxu0 0.0
      %481 = vmatprep.subr.mxu0 0.0
      %482 = vmatpush1.msra.mxu0 0.0
      %483 = vmatprep.subr.mxu0 0.0
      %484 = vmatpush1.msra.mxu0 0.0
      %485 = vmatprep.subr.mxu0 0.0
      %486 = vmatpush1.msra.mxu0 0.0
      %487 = vmatprep.subr.mxu0 0.0
      %488 = vmatpush1.msra.mxu0 0.0
      %489 = vmatprep.subr.mxu0 0.0
      %490 = vmatpush1.msra.mxu0 0.0
      %491 = vmatprep.subr.mxu0 0.0
      %492 = vmatpush1.msra.mxu0 0.0
      %493 = vmatprep.subr.mxu0 0.0
      %494 = vmatpush1.msra.mxu0 0.0
      %495 = vmatprep.subr.mxu0 0.0
      %496 = vmatpush1.msra.mxu0 0.0
      %497 = vmatprep.subr.mxu0 0.0
      %498 = vmatpush1.msra.mxu0 0.0
      %499 = vmatprep.subr.mxu0 0.0
      %500 = vmatpush1.msra.mxu0 0.0
      %501 = vmatprep.subr.mxu0 0.0
      %502 = vmatpush1.msra.mxu0 0.0
      %503 = vmatprep.subr.mxu0 0.0
      %504 = vmatpush1.msra.mxu0 0.0
      %505 = vmatprep.mubr.f32.mxu0 0.0
      %506 = vmatmul.mubr.f32.gmra.mrb[0].mxu0 %v348
      %v507 = vpop.f32.mrb[0].mxu0
      %v508 = vadd.f32 0.0, %v507
      %v509 = vpop.f32.mrb[0].mxu0
      %510 = vmatprep.mubr.f32.mxu0 0.0
      %511 = vmatmul.mubr.f32.gmra.mrb[0].mxu0 %v351
      %v512 = vpop.f32.mrb[0].mxu0
      %v513 = vadd.f32 0.0, %v512
      %v514 = vpop.f32.mrb[0].mxu0
      %515 = vmatprep.mubr.f32.mxu0 0.0
      %516 = vmatmul.mubr.f32.gmra.mrb[0].mxu0 %v354
      %v517 = vpop.f32.mrb[0].mxu0
      %v518 = vadd.f32 0.0, %v517
      %v519 = vpop.f32.mrb[0].mxu0
      %520 = vmatprep.mubr.f32.mxu0 0.0
      %521 = vmatmul.mubr.f32.gmra.mrb[0].mxu0 %v357
      %v522 = vpop.f32.mrb[0].mxu0
      %v523 = vadd.f32 0.0, %v522
      %v524 = vpop.f32.mrb[0].mxu0
      %525 = vmatprep.mubr.f32.mxu0 0.0
      %526 = vmatmul.mubr.f32.gmra.mrb[0].mxu0 %v360
      %v527 = vpop.f32.mrb[0].mxu0
      %v528 = vadd.f32 0.0, %v527
      %v529 = vpop.f32.mrb[0].mxu0
      %530 = vmatprep.mubr.f32.mxu0 0.0
      %531 = vmatmul.mubr.f32.gmra.mrb[0].mxu0 %v363
      %v532 = vpop.f32.mrb[0].mxu0
      %v533 = vadd.f32 0.0, %v532
      %v534 = vpop.f32.mrb[0].mxu0
      %535 = vmatprep.mubr.f32.mxu0 0.0
      %536 = vmatmul.mubr.f32.gmra.mrb[0].mxu0 %v366
      %v537 = vpop.f32.mrb[0].mxu0
      %v538 = vadd.f32 0.0, %v537
      %v539 = vpop.f32.mrb[0].mxu0
      %540 = vmatprep.mubr.f32.mxu0 0.0
      %541 = vmatmul.mubr.f32.gmra.mrb[0].mxu0 %v369
      %v542 = vpop.f32.mrb[0].mxu0
      %v543 = vadd.f32 0.0, %v542
      %v544 = vpop.f32.mrb[0].mxu0
      %545 = vmatprep.mubr.f32.mxu0 0.0
      %546 = vmatmul.mubr.f32.gmra.mrb[0].mxu0 %v372
      %v547 = vpop.f32.mrb[0].mxu0
      %v548 = vadd.f32 0.0, %v547
      %v549 = vpop.f32.mrb[0].mxu0
      %550 = vmatprep.mubr.f32.mxu0 0.0
      %551 = vmatmul.mubr.f32.gmra.mrb[0].mxu0 %v375
      %v552 = vpop.f32.mrb[0].mxu0
      %v553 = vadd.f32 0.0, %v552
      %v554 = vpop.f32.mrb[0].mxu0
      %555 = vmatprep.mubr.f32.mxu0 0.0
      %556 = vmatmul.mubr.f32.gmra.mrb[0].mxu0 %v378
      %v557 = vpop.f32.mrb[0].mxu0
      %v558 = vadd.f32 0.0, %v557
      %v559 = vpop.f32.mrb[0].mxu0
      %560 = vmatprep.mubr.f32.mxu0 0.0
      %561 = vmatmul.mubr.f32.gmra.mrb[0].mxu0 %v381
      %v562 = vpop.f32.mrb[0].mxu0
      %v563 = vadd.f32 0.0, %v562
      %v564 = vpop.f32.mrb[0].mxu0
      %565 = vmatprep.mubr.f32.mxu0 0.0
      %566 = vmatmul.mubr.f32.gmra.mrb[0].mxu0 %v384
      %v567 = vpop.f32.mrb[0].mxu0
      %v568 = vadd.f32 0.0, %v567
      %v569 = vpop.f32.mrb[0].mxu0
      %570 = vmatprep.mubr.f32.mxu0 0.0
      %571 = vmatmul.mubr.f32.gmra.mrb[0].mxu0 %v387
      %v572 = vpop.f32.mrb[0].mxu0
      %v573 = vadd.f32 0.0, %v572
      %v574 = vpop.f32.mrb[0].mxu0
      %575 = vmatprep.mubr.f32.mxu0 0.0
      %576 = vmatmul.mubr.f32.gmra.mrb[0].mxu0 %v390
      %v577 = vpop.f32.mrb[0].mxu0
      %v578 = vadd.f32 0.0, %v577
      %v579 = vpop.f32.mrb[0].mxu0
      %580 = vmatprep.mubr.f32.mxu0 0.0
      %581 = vmatmul.mubr.f32.gmra.mrb[0].mxu0 %v393
      %v582 = vpop.f32.mrb[0].mxu0
      %v583 = vadd.f32 0.0, %v582
      %v584 = vpop.f32.mrb[0].mxu0
      %585 = vmatprep.mubr.f32.mxu0 0.0
      %586 = vmatmul.mubr.f32.gmra.mrb[0].mxu0 %v396
      %v587 = vpop.f32.mrb[0].mxu0
      %v588 = vadd.f32 0.0, %v587
      %v589 = vpop.f32.mrb[0].mxu0
      %590 = vmatprep.mubr.f32.mxu0 0.0
      %591 = vmatmul.mubr.f32.gmra.mrb[0].mxu0 %v399
      %v592 = vpop.f32.mrb[0].mxu0
      %v593 = vadd.f32 0.0, %v592
      %v594 = vpop.f32.mrb[0].mxu0
      %595 = vmatprep.mubr.f32.mxu0 0.0
      %596 = vmatmul.mubr.f32.gmra.mrb[0].mxu0 %v402
      %v597 = vpop.f32.mrb[0].mxu0
      %v598 = vadd.f32 0.0, %v597
      %v599 = vpop.f32.mrb[0].mxu0
      %600 = vmatprep.mubr.f32.mxu0 0.0
      %601 = vmatmul.mubr.f32.gmra.mrb[0].mxu0 %v405
      %v602 = vpop.f32.mrb[0].mxu0
      %v603 = vadd.f32 0.0, %v602
      %v604 = vpop.f32.mrb[0].mxu0
      %605 = vmatprep.mubr.f32.mxu0 0.0
      %606 = vmatmul.mubr.f32.gmra.mrb[0].mxu0 %v408
      %v607 = vpop.f32.mrb[0].mxu0
      %v608 = vadd.f32 0.0, %v607
      %v609 = vpop.f32.mrb[0].mxu0
      %610 = vmatprep.mubr.f32.mxu0 0.0
      %611 = vmatmul.mubr.f32.gmra.mrb[0].mxu0 %v411
      %v612 = vpop.f32.mrb[0].mxu0
      %v613 = vadd.f32 0.0, %v612
      %v614 = vpop.f32.mrb[0].mxu0
      %615 = vmatprep.mubr.f32.mxu0 0.0
      %616 = vmatmul.mubr.f32.gmra.mrb[0].mxu0 %v414
      %v617 = vpop.f32.mrb[0].mxu0
      %v618 = vadd.f32 0.0, %v617
      %v619 = vpop.f32.mrb[0].mxu0
      %620 = vmatprep.mubr.f32.mxu0 0.0
      %621 = vmatmul.mubr.f32.gmra.mrb[0].mxu0 %v417
      %v622 = vpop.f32.mrb[0].mxu0
      %v623 = vadd.f32 0.0, %v622
      %v624 = vpop.f32.mrb[0].mxu0
      %625 = vmatprep.mubr.f32.mxu0 0.0
      %626 = vmatmul.mubr.f32.gmra.mrb[0].mxu0 %v420
      %v627 = vpop.f32.mrb[0].mxu0
      %v628 = vadd.f32 0.0, %v627
      %v629 = vpop.f32.mrb[0].mxu0
      %630 = vmatprep.mubr.f32.mxu0 0.0
      %631 = vmatmul.mubr.f32.gmra.mrb[0].mxu0 %v423
      %v632 = vpop.f32.mrb[0].mxu0
      %v633 = vadd.f32 0.0, %v632
      %v634 = vpop.f32.mrb[0].mxu0
      %635 = vmatprep.mubr.f32.mxu0 0.0
      %636 = vmatmul.mubr.f32.gmra.mrb[0].mxu0 %v426
      %v637 = vpop.f32.mrb[0].mxu0
      %v638 = vadd.f32 0.0, %v637
      %v639 = vpop.f32.mrb[0].mxu0
      %640 = vmatprep.mubr.f32.mxu0 0.0
      %641 = vmatmul.mubr.f32.gmra.mrb[0].mxu0 %v429
      %v642 = vpop.f32.mrb[0].mxu0
      %v643 = vadd.f32 0.0, %v642
      %v644 = vpop.f32.mrb[0].mxu0
      %645 = vmatprep.mubr.f32.mxu0 0.0
      %646 = vmatmul.mubr.f32.gmra.mrb[0].mxu0 %v432
      %v647 = vpop.f32.mrb[0].mxu0
      %v648 = vadd.f32 0.0, %v647
      %v649 = vpop.f32.mrb[0].mxu0
      %650 = vmatprep.mubr.f32.mxu0 0.0
      %651 = vmatmul.mubr.f32.gmra.mrb[0].mxu0 %v435
      %v652 = vpop.f32.mrb[0].mxu0
      %v653 = vadd.f32 0.0, %v652
      %v654 = vpop.f32.mrb[0].mxu0
      %655 = vdwg.mxu0
      %v656 = vld [vmem:[%s2] sm:$0x1]
      %v658 = vlaneseq
      %v659 = vshrl.u32 %v658, 7
      %v660 = vsub.s32 0, %v659
      %v661 = vrot.slane %v656, %v660
      %v663 = vmul.f32 %v508, %v661
      %v664 = vmul.f32 %v513, %v661
      %v665 = vmul.f32 %v518, %v661
      %v666 = vmul.f32 %v523, %v661
      %v667 = vmul.f32 %v528, %v661
      %v668 = vmul.f32 %v533, %v661
      %v669 = vmul.f32 %v538, %v661
      %v670 = vmul.f32 %v543, %v661
      %v671 = vmul.f32 %v548, %v661
      %v672 = vmul.f32 %v553, %v661
      %v673 = vmul.f32 %v558, %v661
      %v674 = vmul.f32 %v563, %v661
      %v675 = vmul.f32 %v568, %v661
      %v676 = vmul.f32 %v573, %v661
      %v677 = vmul.f32 %v578, %v661
      %v678 = vmul.f32 %v583, %v661
      %v679 = vmul.f32 %v588, %v661
      %v680 = vmul.f32 %v593, %v661
      %v681 = vmul.f32 %v598, %v661
      %v682 = vmul.f32 %v603, %v661
      %v683 = vmul.f32 %v608, %v661
      %v684 = vmul.f32 %v613, %v661
      %v685 = vmul.f32 %v618, %v661
      %v686 = vmul.f32 %v623, %v661
      %v687 = vmul.f32 %v628, %v661
      %v688 = vmul.f32 %v633, %v661
      %v689 = vmul.f32 %v638, %v661
      %v690 = vmul.f32 %v643, %v661
      %v691 = vmul.f32 %v648, %v661
      %v692 = vmul.f32 %v653, %v661
      %v693 = vld [vmem:[%s3] sm:$0x1]
      %v695 = vlaneseq
      %v696 = vshrl.u32 %v695, 7
      %v697 = vsub.s32 0, %v696
      %v698 = vrot.slane %v693, %v697
      %v700 = vadd.f32 %v663, %v698
      %v701 = vadd.f32 %v664, %v698
      %v702 = vadd.f32 %v665, %v698
      %v703 = vadd.f32 %v666, %v698
      %v704 = vadd.f32 %v667, %v698
      %v705 = vadd.f32 %v668, %v698
      %v706 = vadd.f32 %v669, %v698
      %v707 = vadd.f32 %v670, %v698
      %v708 = vadd.f32 %v671, %v698
      %v709 = vadd.f32 %v672, %v698
      %v710 = vadd.f32 %v673, %v698
      %v711 = vadd.f32 %v674, %v698
      %v712 = vadd.f32 %v675, %v698
      %v713 = vadd.f32 %v676, %v698
      %v714 = vadd.f32 %v677, %v698
      %v715 = vadd.f32 %v678, %v698
      %v716 = vadd.f32 %v679, %v698
      %v717 = vadd.f32 %v680, %v698
      %v718 = vadd.f32 %v681, %v698
      %v719 = vadd.f32 %v682, %v698
      %v720 = vadd.f32 %v683, %v698
      %v721 = vadd.f32 %v684, %v698
      %v722 = vadd.f32 %v685, %v698
      %v723 = vadd.f32 %v686, %v698
      %v724 = vadd.f32 %v687, %v698
      %v725 = vadd.f32 %v688, %v698
      %v726 = vadd.f32 %v689, %v698
      %v727 = vadd.f32 %v690, %v698
      %v728 = vadd.f32 %v691, %v698
      %v729 = vadd.f32 %v692, %v698
      %v730 = vmin.f32 %v700, 20.0
      %v731 = vmin.f32 %v701, 20.0
      %v732 = vmin.f32 %v702, 20.0
      %v733 = vmin.f32 %v703, 20.0
      %v734 = vmin.f32 %v704, 20.0
      %v735 = vmin.f32 %v705, 20.0
      %v736 = vmin.f32 %v706, 20.0
      %v737 = vmin.f32 %v707, 20.0
      %v738 = vmin.f32 %v708, 20.0
      %v739 = vmin.f32 %v709, 20.0
      %v740 = vmin.f32 %v710, 20.0
      %v741 = vmin.f32 %v711, 20.0
      %v742 = vmin.f32 %v712, 20.0
      %v743 = vmin.f32 %v713, 20.0
      %v744 = vmin.f32 %v714, 20.0
      %v745 = vmin.f32 %v715, 20.0
      %v746 = vmin.f32 %v716, 20.0
      %v747 = vmin.f32 %v717, 20.0
      %v748 = vmin.f32 %v718, 20.0
      %v749 = vmin.f32 %v719, 20.0
      %v750 = vmin.f32 %v720, 20.0
      %v751 = vmin.f32 %v721, 20.0
      %v752 = vmin.f32 %v722, 20.0
      %v753 = vmin.f32 %v723, 20.0
      %v754 = vmin.f32 %v724, 20.0
      %v755 = vmin.f32 %v725, 20.0
      %v756 = vmin.f32 %v726, 20.0
      %v757 = vmin.f32 %v727, 20.0
      %v758 = vmin.f32 %v728, 20.0
      %v759 = vmin.f32 %v729, 20.0
      %v760 = vmul.f32 %v730, 1.442695
      %v761 = vpow.pop %v760
      %v762 = vmul.f32 %v731, 1.442695
      %v763 = vpow.pop %v762
      %v764 = vmul.f32 %v732, 1.442695
      %v765 = vpow.pop %v764
      %v766 = vmul.f32 %v733, 1.442695
      %v767 = vpow.pop %v766
      %v768 = vmul.f32 %v734, 1.442695
      %v769 = vpow.pop %v768
      %v770 = vmul.f32 %v735, 1.442695
      %v771 = vpow.pop %v770
      %v772 = vmul.f32 %v736, 1.442695
      %v773 = vpow.pop %v772
      %v774 = vmul.f32 %v737, 1.442695
      %v775 = vpow.pop %v774
      %v776 = vmul.f32 %v738, 1.442695
      %v777 = vpow.pop %v776
      %v778 = vmul.f32 %v739, 1.442695
      %v779 = vpow.pop %v778
      %v780 = vmul.f32 %v740, 1.442695
      %v781 = vpow.pop %v780
      %v782 = vmul.f32 %v741, 1.442695
      %v783 = vpow.pop %v782
      %v784 = vmul.f32 %v742, 1.442695
      %v785 = vpow.pop %v784
      %v786 = vmul.f32 %v743, 1.442695
      %v787 = vpow.pop %v786
      %v788 = vmul.f32 %v744, 1.442695
      %v789 = vpow.pop %v788
      %v790 = vmul.f32 %v745, 1.442695
      %v791 = vpow.pop %v790
      %v792 = vmul.f32 %v746, 1.442695
      %v793 = vpow.pop %v792
      %v794 = vmul.f32 %v747, 1.442695
      %v795 = vpow.pop %v794
      %v796 = vmul.f32 %v748, 1.442695
      %v797 = vpow.pop %v796
      %v798 = vmul.f32 %v749, 1.442695
      %v799 = vpow.pop %v798
      %v800 = vmul.f32 %v750, 1.442695
      %v801 = vpow.pop %v800
      %v802 = vmul.f32 %v751, 1.442695
      %v803 = vpow.pop %v802
      %v804 = vmul.f32 %v752, 1.442695
      %v805 = vpow.pop %v804
      %v806 = vmul.f32 %v753, 1.442695
      %v807 = vpow.pop %v806
      %v808 = vmul.f32 %v754, 1.442695
      %v809 = vpow.pop %v808
      %v810 = vmul.f32 %v755, 1.442695
      %v811 = vpow.pop %v810
      %v812 = vmul.f32 %v756, 1.442695
      %v813 = vpow.pop %v812
      %v814 = vmul.f32 %v757, 1.442695
      %v815 = vpow.pop %v814
      %v816 = vmul.f32 %v758, 1.442695
      %v817 = vpow.pop %v816
      %v818 = vmul.f32 %v759, 1.442695
      %v819 = vpow.pop %v818
      %v820 = vadd.f32 %v761, 1.0
      %v821 = vadd.f32 %v763, 1.0
      %v822 = vadd.f32 %v765, 1.0
      %v823 = vadd.f32 %v767, 1.0
      %v824 = vadd.f32 %v769, 1.0
      %v825 = vadd.f32 %v771, 1.0
      %v826 = vadd.f32 %v773, 1.0
      %v827 = vadd.f32 %v775, 1.0
      %v828 = vadd.f32 %v777, 1.0
      %v829 = vadd.f32 %v779, 1.0
      %v830 = vadd.f32 %v781, 1.0
      %v831 = vadd.f32 %v783, 1.0
      %v832 = vadd.f32 %v785, 1.0
      %v833 = vadd.f32 %v787, 1.0
      %v834 = vadd.f32 %v789, 1.0
      %v835 = vadd.f32 %v791, 1.0
      %v836 = vadd.f32 %v793, 1.0
      %v837 = vadd.f32 %v795, 1.0
      %v838 = vadd.f32 %v797, 1.0
      %v839 = vadd.f32 %v799, 1.0
      %v840 = vadd.f32 %v801, 1.0
      %v841 = vadd.f32 %v803, 1.0
      %v842 = vadd.f32 %v805, 1.0
      %v843 = vadd.f32 %v807, 1.0
      %v844 = vadd.f32 %v809, 1.0
      %v845 = vadd.f32 %v811, 1.0
      %v846 = vadd.f32 %v813, 1.0
      %v847 = vadd.f32 %v815, 1.0
      %v848 = vadd.f32 %v817, 1.0
      %v849 = vadd.f32 %v819, 1.0
      %v850 = vmul.f32 %v820, %v820
      %v851 = vmul.f32 %v821, %v821
      %v852 = vmul.f32 %v822, %v822
      %v853 = vmul.f32 %v823, %v823
      %v854 = vmul.f32 %v824, %v824
      %v855 = vmul.f32 %v825, %v825
      %v856 = vmul.f32 %v826, %v826
      %v857 = vmul.f32 %v827, %v827
      %v858 = vmul.f32 %v828, %v828
      %v859 = vmul.f32 %v829, %v829
      %v860 = vmul.f32 %v830, %v830
      %v861 = vmul.f32 %v831, %v831
      %v862 = vmul.f32 %v832, %v832
      %v863 = vmul.f32 %v833, %v833
      %v864 = vmul.f32 %v834, %v834
      %v865 = vmul.f32 %v835, %v835
      %v866 = vmul.f32 %v836, %v836
      %v867 = vmul.f32 %v837, %v837
      %v868 = vmul.f32 %v838, %v838
      %v869 = vmul.f32 %v839, %v839
      %v870 = vmul.f32 %v840, %v840
      %v871 = vmul.f32 %v841, %v841
      %v872 = vmul.f32 %v842, %v842
      %v873 = vmul.f32 %v843, %v843
      %v874 = vmul.f32 %v844, %v844
      %v875 = vmul.f32 %v845, %v845
      %v876 = vmul.f32 %v846, %v846
      %v877 = vmul.f32 %v847, %v847
      %v878 = vmul.f32 %v848, %v848
      %v879 = vmul.f32 %v849, %v849
      %v880 = vsub.f32 %v850, 1.0
      %v881 = vsub.f32 %v851, 1.0
      %v882 = vsub.f32 %v852, 1.0
      %v883 = vsub.f32 %v853, 1.0
      %v884 = vsub.f32 %v854, 1.0
      %v885 = vsub.f32 %v855, 1.0
      %v886 = vsub.f32 %v856, 1.0
      %v887 = vsub.f32 %v857, 1.0
      %v888 = vsub.f32 %v858, 1.0
      %v889 = vsub.f32 %v859, 1.0
      %v890 = vsub.f32 %v860, 1.0
      %v891 = vsub.f32 %v861, 1.0
      %v892 = vsub.f32 %v862, 1.0
      %v893 = vsub.f32 %v863, 1.0
      %v894 = vsub.f32 %v864, 1.0
      %v895 = vsub.f32 %v865, 1.0
      %v896 = vsub.f32 %v866, 1.0
      %v897 = vsub.f32 %v867, 1.0
      %v898 = vsub.f32 %v868, 1.0
      %v899 = vsub.f32 %v869, 1.0
      %v900 = vsub.f32 %v870, 1.0
      %v901 = vsub.f32 %v871, 1.0
      %v902 = vsub.f32 %v872, 1.0
      %v903 = vsub.f32 %v873, 1.0
      %v904 = vsub.f32 %v874, 1.0
      %v905 = vsub.f32 %v875, 1.0
      %v906 = vsub.f32 %v876, 1.0
      %v907 = vsub.f32 %v877, 1.0
      %v908 = vsub.f32 %v878, 1.0
      %v909 = vsub.f32 %v879, 1.0
      %v910 = vadd.f32 %v850, 1.0
      %v911 = vadd.f32 %v851, 1.0
      %v912 = vadd.f32 %v852, 1.0
      %v913 = vadd.f32 %v853, 1.0
      %v914 = vadd.f32 %v854, 1.0
      %v915 = vadd.f32 %v855, 1.0
      %v916 = vadd.f32 %v856, 1.0
      %v917 = vadd.f32 %v857, 1.0
      %v918 = vadd.f32 %v858, 1.0
      %v919 = vadd.f32 %v859, 1.0
      %v920 = vadd.f32 %v860, 1.0
      %v921 = vadd.f32 %v861, 1.0
      %v922 = vadd.f32 %v862, 1.0
      %v923 = vadd.f32 %v863, 1.0
      %v924 = vadd.f32 %v864, 1.0
      %v925 = vadd.f32 %v865, 1.0
      %v926 = vadd.f32 %v866, 1.0
      %v927 = vadd.f32 %v867, 1.0
      %v928 = vadd.f32 %v868, 1.0
      %v929 = vadd.f32 %v869, 1.0
      %v930 = vadd.f32 %v870, 1.0
      %v931 = vadd.f32 %v871, 1.0
      %v932 = vadd.f32 %v872, 1.0
      %v933 = vadd.f32 %v873, 1.0
      %v934 = vadd.f32 %v874, 1.0
      %v935 = vadd.f32 %v875, 1.0
      %v936 = vadd.f32 %v876, 1.0
      %v937 = vadd.f32 %v877, 1.0
      %v938 = vadd.f32 %v878, 1.0
      %v939 = vadd.f32 %v879, 1.0
      %v940 = vrcp.pop %v910
      %v941 = vmul.f32 %v880, %v940
      %v942 = vrcp.pop %v911
      %v943 = vmul.f32 %v881, %v942
      %v944 = vrcp.pop %v912
      %v945 = vmul.f32 %v882, %v944
      %v946 = vrcp.pop %v913
      %v947 = vmul.f32 %v883, %v946
      %v948 = vrcp.pop %v914
      %v949 = vmul.f32 %v884, %v948
      %v950 = vrcp.pop %v915
      %v951 = vmul.f32 %v885, %v950
      %v952 = vrcp.pop %v916
      %v953 = vmul.f32 %v886, %v952
      %v954 = vrcp.pop %v917
      %v955 = vmul.f32 %v887, %v954
      %v956 = vrcp.pop %v918
      %v957 = vmul.f32 %v888, %v956
      %v958 = vrcp.pop %v919
      %v959 = vmul.f32 %v889, %v958
      %v960 = vrcp.pop %v920
      %v961 = vmul.f32 %v890, %v960
      %v962 = vrcp.pop %v921
      %v963 = vmul.f32 %v891, %v962
      %v964 = vrcp.pop %v922
      %v965 = vmul.f32 %v892, %v964
      %v966 = vrcp.pop %v923
      %v967 = vmul.f32 %v893, %v966
      %v968 = vrcp.pop %v924
      %v969 = vmul.f32 %v894, %v968
      %v970 = vrcp.pop %v925
      %v971 = vmul.f32 %v895, %v970
      %v972 = vrcp.pop %v926
      %v973 = vmul.f32 %v896, %v972
      %v974 = vrcp.pop %v927
      %v975 = vmul.f32 %v897, %v974
      %v976 = vrcp.pop %v928
      %v977 = vmul.f32 %v898, %v976
      %v978 = vrcp.pop %v929
      %v979 = vmul.f32 %v899, %v978
      %v980 = vrcp.pop %v930
      %v981 = vmul.f32 %v900, %v980
      %v982 = vrcp.pop %v931
      %v983 = vmul.f32 %v901, %v982
      %v984 = vrcp.pop %v932
      %v985 = vmul.f32 %v902, %v984
      %v986 = vrcp.pop %v933
      %v987 = vmul.f32 %v903, %v986
      %v988 = vrcp.pop %v934
      %v989 = vmul.f32 %v904, %v988
      %v990 = vrcp.pop %v935
      %v991 = vmul.f32 %v905, %v990
      %v992 = vrcp.pop %v936
      %v993 = vmul.f32 %v906, %v992
      %v994 = vrcp.pop %v937
      %v995 = vmul.f32 %v907, %v994
      %v996 = vrcp.pop %v938
      %v997 = vmul.f32 %v908, %v996
      %v998 = vrcp.pop %v939
      %v999 = vmul.f32 %v909, %v998
      %v1000 = vmul.f32 %v700, %v941
      %v1001 = vmul.f32 %v701, %v943
      %v1002 = vmul.f32 %v702, %v945
      %v1003 = vmul.f32 %v703, %v947
      %v1004 = vmul.f32 %v704, %v949
      %v1005 = vmul.f32 %v705, %v951
      %v1006 = vmul.f32 %v706, %v953
      %v1007 = vmul.f32 %v707, %v955
      %v1008 = vmul.f32 %v708, %v957
      %v1009 = vmul.f32 %v709, %v959
      %v1010 = vmul.f32 %v710, %v961
      %v1011 = vmul.f32 %v711, %v963
      %v1012 = vmul.f32 %v712, %v965
      %v1013 = vmul.f32 %v713, %v967
      %v1014 = vmul.f32 %v714, %v969
      %v1015 = vmul.f32 %v715, %v971
      %v1016 = vmul.f32 %v716, %v973
      %v1017 = vmul.f32 %v717, %v975
      %v1018 = vmul.f32 %v718, %v977
      %v1019 = vmul.f32 %v719, %v979
      %v1020 = vmul.f32 %v720, %v981
      %v1021 = vmul.f32 %v721, %v983
      %v1022 = vmul.f32 %v722, %v985
      %v1023 = vmul.f32 %v723, %v987
      %v1024 = vmul.f32 %v724, %v989
      %v1025 = vmul.f32 %v725, %v991
      %v1026 = vmul.f32 %v726, %v993
      %v1027 = vmul.f32 %v727, %v995
      %v1028 = vmul.f32 %v728, %v997
      %v1029 = vmul.f32 %v729, %v999
      %v1030 = vlaneseq
      %v1031 = vshrl.u32 %v1030, 7
      %v1032 = vadd.s32 %v1031, 8
      %v1033 = vadd.s32 %v1031, 16
      %vm1034 = vcmp.ge.s32.totalorder %v1031, 1
      %vm1035 = vcmp.ge.s32.totalorder %v1032, 1
      %vm1036 = vcmp.ge.s32.totalorder %v1033, 1
      %vm1037 = vcmp.le.s32.totalorder %v1031, 16
      %vm1038 = vcmp.le.s32.totalorder %v1032, 16
      %vm1039 = vcmp.le.s32.totalorder %v1033, 16
      %vm1040 = vmand %vm1034, %vm1037
      %vm1041 = vmand %vm1035, %vm1038
      %vm1042 = vmand %vm1036, %vm1039
      %p1043 = scmp.gt.s32.totalorder %s23, 0
      %s1044 = scalar_select %p1043, 1, 0
      %v1045 = vstv %s1044
      %vm1046 = vcmp.eq.s32.totalorder %v1045, 1
      %vm1047 = vmand %vm1040, %vm1046
      %vm1048 = vmand %vm1041, %vm1046
      %vm1049 = vmand %vm1042, %vm1046
      %vm1050 = vmand %vm1040, 1
      %vm1051 = vmand %vm1041, 1
      %vm1052 = vmand %vm1042, 1
      %p1053 = scmp.lt.s32.totalorder %s23, 1
      %s1054 = scalar_select %p1053, 1, 0
      %v1055 = vstv %s1054
      %vm1056 = vcmp.eq.s32.totalorder %v1055, 1
      %vm1057 = vmand %vm1047, 1
      %vm1058 = vmand %vm1048, 1
      %vm1059 = vmand %vm1049, 1
      %vm1060 = vmand %vm1050, %vm1056
      %vm1061 = vmand %vm1051, %vm1056
      %vm1062 = vmand %vm1052, %vm1056
      %v1063 = vsel %vm1057, %v1000, 0.0
      %v1064 = vsel %vm1058, %v1001, 0.0
      %v1065 = vsel %vm1059, %v1002, 0.0
      %v1066 = vsel %vm1050, %v1003, 0.0
      %v1067 = vsel %vm1051, %v1004, 0.0
      %v1068 = vsel %vm1052, %v1005, 0.0
      %v1069 = vsel %vm1050, %v1006, 0.0
      %v1070 = vsel %vm1051, %v1007, 0.0
      %v1071 = vsel %vm1052, %v1008, 0.0
      %v1072 = vsel %vm1050, %v1009, 0.0
      %v1073 = vsel %vm1051, %v1010, 0.0
      %v1074 = vsel %vm1052, %v1011, 0.0
      %v1075 = vsel %vm1050, %v1012, 0.0
      %v1076 = vsel %vm1051, %v1013, 0.0
      %v1077 = vsel %vm1052, %v1014, 0.0
      %v1078 = vsel %vm1050, %v1015, 0.0
      %v1079 = vsel %vm1051, %v1016, 0.0
      %v1080 = vsel %vm1052, %v1017, 0.0
      %v1081 = vsel %vm1050, %v1018, 0.0
      %v1082 = vsel %vm1051, %v1019, 0.0
      %v1083 = vsel %vm1052, %v1020, 0.0
      %v1084 = vsel %vm1050, %v1021, 0.0
      %v1085 = vsel %vm1051, %v1022, 0.0
      %v1086 = vsel %vm1052, %v1023, 0.0
      %v1087 = vsel %vm1050, %v1024, 0.0
      %v1088 = vsel %vm1051, %v1025, 0.0
      %v1089 = vsel %vm1052, %v1026, 0.0
      %v1090 = vsel %vm1060, %v1027, 0.0
      %v1091 = vsel %vm1061, %v1028, 0.0
      %v1092 = vsel %vm1062, %v1029, 0.0
      %1093 = vst.msk [vmem:[#allocation2] sm:$0xff] %vm346, %v1063
      %1094 = vst.msk [vmem:[#allocation2 + $0x8] sm:$0xff] %vm346, %v1064
      %1095 = vst.msk [vmem:[#allocation2 + $0x10] sm:$0xff] %vm346, %v1065
      %1096 = vst.msk [vmem:[#allocation2 + $0x18] sm:$0xff] %vm346, %v1066
      %1097 = vst.msk [vmem:[#allocation2 + $0x20] sm:$0xff] %vm346, %v1067
      %1098 = vst.msk [vmem:[#allocation2 + $0x28] sm:$0xff] %vm346, %v1068
      %1099 = vst.msk [vmem:[#allocation2 + $0x30] sm:$0xff] %vm346, %v1069
      %1100 = vst.msk [vmem:[#allocation2 + $0x38] sm:$0xff] %vm346, %v1070
      %1101 = vst.msk [vmem:[#allocation2 + $0x40] sm:$0xff] %vm346, %v1071
      %1102 = vst.msk [vmem:[#allocation2 + $0x48] sm:$0xff] %vm346, %v1072
      %1103 = vst.msk [vmem:[#allocation2 + $0x50] sm:$0xff] %vm346, %v1073
      %1104 = vst.msk [vmem:[#allocation2 + $0x58] sm:$0xff] %vm346, %v1074
      %1105 = vst.msk [vmem:[#allocation2 + $0x60] sm:$0xff] %vm346, %v1075
      %1106 = vst.msk [vmem:[#allocation2 + $0x68] sm:$0xff] %vm346, %v1076
      %1107 = vst.msk [vmem:[#allocation2 + $0x70] sm:$0xff] %vm346, %v1077
      %1108 = vst.msk [vmem:[#allocation2 + $0x78] sm:$0xff] %vm346, %v1078
      %1109 = vst.msk [vmem:[#allocation2 + $0x80] sm:$0xff] %vm346, %v1079
      %1110 = vst.msk [vmem:[#allocation2 + $0x88] sm:$0xff] %vm346, %v1080
      %1111 = vst.msk [vmem:[#allocation2 + $0x90] sm:$0xff] %vm346, %v1081
      %1112 = vst.msk [vmem:[#allocation2 + $0x98] sm:$0xff] %vm346, %v1082
      %1113 = vst.msk [vmem:[#allocation2 + $0xa0] sm:$0xff] %vm346, %v1083
      %1114 = vst.msk [vmem:[#allocation2 + $0xa8] sm:$0xff] %vm346, %v1084
      %1115 = vst.msk [vmem:[#allocation2 + $0xb0] sm:$0xff] %vm346, %v1085
      %1116 = vst.msk [vmem:[#allocation2 + $0xb8] sm:$0xff] %vm346, %v1086
      %1117 = vst.msk [vmem:[#allocation2 + $0xc0] sm:$0xff] %vm346, %v1087
      %1118 = vst.msk [vmem:[#allocation2 + $0xc8] sm:$0xff] %vm346, %v1088
      %1119 = vst.msk [vmem:[#allocation2 + $0xd0] sm:$0xff] %vm346, %v1089
      %1120 = vst.msk [vmem:[#allocation2 + $0xd8] sm:$0xff] %vm346, %v1090
      %1121 = vst.msk [vmem:[#allocation2 + $0xe0] sm:$0xff] %vm346, %v1091
      %1122 = vst.msk [vmem:[#allocation2 + $0xe8] sm:$0xff] %vm346, %v1092
      %v1123 = vld [vmem:[#allocation2] sm:$0xff]
      %v1124 = vld [vmem:[#allocation2 + $0x8] sm:$0xff]
      %v1125 = vld [vmem:[#allocation2 + $0x18] sm:$0xff]
      %v1126 = vld [vmem:[#allocation2 + $0x20] sm:$0xff]
      %v1127 = vld [vmem:[#allocation2 + $0x30] sm:$0xff]
      %v1128 = vld [vmem:[#allocation2 + $0x38] sm:$0xff]
      %v1129 = vld [vmem:[#allocation2 + $0x48] sm:$0xff]
      %v1130 = vld [vmem:[#allocation2 + $0x50] sm:$0xff]
      %v1131 = vld [vmem:[#allocation2 + $0x60] sm:$0xff]
      %v1132 = vld [vmem:[#allocation2 + $0x68] sm:$0xff]
      %v1133 = vld [vmem:[#allocation2 + $0x78] sm:$0xff]
      %v1134 = vld [vmem:[#allocation2 + $0x80] sm:$0xff]
      %v1135 = vld [vmem:[#allocation2 + $0x90] sm:$0xff]
      %v1136 = vld [vmem:[#allocation2 + $0x98] sm:$0xff]
      %v1137 = vld [vmem:[#allocation2 + $0xa8] sm:$0xff]
      %v1138 = vld [vmem:[#allocation2 + $0xb0] sm:$0xff]
      %v1139 = vld [vmem:[#allocation2 + $0x1] sm:$0xff]
      %v1140 = vld [vmem:[#allocation2 + $0x9] sm:$0xff]
      %v1141 = vld [vmem:[#allocation2 + $0x19] sm:$0xff]
      %v1142 = vld [vmem:[#allocation2 + $0x21] sm:$0xff]
      %v1143 = vld [vmem:[#allocation2 + $0x31] sm:$0xff]
      %v1144 = vld [vmem:[#allocation2 + $0x39] sm:$0xff]
      %v1145 = vld [vmem:[#allocation2 + $0x49] sm:$0xff]
      %v1146 = vld [vmem:[#allocation2 + $0x51] sm:$0xff]
      %v1147 = vld [vmem:[#allocation2 + $0x61] sm:$0xff]
      %v1148 = vld [vmem:[#allocation2 + $0x69] sm:$0xff]
      %v1149 = vld [vmem:[#allocation2 + $0x79] sm:$0xff]
      %v1150 = vld [vmem:[#allocation2 + $0x81] sm:$0xff]
      %v1151 = vld [vmem:[#allocation2 + $0x91] sm:$0xff]
      %v1152 = vld [vmem:[#allocation2 + $0x99] sm:$0xff]
      %v1153 = vld [vmem:[#allocation2 + $0xa9] sm:$0xff]
      %v1154 = vld [vmem:[#allocation2 + $0xb1] sm:$0xff]
      %v1155 = vld [vmem:[#allocation2 + $0x2] sm:$0xff]
      %v1156 = vld [vmem:[#allocation2 + $0xa] sm:$0xff]
      %v1157 = vld [vmem:[#allocation2 + $0x1a] sm:$0xff]
      %v1158 = vld [vmem:[#allocation2 + $0x22] sm:$0xff]
      %v1159 = vld [vmem:[#allocation2 + $0x32] sm:$0xff]
      %v1160 = vld [vmem:[#allocation2 + $0x3a] sm:$0xff]
      %v1161 = vld [vmem:[#allocation2 + $0x4a] sm:$0xff]
      %v1162 = vld [vmem:[#allocation2 + $0x52] sm:$0xff]
      %v1163 = vld [vmem:[#allocation2 + $0x62] sm:$0xff]
      %v1164 = vld [vmem:[#allocation2 + $0x6a] sm:$0xff]
      %v1165 = vld [vmem:[#allocation2 + $0x7a] sm:$0xff]
      %v1166 = vld [vmem:[#allocation2 + $0x82] sm:$0xff]
      %v1167 = vld [vmem:[#allocation2 + $0x92] sm:$0xff]
      %v1168 = vld [vmem:[#allocation2 + $0x9a] sm:$0xff]
      %v1169 = vld [vmem:[#allocation2 + $0xaa] sm:$0xff]
      %v1170 = vld [vmem:[#allocation2 + $0xb2] sm:$0xff]
      %s1171 = scalar_lea.vmem [#allocation2], 24
      %v1172 = vld [vmem:[%s1171] sm:$0xff]
      %v1173 = vld [vmem:[%s1171 + $0x8] sm:$0xff]
      %v1174 = vld [vmem:[%s1171 + $0x18] sm:$0xff]
      %v1175 = vld [vmem:[%s1171 + $0x20] sm:$0xff]
      %v1176 = vld [vmem:[%s1171 + $0x30] sm:$0xff]
      %v1177 = vld [vmem:[%s1171 + $0x38] sm:$0xff]
      %v1178 = vld [vmem:[%s1171 + $0x48] sm:$0xff]
      %v1179 = vld [vmem:[%s1171 + $0x50] sm:$0xff]
      %v1180 = vld [vmem:[%s1171 + $0x60] sm:$0xff]
      %v1181 = vld [vmem:[%s1171 + $0x68] sm:$0xff]
      %v1182 = vld [vmem:[%s1171 + $0x78] sm:$0xff]
      %v1183 = vld [vmem:[%s1171 + $0x80] sm:$0xff]
      %v1184 = vld [vmem:[%s1171 + $0x90] sm:$0xff]
      %v1185 = vld [vmem:[%s1171 + $0x98] sm:$0xff]
      %v1186 = vld [vmem:[%s1171 + $0xa8] sm:$0xff]
      %v1187 = vld [vmem:[%s1171 + $0xb0] sm:$0xff]
      %v1188 = vld [vmem:[%s1171 + $0x1] sm:$0xff]
      %v1189 = vld [vmem:[%s1171 + $0x9] sm:$0xff]
      %v1190 = vld [vmem:[%s1171 + $0x19] sm:$0xff]
      %v1191 = vld [vmem:[%s1171 + $0x21] sm:$0xff]
      %v1192 = vld [vmem:[%s1171 + $0x31] sm:$0xff]
      %v1193 = vld [vmem:[%s1171 + $0x39] sm:$0xff]
      %v1194 = vld [vmem:[%s1171 + $0x49] sm:$0xff]
      %v1195 = vld [vmem:[%s1171 + $0x51] sm:$0xff]
      %v1196 = vld [vmem:[%s1171 + $0x61] sm:$0xff]
      %v1197 = vld [vmem:[%s1171 + $0x69] sm:$0xff]
      %v1198 = vld [vmem:[%s1171 + $0x79] sm:$0xff]
      %v1199 = vld [vmem:[%s1171 + $0x81] sm:$0xff]
      %v1200 = vld [vmem:[%s1171 + $0x91] sm:$0xff]
      %v1201 = vld [vmem:[%s1171 + $0x99] sm:$0xff]
      %v1202 = vld [vmem:[%s1171 + $0xa9] sm:$0xff]
      %v1203 = vld [vmem:[%s1171 + $0xb1] sm:$0xff]
      %v1204 = vld [vmem:[%s1171 + $0x2] sm:$0xff]
      %v1205 = vld [vmem:[%s1171 + $0xa] sm:$0xff]
      %v1206 = vld [vmem:[%s1171 + $0x1a] sm:$0xff]
      %v1207 = vld [vmem:[%s1171 + $0x22] sm:$0xff]
      %v1208 = vld [vmem:[%s1171 + $0x32] sm:$0xff]
      %v1209 = vld [vmem:[%s1171 + $0x3a] sm:$0xff]
      %v1210 = vld [vmem:[%s1171 + $0x4a] sm:$0xff]
      %v1211 = vld [vmem:[%s1171 + $0x52] sm:$0xff]
      %v1212 = vld [vmem:[%s1171 + $0x62] sm:$0xff]
      %v1213 = vld [vmem:[%s1171 + $0x6a] sm:$0xff]
      %v1214 = vld [vmem:[%s1171 + $0x7a] sm:$0xff]
      %v1215 = vld [vmem:[%s1171 + $0x82] sm:$0xff]
      %v1216 = vld [vmem:[%s1171 + $0x92] sm:$0xff]
      %v1217 = vld [vmem:[%s1171 + $0x9a] sm:$0xff]
      %v1218 = vld [vmem:[%s1171 + $0xaa] sm:$0xff]
      %v1219 = vld [vmem:[%s1171 + $0xb2] sm:$0xff]
      %s1220 = scalar_lea.vmem [#allocation2], 48
      %v1221 = vld [vmem:[%s1220] sm:$0xff]
      %v1222 = vld [vmem:[%s1220 + $0x8] sm:$0xff]
      %v1223 = vld [vmem:[%s1220 + $0x18] sm:$0xff]
      %v1224 = vld [vmem:[%s1220 + $0x20] sm:$0xff]
      %v1225 = vld [vmem:[%s1220 + $0x30] sm:$0xff]
      %v1226 = vld [vmem:[%s1220 + $0x38] sm:$0xff]
      %v1227 = vld [vmem:[%s1220 + $0x48] sm:$0xff]
      %v1228 = vld [vmem:[%s1220 + $0x50] sm:$0xff]
      %v1229 = vld [vmem:[%s1220 + $0x60] sm:$0xff]
      %v1230 = vld [vmem:[%s1220 + $0x68] sm:$0xff]
      %v1231 = vld [vmem:[%s1220 + $0x78] sm:$0xff]
      %v1232 = vld [vmem:[%s1220 + $0x80] sm:$0xff]
      %v1233 = vld [vmem:[%s1220 + $0x90] sm:$0xff]
      %v1234 = vld [vmem:[%s1220 + $0x98] sm:$0xff]
      %v1235 = vld [vmem:[%s1220 + $0xa8] sm:$0xff]
      %v1236 = vld [vmem:[%s1220 + $0xb0] sm:$0xff]
      %v1237 = vld [vmem:[%s1220 + $0x1] sm:$0xff]
      %v1238 = vld [vmem:[%s1220 + $0x9] sm:$0xff]
      %v1239 = vld [vmem:[%s1220 + $0x19] sm:$0xff]
      %v1240 = vld [vmem:[%s1220 + $0x21] sm:$0xff]
      %v1241 = vld [vmem:[%s1220 + $0x31] sm:$0xff]
      %v1242 = vld [vmem:[%s1220 + $0x39] sm:$0xff]
      %v1243 = vld [vmem:[%s1220 + $0x49] sm:$0xff]
      %v1244 = vld [vmem:[%s1220 + $0x51] sm:$0xff]
      %v1245 = vld [vmem:[%s1220 + $0x61] sm:$0xff]
      %v1246 = vld [vmem:[%s1220 + $0x69] sm:$0xff]
      %v1247 = vld [vmem:[%s1220 + $0x79] sm:$0xff]
      %v1248 = vld [vmem:[%s1220 + $0x81] sm:$0xff]
      %v1249 = vld [vmem:[%s1220 + $0x91] sm:$0xff]
      %v1250 = vld [vmem:[%s1220 + $0x99] sm:$0xff]
      %v1251 = vld [vmem:[%s1220 + $0xa9] sm:$0xff]
      %v1252 = vld [vmem:[%s1220 + $0xb1] sm:$0xff]
      %v1253 = vld [vmem:[%s1220 + $0x2] sm:$0xff]
      %v1254 = vld [vmem:[%s1220 + $0xa] sm:$0xff]
      %v1255 = vld [vmem:[%s1220 + $0x1a] sm:$0xff]
      %v1256 = vld [vmem:[%s1220 + $0x22] sm:$0xff]
      %v1257 = vld [vmem:[%s1220 + $0x32] sm:$0xff]
      %v1258 = vld [vmem:[%s1220 + $0x3a] sm:$0xff]
      %v1259 = vld [vmem:[%s1220 + $0x4a] sm:$0xff]
      %v1260 = vld [vmem:[%s1220 + $0x52] sm:$0xff]
      %v1261 = vld [vmem:[%s1220 + $0x62] sm:$0xff]
      %v1262 = vld [vmem:[%s1220 + $0x6a] sm:$0xff]
      %v1263 = vld [vmem:[%s1220 + $0x7a] sm:$0xff]
      %v1264 = vld [vmem:[%s1220 + $0x82] sm:$0xff]
      %v1265 = vld [vmem:[%s1220 + $0x92] sm:$0xff]
      %v1266 = vld [vmem:[%s1220 + $0x9a] sm:$0xff]
      %v1267 = vld [vmem:[%s1220 + $0xaa] sm:$0xff]
      %v1268 = vld [vmem:[%s1220 + $0xb2] sm:$0xff]
      %v1269 = vld [vmem:[%s4] sm:$0xf]
      %v1270 = vld [vmem:[%s4 + $0x4] sm:$0xf]
      %v1272 = vsel %vm346, %v1139, 0
      %v1275 = vsel %vm346, %v1140, 0
      %v1278 = vsel %vm346, %v1141, 0
      %v1281 = vsel %vm346, %v1142, 0
      %v1284 = vsel %vm346, %v1143, 0
      %v1287 = vsel %vm346, %v1144, 0
      %v1290 = vsel %vm346, %v1145, 0
      %v1293 = vsel %vm346, %v1146, 0
      %v1296 = vsel %vm346, %v1147, 0
      %v1299 = vsel %vm346, %v1148, 0
      %v1302 = vsel %vm346, %v1149, 0
      %v1305 = vsel %vm346, %v1150, 0
      %v1308 = vsel %vm346, %v1151, 0
      %v1311 = vsel %vm346, %v1152, 0
      %v1314 = vsel %vm346, %v1153, 0
      %v1317 = vsel %vm346, %v1154, 0
      %v1320 = vsel %vm437, %v1270, 0
      %1322 = vmatprep.subr.mxu0 0.0
      %1323 = vmatpush1.msra.mxu0 %v1320
      %1324 = vmatprep.subr.mxu0 0.0
      %1325 = vmatpush1.msra.mxu0 0.0
      %1326 = vmatprep.subr.mxu0 0.0
      %1327 = vmatpush1.msra.mxu0 0.0
      %1328 = vmatprep.subr.mxu0 0.0
      %1329 = vmatpush1.msra.mxu0 0.0
      %1330 = vmatprep.subr.mxu0 0.0
      %1331 = vmatpush1.msra.mxu0 0.0
      %1332 = vmatprep.subr.mxu0 0.0
      %1333 = vmatpush1.msra.mxu0 0.0
      %1334 = vmatprep.subr.mxu0 0.0
      %1335 = vmatpush1.msra.mxu0 0.0
      %1336 = vmatprep.subr.mxu0 0.0
      %1337 = vmatpush1.msra.mxu0 0.0
      %1338 = vmatprep.subr.mxu0 0.0
      %1339 = vmatpush1.msra.mxu0 0.0
      %1340 = vmatprep.subr.mxu0 0.0
      %1341 = vmatpush1.msra.mxu0 0.0
      %1342 = vmatprep.subr.mxu0 0.0
      %1343 = vmatpush1.msra.mxu0 0.0
      %1344 = vmatprep.subr.mxu0 0.0
      %1345 = vmatpush1.msra.mxu0 0.0
      %1346 = vmatprep.subr.mxu0 0.0
      %1347 = vmatpush1.msra.mxu0 0.0
      %1348 = vmatprep.subr.mxu0 0.0
      %1349 = vmatpush1.msra.mxu0 0.0
      %1350 = vmatprep.subr.mxu0 0.0
      %1351 = vmatpush1.msra.mxu0 0.0
      %1352 = vmatprep.subr.mxu0 0.0
      %1353 = vmatpush1.msra.mxu0 0.0
      %1354 = vmatprep.subr.mxu0 0.0
      %1355 = vmatpush1.msra.mxu0 0.0
      %1356 = vmatprep.subr.mxu0 0.0
      %1357 = vmatpush1.msra.mxu0 0.0
      %1358 = vmatprep.subr.mxu0 0.0
      %1359 = vmatpush1.msra.mxu0 0.0
      %1360 = vmatprep.subr.mxu0 0.0
      %1361 = vmatpush1.msra.mxu0 0.0
      %1362 = vmatprep.subr.mxu0 0.0
      %1363 = vmatpush1.msra.mxu0 0.0
      %1364 = vmatprep.subr.mxu0 0.0
      %1365 = vmatpush1.msra.mxu0 0.0
      %1366 = vmatprep.subr.mxu0 0.0
      %1367 = vmatpush1.msra.mxu0 0.0
      %1368 = vmatprep.subr.mxu0 0.0
      %1369 = vmatpush1.msra.mxu0 0.0
      %1370 = vmatprep.subr.mxu0 0.0
      %1371 = vmatpush1.msra.mxu0 0.0
      %1372 = vmatprep.subr.mxu0 0.0
      %1373 = vmatpush1.msra.mxu0 0.0
      %1374 = vmatprep.subr.mxu0 0.0
      %1375 = vmatpush1.msra.mxu0 0.0
      %1376 = vmatprep.subr.mxu0 0.0
      %1377 = vmatpush1.msra.mxu0 0.0
      %1378 = vmatprep.subr.mxu0 0.0
      %1379 = vmatpush1.msra.mxu0 0.0
      %1380 = vmatprep.subr.mxu0 0.0
      %1381 = vmatpush1.msra.mxu0 0.0
      %1382 = vmatprep.subr.mxu0 0.0
      %1383 = vmatpush1.msra.mxu0 0.0
      %1384 = vmatprep.subr.mxu0 0.0
      %1385 = vmatpush1.msra.mxu0 0.0
      %1386 = vmatprep.mubr.f32.mxu0 0.0
      %1387 = vmatmul.mubr.f32.gmra.mrb[0].mxu0 %v1272
      %v1388 = vpop.f32.mrb[0].mxu0
      %v1389 = vadd.f32 0.0, %v1388
      %v1390 = vpop.f32.mrb[0].mxu0
      %1391 = vmatprep.mubr.f32.mxu0 0.0
      %1392 = vmatmul.mubr.f32.gmra.mrb[0].mxu0 %v1275
      %v1393 = vpop.f32.mrb[0].mxu0
      %v1394 = vadd.f32 0.0, %v1393
      %v1395 = vpop.f32.mrb[0].mxu0
      %1396 = vmatprep.mubr.f32.mxu0 0.0
      %1397 = vmatmul.mubr.f32.gmra.mrb[0].mxu0 %v1278
      %v1398 = vpop.f32.mrb[0].mxu0
      %v1399 = vadd.f32 0.0, %v1398
      %v1400 = vpop.f32.mrb[0].mxu0
      %1401 = vmatprep.mubr.f32.mxu0 0.0
      %1402 = vmatmul.mubr.f32.gmra.mrb[0].mxu0 %v1281
      %v1403 = vpop.f32.mrb[0].mxu0
      %v1404 = vadd.f32 0.0, %v1403
      %v1405 = vpop.f32.mrb[0].mxu0
      %1406 = vmatprep.mubr.f32.mxu0 0.0
      %1407 = vmatmul.mubr.f32.gmra.mrb[0].mxu0 %v1284
      %v1408 = vpop.f32.mrb[0].mxu0
      %v1409 = vadd.f32 0.0, %v1408
      %v1410 = vpop.f32.mrb[0].mxu0
      %1411 = vmatprep.mubr.f32.mxu0 0.0
      %1412 = vmatmul.mubr.f32.gmra.mrb[0].mxu0 %v1287
      %v1413 = vpop.f32.mrb[0].mxu0
      %v1414 = vadd.f32 0.0, %v1413
      %v1415 = vpop.f32.mrb[0].mxu0
      %1416 = vmatprep.mubr.f32.mxu0 0.0
      %1417 = vmatmul.mubr.f32.gmra.mrb[0].mxu0 %v1290
      %v1418 = vpop.f32.mrb[0].mxu0
      %v1419 = vadd.f32 0.0, %v1418
      %v1420 = vpop.f32.mrb[0].mxu0
      %1421 = vmatprep.mubr.f32.mxu0 0.0
      %1422 = vmatmul.mubr.f32.gmra.mrb[0].mxu0 %v1293
      %v1423 = vpop.f32.mrb[0].mxu0
      %v1424 = vadd.f32 0.0, %v1423
      %v1425 = vpop.f32.mrb[0].mxu0
      %1426 = vmatprep.mubr.f32.mxu0 0.0
      %1427 = vmatmul.mubr.f32.gmra.mrb[0].mxu0 %v1296
      %v1428 = vpop.f32.mrb[0].mxu0
      %v1429 = vadd.f32 0.0, %v1428
      %v1430 = vpop.f32.mrb[0].mxu0
      %1431 = vmatprep.mubr.f32.mxu0 0.0
      %1432 = vmatmul.mubr.f32.gmra.mrb[0].mxu0 %v1299
      %v1433 = vpop.f32.mrb[0].mxu0
      %v1434 = vadd.f32 0.0, %v1433
      %v1435 = vpop.f32.mrb[0].mxu0
      %1436 = vmatprep.mubr.f32.mxu0 0.0
      %1437 = vmatmul.mubr.f32.gmra.mrb[0].mxu0 %v1302
      %v1438 = vpop.f32.mrb[0].mxu0
      %v1439 = vadd.f32 0.0, %v1438
      %v1440 = vpop.f32.mrb[0].mxu0
      %1441 = vmatprep.mubr.f32.mxu0 0.0
      %1442 = vmatmul.mubr.f32.gmra.mrb[0].mxu0 %v1305
      %v1443 = vpop.f32.mrb[0].mxu0
      %v1444 = vadd.f32 0.0, %v1443
      %v1445 = vpop.f32.mrb[0].mxu0
      %1446 = vmatprep.mubr.f32.mxu0 0.0
      %1447 = vmatmul.mubr.f32.gmra.mrb[0].mxu0 %v1308
      %v1448 = vpop.f32.mrb[0].mxu0
      %v1449 = vadd.f32 0.0, %v1448
      %v1450 = vpop.f32.mrb[0].mxu0
      %1451 = vmatprep.mubr.f32.mxu0 0.0
      %1452 = vmatmul.mubr.f32.gmra.mrb[0].mxu0 %v1311
      %v1453 = vpop.f32.mrb[0].mxu0
      %v1454 = vadd.f32 0.0, %v1453
      %v1455 = vpop.f32.mrb[0].mxu0
      %1456 = vmatprep.mubr.f32.mxu0 0.0
      %1457 = vmatmul.mubr.f32.gmra.mrb[0].mxu0 %v1314
      %v1458 = vpop.f32.mrb[0].mxu0
      %v1459 = vadd.f32 0.0, %v1458
      %v1460 = vpop.f32.mrb[0].mxu0
      %1461 = vmatprep.mubr.f32.mxu0 0.0
      %1462 = vmatmul.mubr.f32.gmra.mrb[0].mxu0 %v1317
      %v1463 = vpop.f32.mrb[0].mxu0
      %v1464 = vadd.f32 0.0, %v1463
      %v1465 = vpop.f32.mrb[0].mxu0
      %1466 = vdwg.mxu0
      %v1468 = vsel %vm346, %v1123, 0
      %v1471 = vsel %vm346, %v1124, 0
      %v1474 = vsel %vm346, %v1125, 0
      %v1477 = vsel %vm346, %v1126, 0
      %v1480 = vsel %vm346, %v1127, 0
      %v1483 = vsel %vm346, %v1128, 0
      %v1486 = vsel %vm346, %v1129, 0
      %v1489 = vsel %vm346, %v1130, 0
      %v1492 = vsel %vm346, %v1131, 0
      %v1495 = vsel %vm346, %v1132, 0
      %v1498 = vsel %vm346, %v1133, 0
      %v1501 = vsel %vm346, %v1134, 0
      %v1504 = vsel %vm346, %v1135, 0
      %v1507 = vsel %vm346, %v1136, 0
      %v1510 = vsel %vm346, %v1137, 0
      %v1513 = vsel %vm346, %v1138, 0
      %v1516 = vsel %vm437, %v1269, 0
      %1518 = vmatprep.subr.mxu0 0.0
      %1519 = vmatpush1.msra.mxu0 %v1516
      %1520 = vmatprep.subr.mxu0 0.0
      %1521 = vmatpush1.msra.mxu0 0.0
      %1522 = vmatprep.subr.mxu0 0.0
      %1523 = vmatpush1.msra.mxu0 0.0
      %1524 = vmatprep.subr.mxu0 0.0
      %1525 = vmatpush1.msra.mxu0 0.0
      %1526 = vmatprep.subr.mxu0 0.0
      %1527 = vmatpush1.msra.mxu0 0.0
      %1528 = vmatprep.subr.mxu0 0.0
      %1529 = vmatpush1.msra.mxu0 0.0
      %1530 = vmatprep.subr.mxu0 0.0
      %1531 = vmatpush1.msra.mxu0 0.0
      %1532 = vmatprep.subr.mxu0 0.0
      %1533 = vmatpush1.msra.mxu0 0.0
      %1534 = vmatprep.subr.mxu0 0.0
      %1535 = vmatpush1.msra.mxu0 0.0
      %1536 = vmatprep.subr.mxu0 0.0
      %1537 = vmatpush1.msra.mxu0 0.0
      %1538 = vmatprep.subr.mxu0 0.0
      %1539 = vmatpush1.msra.mxu0 0.0
      %1540 = vmatprep.subr.mxu0 0.0
      %1541 = vmatpush1.msra.mxu0 0.0
      %1542 = vmatprep.subr.mxu0 0.0
      %1543 = vmatpush1.msra.mxu0 0.0
      %1544 = vmatprep.subr.mxu0 0.0
      %1545 = vmatpush1.msra.mxu0 0.0
      %1546 = vmatprep.subr.mxu0 0.0
      %1547 = vmatpush1.msra.mxu0 0.0
      %1548 = vmatprep.subr.mxu0 0.0
      %1549 = vmatpush1.msra.mxu0 0.0
      %1550 = vmatprep.subr.mxu0 0.0
      %1551 = vmatpush1.msra.mxu0 0.0
      %1552 = vmatprep.subr.mxu0 0.0
      %1553 = vmatpush1.msra.mxu0 0.0
      %1554 = vmatprep.subr.mxu0 0.0
      %1555 = vmatpush1.msra.mxu0 0.0
      %1556 = vmatprep.subr.mxu0 0.0
      %1557 = vmatpush1.msra.mxu0 0.0
      %1558 = vmatprep.subr.mxu0 0.0
      %1559 = vmatpush1.msra.mxu0 0.0
      %1560 = vmatprep.subr.mxu0 0.0
      %1561 = vmatpush1.msra.mxu0 0.0
      %1562 = vmatprep.subr.mxu0 0.0
      %1563 = vmatpush1.msra.mxu0 0.0
      %1564 = vmatprep.subr.mxu0 0.0
      %1565 = vmatpush1.msra.mxu0 0.0
      %1566 = vmatprep.subr.mxu0 0.0
      %1567 = vmatpush1.msra.mxu0 0.0
      %1568 = vmatprep.subr.mxu0 0.0
      %1569 = vmatpush1.msra.mxu0 0.0
      %1570 = vmatprep.subr.mxu0 0.0
      %1571 = vmatpush1.msra.mxu0 0.0
      %1572 = vmatprep.subr.mxu0 0.0
      %1573 = vmatpush1.msra.mxu0 0.0
      %1574 = vmatprep.subr.mxu0 0.0
      %1575 = vmatpush1.msra.mxu0 0.0
      %1576 = vmatprep.subr.mxu0 0.0
      %1577 = vmatpush1.msra.mxu0 0.0
      %1578 = vmatprep.subr.mxu0 0.0
      %1579 = vmatpush1.msra.mxu0 0.0
      %1580 = vmatprep.subr.mxu0 0.0
      %1581 = vmatpush1.msra.mxu0 0.0
      %1582 = vmatprep.mubr.f32.mxu0 0.0
      %1583 = vmatmul.mubr.f32.gmra.mrb[0].mxu0 %v1468
      %v1584 = vpop.f32.mrb[0].mxu0
      %v1585 = vadd.f32 %v1389, %v1584
      %v1586 = vpop.f32.mrb[0].mxu0
      %1587 = vmatprep.mubr.f32.mxu0 0.0
      %1588 = vmatmul.mubr.f32.gmra.mrb[0].mxu0 %v1471
      %v1589 = vpop.f32.mrb[0].mxu0
      %v1590 = vadd.f32 %v1394, %v1589
      %v1591 = vpop.f32.mrb[0].mxu0
      %1592 = vmatprep.mubr.f32.mxu0 0.0
      %1593 = vmatmul.mubr.f32.gmra.mrb[0].mxu0 %v1474
      %v1594 = vpop.f32.mrb[0].mxu0
      %v1595 = vadd.f32 %v1399, %v1594
      %v1596 = vpop.f32.mrb[0].mxu0
      %1597 = vmatprep.mubr.f32.mxu0 0.0
      %1598 = vmatmul.mubr.f32.gmra.mrb[0].mxu0 %v1477
      %v1599 = vpop.f32.mrb[0].mxu0
      %v1600 = vadd.f32 %v1404, %v1599
      %v1601 = vpop.f32.mrb[0].mxu0
      %1602 = vmatprep.mubr.f32.mxu0 0.0
      %1603 = vmatmul.mubr.f32.gmra.mrb[0].mxu0 %v1480
      %v1604 = vpop.f32.mrb[0].mxu0
      %v1605 = vadd.f32 %v1409, %v1604
      %v1606 = vpop.f32.mrb[0].mxu0
      %1607 = vmatprep.mubr.f32.mxu0 0.0
      %1608 = vmatmul.mubr.f32.gmra.mrb[0].mxu0 %v1483
      %v1609 = vpop.f32.mrb[0].mxu0
      %v1610 = vadd.f32 %v1414, %v1609
      %v1611 = vpop.f32.mrb[0].mxu0
      %1612 = vmatprep.mubr.f32.mxu0 0.0
      %1613 = vmatmul.mubr.f32.gmra.mrb[0].mxu0 %v1486
      %v1614 = vpop.f32.mrb[0].mxu0
      %v1615 = vadd.f32 %v1419, %v1614
      %v1616 = vpop.f32.mrb[0].mxu0
      %1617 = vmatprep.mubr.f32.mxu0 0.0
      %1618 = vmatmul.mubr.f32.gmra.mrb[0].mxu0 %v1489
      %v1619 = vpop.f32.mrb[0].mxu0
      %v1620 = vadd.f32 %v1424, %v1619
      %v1621 = vpop.f32.mrb[0].mxu0
      %1622 = vmatprep.mubr.f32.mxu0 0.0
      %1623 = vmatmul.mubr.f32.gmra.mrb[0].mxu0 %v1492
      %v1624 = vpop.f32.mrb[0].mxu0
      %v1625 = vadd.f32 %v1429, %v1624
      %v1626 = vpop.f32.mrb[0].mxu0
      %1627 = vmatprep.mubr.f32.mxu0 0.0
      %1628 = vmatmul.mubr.f32.gmra.mrb[0].mxu0 %v1495
      %v1629 = vpop.f32.mrb[0].mxu0
      %v1630 = vadd.f32 %v1434, %v1629
      %v1631 = vpop.f32.mrb[0].mxu0
      %1632 = vmatprep.mubr.f32.mxu0 0.0
      %1633 = vmatmul.mubr.f32.gmra.mrb[0].mxu0 %v1498
      %v1634 = vpop.f32.mrb[0].mxu0
      %v1635 = vadd.f32 %v1439, %v1634
      %v1636 = vpop.f32.mrb[0].mxu0
      %1637 = vmatprep.mubr.f32.mxu0 0.0
      %1638 = vmatmul.mubr.f32.gmra.mrb[0].mxu0 %v1501
      %v1639 = vpop.f32.mrb[0].mxu0
      %v1640 = vadd.f32 %v1444, %v1639
      %v1641 = vpop.f32.mrb[0].mxu0
      %1642 = vmatprep.mubr.f32.mxu0 0.0
      %1643 = vmatmul.mubr.f32.gmra.mrb[0].mxu0 %v1504
      %v1644 = vpop.f32.mrb[0].mxu0
      %v1645 = vadd.f32 %v1449, %v1644
      %v1646 = vpop.f32.mrb[0].mxu0
      %1647 = vmatprep.mubr.f32.mxu0 0.0
      %1648 = vmatmul.mubr.f32.gmra.mrb[0].mxu0 %v1507
      %v1649 = vpop.f32.mrb[0].mxu0
      %v1650 = vadd.f32 %v1454, %v1649
      %v1651 = vpop.f32.mrb[0].mxu0
      %1652 = vmatprep.mubr.f32.mxu0 0.0
      %1653 = vmatmul.mubr.f32.gmra.mrb[0].mxu0 %v1510
      %v1654 = vpop.f32.mrb[0].mxu0
      %v1655 = vadd.f32 %v1459, %v1654
      %v1656 = vpop.f32.mrb[0].mxu0
      %1657 = vmatprep.mubr.f32.mxu0 0.0
      %1658 = vmatmul.mubr.f32.gmra.mrb[0].mxu0 %v1513
      %v1659 = vpop.f32.mrb[0].mxu0
      %v1660 = vadd.f32 %v1464, %v1659
      %v1661 = vpop.f32.mrb[0].mxu0
      %1662 = vdwg.mxu0
      %v1663 = vld [vmem:[%s4 + $0x8] sm:$0xf]
      %v1665 = vsel %vm346, %v1155, 0
      %v1668 = vsel %vm346, %v1156, 0
      %v1671 = vsel %vm346, %v1157, 0
      %v1674 = vsel %vm346, %v1158, 0
      %v1677 = vsel %vm346, %v1159, 0
      %v1680 = vsel %vm346, %v1160, 0
      %v1683 = vsel %vm346, %v1161, 0
      %v1686 = vsel %vm346, %v1162, 0
      %v1689 = vsel %vm346, %v1163, 0
      %v1692 = vsel %vm346, %v1164, 0
      %v1695 = vsel %vm346, %v1165, 0
      %v1698 = vsel %vm346, %v1166, 0
      %v1701 = vsel %vm346, %v1167, 0
      %v1704 = vsel %vm346, %v1168, 0
      %v1707 = vsel %vm346, %v1169, 0
      %v1710 = vsel %vm346, %v1170, 0
      %v1713 = vsel %vm437, %v1663, 0
      %1715 = vmatprep.subr.mxu0 0.0
      %1716 = vmatpush1.msra.mxu0 %v1713
      %1717 = vmatprep.subr.mxu0 0.0
      %1718 = vmatpush1.msra.mxu0 0.0
      %1719 = vmatprep.subr.mxu0 0.0
      %1720 = vmatpush1.msra.mxu0 0.0
      %1721 = vmatprep.subr.mxu0 0.0
      %1722 = vmatpush1.msra.mxu0 0.0
      %1723 = vmatprep.subr.mxu0 0.0
      %1724 = vmatpush1.msra.mxu0 0.0
      %1725 = vmatprep.subr.mxu0 0.0
      %1726 = vmatpush1.msra.mxu0 0.0
      %1727 = vmatprep.subr.mxu0 0.0
      %1728 = vmatpush1.msra.mxu0 0.0
      %1729 = vmatprep.subr.mxu0 0.0
      %1730 = vmatpush1.msra.mxu0 0.0
      %1731 = vmatprep.subr.mxu0 0.0
      %1732 = vmatpush1.msra.mxu0 0.0
      %1733 = vmatprep.subr.mxu0 0.0
      %1734 = vmatpush1.msra.mxu0 0.0
      %1735 = vmatprep.subr.mxu0 0.0
      %1736 = vmatpush1.msra.mxu0 0.0
      %1737 = vmatprep.subr.mxu0 0.0
      %1738 = vmatpush1.msra.mxu0 0.0
      %1739 = vmatprep.subr.mxu0 0.0
      %1740 = vmatpush1.msra.mxu0 0.0
      %1741 = vmatprep.subr.mxu0 0.0
      %1742 = vmatpush1.msra.mxu0 0.0
      %1743 = vmatprep.subr.mxu0 0.0
      %1744 = vmatpush1.msra.mxu0 0.0
      %1745 = vmatprep.subr.mxu0 0.0
      %1746 = vmatpush1.msra.mxu0 0.0
      %1747 = vmatprep.subr.mxu0 0.0
      %1748 = vmatpush1.msra.mxu0 0.0
      %1749 = vmatprep.subr.mxu0 0.0
      %1750 = vmatpush1.msra.mxu0 0.0
      %1751 = vmatprep.subr.mxu0 0.0
      %1752 = vmatpush1.msra.mxu0 0.0
      %1753 = vmatprep.subr.mxu0 0.0
      %1754 = vmatpush1.msra.mxu0 0.0
      %1755 = vmatprep.subr.mxu0 0.0
      %1756 = vmatpush1.msra.mxu0 0.0
      %1757 = vmatprep.subr.mxu0 0.0
      %1758 = vmatpush1.msra.mxu0 0.0
      %1759 = vmatprep.subr.mxu0 0.0
      %1760 = vmatpush1.msra.mxu0 0.0
      %1761 = vmatprep.subr.mxu0 0.0
      %1762 = vmatpush1.msra.mxu0 0.0
      %1763 = vmatprep.subr.mxu0 0.0
      %1764 = vmatpush1.msra.mxu0 0.0
      %1765 = vmatprep.subr.mxu0 0.0
      %1766 = vmatpush1.msra.mxu0 0.0
      %1767 = vmatprep.subr.mxu0 0.0
      %1768 = vmatpush1.msra.mxu0 0.0
      %1769 = vmatprep.subr.mxu0 0.0
      %1770 = vmatpush1.msra.mxu0 0.0
      %1771 = vmatprep.subr.mxu0 0.0
      %1772 = vmatpush1.msra.mxu0 0.0
      %1773 = vmatprep.subr.mxu0 0.0
      %1774 = vmatpush1.msra.mxu0 0.0
      %1775 = vmatprep.subr.mxu0 0.0
      %1776 = vmatpush1.msra.mxu0 0.0
      %1777 = vmatprep.subr.mxu0 0.0
      %1778 = vmatpush1.msra.mxu0 0.0
      %1779 = vmatprep.mubr.f32.mxu0 0.0
      %1780 = vmatmul.mubr.f32.gmra.mrb[0].mxu0 %v1665
      %v1781 = vpop.f32.mrb[0].mxu0
      %v1782 = vadd.f32 0.0, %v1781
      %v1783 = vpop.f32.mrb[0].mxu0
      %1784 = vmatprep.mubr.f32.mxu0 0.0
      %1785 = vmatmul.mubr.f32.gmra.mrb[0].mxu0 %v1668
      %v1786 = vpop.f32.mrb[0].mxu0
      %v1787 = vadd.f32 0.0, %v1786
      %v1788 = vpop.f32.mrb[0].mxu0
      %1789 = vmatprep.mubr.f32.mxu0 0.0
      %1790 = vmatmul.mubr.f32.gmra.mrb[0].mxu0 %v1671
      %v1791 = vpop.f32.mrb[0].mxu0
      %v1792 = vadd.f32 0.0, %v1791
      %v1793 = vpop.f32.mrb[0].mxu0
      %1794 = vmatprep.mubr.f32.mxu0 0.0
      %1795 = vmatmul.mubr.f32.gmra.mrb[0].mxu0 %v1674
      %v1796 = vpop.f32.mrb[0].mxu0
      %v1797 = vadd.f32 0.0, %v1796
      %v1798 = vpop.f32.mrb[0].mxu0
      %1799 = vmatprep.mubr.f32.mxu0 0.0
      %1800 = vmatmul.mubr.f32.gmra.mrb[0].mxu0 %v1677
      %v1801 = vpop.f32.mrb[0].mxu0
      %v1802 = vadd.f32 0.0, %v1801
      %v1803 = vpop.f32.mrb[0].mxu0
      %1804 = vmatprep.mubr.f32.mxu0 0.0
      %1805 = vmatmul.mubr.f32.gmra.mrb[0].mxu0 %v1680
      %v1806 = vpop.f32.mrb[0].mxu0
      %v1807 = vadd.f32 0.0, %v1806
      %v1808 = vpop.f32.mrb[0].mxu0
      %1809 = vmatprep.mubr.f32.mxu0 0.0
      %1810 = vmatmul.mubr.f32.gmra.mrb[0].mxu0 %v1683
      %v1811 = vpop.f32.mrb[0].mxu0
      %v1812 = vadd.f32 0.0, %v1811
      %v1813 = vpop.f32.mrb[0].mxu0
      %1814 = vmatprep.mubr.f32.mxu0 0.0
      %1815 = vmatmul.mubr.f32.gmra.mrb[0].mxu0 %v1686
      %v1816 = vpop.f32.mrb[0].mxu0
      %v1817 = vadd.f32 0.0, %v1816
      %v1818 = vpop.f32.mrb[0].mxu0
      %1819 = vmatprep.mubr.f32.mxu0 0.0
      %1820 = vmatmul.mubr.f32.gmra.mrb[0].mxu0 %v1689
      %v1821 = vpop.f32.mrb[0].mxu0
      %v1822 = vadd.f32 0.0, %v1821
      %v1823 = vpop.f32.mrb[0].mxu0
      %1824 = vmatprep.mubr.f32.mxu0 0.0
      %1825 = vmatmul.mubr.f32.gmra.mrb[0].mxu0 %v1692
      %v1826 = vpop.f32.mrb[0].mxu0
      %v1827 = vadd.f32 0.0, %v1826
      %v1828 = vpop.f32.mrb[0].mxu0
      %1829 = vmatprep.mubr.f32.mxu0 0.0
      %1830 = vmatmul.mubr.f32.gmra.mrb[0].mxu0 %v1695
      %v1831 = vpop.f32.mrb[0].mxu0
      %v1832 = vadd.f32 0.0, %v1831
      %v1833 = vpop.f32.mrb[0].mxu0
      %1834 = vmatprep.mubr.f32.mxu0 0.0
      %1835 = vmatmul.mubr.f32.gmra.mrb[0].mxu0 %v1698
      %v1836 = vpop.f32.mrb[0].mxu0
      %v1837 = vadd.f32 0.0, %v1836
      %v1838 = vpop.f32.mrb[0].mxu0
      %1839 = vmatprep.mubr.f32.mxu0 0.0
      %1840 = vmatmul.mubr.f32.gmra.mrb[0].mxu0 %v1701
      %v1841 = vpop.f32.mrb[0].mxu0
      %v1842 = vadd.f32 0.0, %v1841
      %v1843 = vpop.f32.mrb[0].mxu0
      %1844 = vmatprep.mubr.f32.mxu0 0.0
      %1845 = vmatmul.mubr.f32.gmra.mrb[0].mxu0 %v1704
      %v1846 = vpop.f32.mrb[0].mxu0
      %v1847 = vadd.f32 0.0, %v1846
      %v1848 = vpop.f32.mrb[0].mxu0
      %1849 = vmatprep.mubr.f32.mxu0 0.0
      %1850 = vmatmul.mubr.f32.gmra.mrb[0].mxu0 %v1707
      %v1851 = vpop.f32.mrb[0].mxu0
      %v1852 = vadd.f32 0.0, %v1851
      %v1853 = vpop.f32.mrb[0].mxu0
      %1854 = vmatprep.mubr.f32.mxu0 0.0
      %1855 = vmatmul.mubr.f32.gmra.mrb[0].mxu0 %v1710
      %v1856 = vpop.f32.mrb[0].mxu0
      %v1857 = vadd.f32 0.0, %v1856
      %v1858 = vpop.f32.mrb[0].mxu0
      %1859 = vdwg.mxu0
      %v1860 = vadd.f32 %v1585, %v1782
      %v1861 = vadd.f32 %v1590, %v1787
      %v1862 = vadd.f32 %v1595, %v1792
      %v1863 = vadd.f32 %v1600, %v1797
      %v1864 = vadd.f32 %v1605, %v1802
      %v1865 = vadd.f32 %v1610, %v1807
      %v1866 = vadd.f32 %v1615, %v1812
      %v1867 = vadd.f32 %v1620, %v1817
      %v1868 = vadd.f32 %v1625, %v1822
      %v1869 = vadd.f32 %v1630, %v1827
      %v1870 = vadd.f32 %v1635, %v1832
      %v1871 = vadd.f32 %v1640, %v1837
      %v1872 = vadd.f32 %v1645, %v1842
      %v1873 = vadd.f32 %v1650, %v1847
      %v1874 = vadd.f32 %v1655, %v1852
      %v1875 = vadd.f32 %v1660, %v1857
      %v1876 = vld [vmem:[%s4 + $0xc] sm:$0xf]
      %v1878 = vsel %vm346, %v1172, 0
      %v1881 = vsel %vm346, %v1173, 0
      %v1884 = vsel %vm346, %v1174, 0
      %v1887 = vsel %vm346, %v1175, 0
      %v1890 = vsel %vm346, %v1176, 0
      %v1893 = vsel %vm346, %v1177, 0
      %v1896 = vsel %vm346, %v1178, 0
      %v1899 = vsel %vm346, %v1179, 0
      %v1902 = vsel %vm346, %v1180, 0
      %v1905 = vsel %vm346, %v1181, 0
      %v1908 = vsel %vm346, %v1182, 0
      %v1911 = vsel %vm346, %v1183, 0
      %v1914 = vsel %vm346, %v1184, 0
      %v1917 = vsel %vm346, %v1185, 0
      %v1920 = vsel %vm346, %v1186, 0
      %v1923 = vsel %vm346, %v1187, 0
      %v1926 = vsel %vm437, %v1876, 0
      %1928 = vmatprep.subr.mxu0 0.0
      %1929 = vmatpush1.msra.mxu0 %v1926
      %1930 = vmatprep.subr.mxu0 0.0
      %1931 = vmatpush1.msra.mxu0 0.0
      %1932 = vmatprep.subr.mxu0 0.0
      %1933 = vmatpush1.msra.mxu0 0.0
      %1934 = vmatprep.subr.mxu0 0.0
      %1935 = vmatpush1.msra.mxu0 0.0
      %1936 = vmatprep.subr.mxu0 0.0
      %1937 = vmatpush1.msra.mxu0 0.0
      %1938 = vmatprep.subr.mxu0 0.0
      %1939 = vmatpush1.msra.mxu0 0.0
      %1940 = vmatprep.subr.mxu0 0.0
      %1941 = vmatpush1.msra.mxu0 0.0
      %1942 = vmatprep.subr.mxu0 0.0
      %1943 = vmatpush1.msra.mxu0 0.0
      %1944 = vmatprep.subr.mxu0 0.0
      %1945 = vmatpush1.msra.mxu0 0.0
      %1946 = vmatprep.subr.mxu0 0.0
      %1947 = vmatpush1.msra.mxu0 0.0
      %1948 = vmatprep.subr.mxu0 0.0
      %1949 = vmatpush1.msra.mxu0 0.0
      %1950 = vmatprep.subr.mxu0 0.0
      %1951 = vmatpush1.msra.mxu0 0.0
      %1952 = vmatprep.subr.mxu0 0.0
      %1953 = vmatpush1.msra.mxu0 0.0
      %1954 = vmatprep.subr.mxu0 0.0
      %1955 = vmatpush1.msra.mxu0 0.0
      %1956 = vmatprep.subr.mxu0 0.0
      %1957 = vmatpush1.msra.mxu0 0.0
      %1958 = vmatprep.subr.mxu0 0.0
      %1959 = vmatpush1.msra.mxu0 0.0
      %1960 = vmatprep.subr.mxu0 0.0
      %1961 = vmatpush1.msra.mxu0 0.0
      %1962 = vmatprep.subr.mxu0 0.0
      %1963 = vmatpush1.msra.mxu0 0.0
      %1964 = vmatprep.subr.mxu0 0.0
      %1965 = vmatpush1.msra.mxu0 0.0
      %1966 = vmatprep.subr.mxu0 0.0
      %1967 = vmatpush1.msra.mxu0 0.0
      %1968 = vmatprep.subr.mxu0 0.0
      %1969 = vmatpush1.msra.mxu0 0.0
      %1970 = vmatprep.subr.mxu0 0.0
      %1971 = vmatpush1.msra.mxu0 0.0
      %1972 = vmatprep.subr.mxu0 0.0
      %1973 = vmatpush1.msra.mxu0 0.0
      %1974 = vmatprep.subr.mxu0 0.0
      %1975 = vmatpush1.msra.mxu0 0.0
      %1976 = vmatprep.subr.mxu0 0.0
      %1977 = vmatpush1.msra.mxu0 0.0
      %1978 = vmatprep.subr.mxu0 0.0
      %1979 = vmatpush1.msra.mxu0 0.0
      %1980 = vmatprep.subr.mxu0 0.0
      %1981 = vmatpush1.msra.mxu0 0.0
      %1982 = vmatprep.subr.mxu0 0.0
      %1983 = vmatpush1.msra.mxu0 0.0
      %1984 = vmatprep.subr.mxu0 0.0
      %1985 = vmatpush1.msra.mxu0 0.0
      %1986 = vmatprep.subr.mxu0 0.0
      %1987 = vmatpush1.msra.mxu0 0.0
      %1988 = vmatprep.subr.mxu0 0.0
      %1989 = vmatpush1.msra.mxu0 0.0
      %1990 = vmatprep.subr.mxu0 0.0
      %1991 = vmatpush1.msra.mxu0 0.0
      %1992 = vmatprep.mubr.f32.mxu0 0.0
      %1993 = vmatmul.mubr.f32.gmra.mrb[0].mxu0 %v1878
      %v1994 = vpop.f32.mrb[0].mxu0
      %v1995 = vadd.f32 0.0, %v1994
      %v1996 = vpop.f32.mrb[0].mxu0
      %1997 = vmatprep.mubr.f32.mxu0 0.0
      %1998 = vmatmul.mubr.f32.gmra.mrb[0].mxu0 %v1881
      %v1999 = vpop.f32.mrb[0].mxu0
      %v2000 = vadd.f32 0.0, %v1999
      %v2001 = vpop.f32.mrb[0].mxu0
      %2002 = vmatprep.mubr.f32.mxu0 0.0
      %2003 = vmatmul.mubr.f32.gmra.mrb[0].mxu0 %v1884
      %v2004 = vpop.f32.mrb[0].mxu0
      %v2005 = vadd.f32 0.0, %v2004
      %v2006 = vpop.f32.mrb[0].mxu0
      %2007 = vmatprep.mubr.f32.mxu0 0.0
      %2008 = vmatmul.mubr.f32.gmra.mrb[0].mxu0 %v1887
      %v2009 = vpop.f32.mrb[0].mxu0
      %v2010 = vadd.f32 0.0, %v2009
      %v2011 = vpop.f32.mrb[0].mxu0
      %2012 = vmatprep.mubr.f32.mxu0 0.0
      %2013 = vmatmul.mubr.f32.gmra.mrb[0].mxu0 %v1890
      %v2014 = vpop.f32.mrb[0].mxu0
      %v2015 = vadd.f32 0.0, %v2014
      %v2016 = vpop.f32.mrb[0].mxu0
      %2017 = vmatprep.mubr.f32.mxu0 0.0
      %2018 = vmatmul.mubr.f32.gmra.mrb[0].mxu0 %v1893
      %v2019 = vpop.f32.mrb[0].mxu0
      %v2020 = vadd.f32 0.0, %v2019
      %v2021 = vpop.f32.mrb[0].mxu0
      %2022 = vmatprep.mubr.f32.mxu0 0.0
      %2023 = vmatmul.mubr.f32.gmra.mrb[0].mxu0 %v1896
      %v2024 = vpop.f32.mrb[0].mxu0
      %v2025 = vadd.f32 0.0, %v2024
      %v2026 = vpop.f32.mrb[0].mxu0
      %2027 = vmatprep.mubr.f32.mxu0 0.0
      %2028 = vmatmul.mubr.f32.gmra.mrb[0].mxu0 %v1899
      %v2029 = vpop.f32.mrb[0].mxu0
      %v2030 = vadd.f32 0.0, %v2029
      %v2031 = vpop.f32.mrb[0].mxu0
      %2032 = vmatprep.mubr.f32.mxu0 0.0
      %2033 = vmatmul.mubr.f32.gmra.mrb[0].mxu0 %v1902
      %v2034 = vpop.f32.mrb[0].mxu0
      %v2035 = vadd.f32 0.0, %v2034
      %v2036 = vpop.f32.mrb[0].mxu0
      %2037 = vmatprep.mubr.f32.mxu0 0.0
      %2038 = vmatmul.mubr.f32.gmra.mrb[0].mxu0 %v1905
      %v2039 = vpop.f32.mrb[0].mxu0
      %v2040 = vadd.f32 0.0, %v2039
      %v2041 = vpop.f32.mrb[0].mxu0
      %2042 = vmatprep.mubr.f32.mxu0 0.0
      %2043 = vmatmul.mubr.f32.gmra.mrb[0].mxu0 %v1908
      %v2044 = vpop.f32.mrb[0].mxu0
      %v2045 = vadd.f32 0.0, %v2044
      %v2046 = vpop.f32.mrb[0].mxu0
      %2047 = vmatprep.mubr.f32.mxu0 0.0
      %2048 = vmatmul.mubr.f32.gmra.mrb[0].mxu0 %v1911
      %v2049 = vpop.f32.mrb[0].mxu0
      %v2050 = vadd.f32 0.0, %v2049
      %v2051 = vpop.f32.mrb[0].mxu0
      %2052 = vmatprep.mubr.f32.mxu0 0.0
      %2053 = vmatmul.mubr.f32.gmra.mrb[0].mxu0 %v1914
      %v2054 = vpop.f32.mrb[0].mxu0
      %v2055 = vadd.f32 0.0, %v2054
      %v2056 = vpop.f32.mrb[0].mxu0
      %2057 = vmatprep.mubr.f32.mxu0 0.0
      %2058 = vmatmul.mubr.f32.gmra.mrb[0].mxu0 %v1917
      %v2059 = vpop.f32.mrb[0].mxu0
      %v2060 = vadd.f32 0.0, %v2059
      %v2061 = vpop.f32.mrb[0].mxu0
      %2062 = vmatprep.mubr.f32.mxu0 0.0
      %2063 = vmatmul.mubr.f32.gmra.mrb[0].mxu0 %v1920
      %v2064 = vpop.f32.mrb[0].mxu0
      %v2065 = vadd.f32 0.0, %v2064
      %v2066 = vpop.f32.mrb[0].mxu0
      %2067 = vmatprep.mubr.f32.mxu0 0.0
      %2068 = vmatmul.mubr.f32.gmra.mrb[0].mxu0 %v1923
      %v2069 = vpop.f32.mrb[0].mxu0
      %v2070 = vadd.f32 0.0, %v2069
      %v2071 = vpop.f32.mrb[0].mxu0
      %2072 = vdwg.mxu0
      %v2073 = vadd.f32 %v1860, %v1995
      %v2074 = vadd.f32 %v1861, %v2000
      %v2075 = vadd.f32 %v1862, %v2005
      %v2076 = vadd.f32 %v1863, %v2010
      %v2077 = vadd.f32 %v1864, %v2015
      %v2078 = vadd.f32 %v1865, %v2020
      %v2079 = vadd.f32 %v1866, %v2025
      %v2080 = vadd.f32 %v1867, %v2030
      %v2081 = vadd.f32 %v1868, %v2035
      %v2082 = vadd.f32 %v1869, %v2040
      %v2083 = vadd.f32 %v1870, %v2045
      %v2084 = vadd.f32 %v1871, %v2050
      %v2085 = vadd.f32 %v1872, %v2055
      %v2086 = vadd.f32 %v1873, %v2060
      %v2087 = vadd.f32 %v1874, %v2065
      %v2088 = vadd.f32 %v1875, %v2070
      %v2089 = vld [vmem:[%s4 + $0x10] sm:$0xf]
      %v2091 = vsel %vm346, %v1188, 0
      %v2094 = vsel %vm346, %v1189, 0
      %v2097 = vsel %vm346, %v1190, 0
      %v2100 = vsel %vm346, %v1191, 0
      %v2103 = vsel %vm346, %v1192, 0
      %v2106 = vsel %vm346, %v1193, 0
      %v2109 = vsel %vm346, %v1194, 0
      %v2112 = vsel %vm346, %v1195, 0
      %v2115 = vsel %vm346, %v1196, 0
      %v2118 = vsel %vm346, %v1197, 0
      %v2121 = vsel %vm346, %v1198, 0
      %v2124 = vsel %vm346, %v1199, 0
      %v2127 = vsel %vm346, %v1200, 0
      %v2130 = vsel %vm346, %v1201, 0
      %v2133 = vsel %vm346, %v1202, 0
      %v2136 = vsel %vm346, %v1203, 0
      %v2139 = vsel %vm437, %v2089, 0
      %2141 = vmatprep.subr.mxu0 0.0
      %2142 = vmatpush1.msra.mxu0 %v2139
      %2143 = vmatprep.subr.mxu0 0.0
      %2144 = vmatpush1.msra.mxu0 0.0
      %2145 = vmatprep.subr.mxu0 0.0
      %2146 = vmatpush1.msra.mxu0 0.0
      %2147 = vmatprep.subr.mxu0 0.0
      %2148 = vmatpush1.msra.mxu0 0.0
      %2149 = vmatprep.subr.mxu0 0.0
      %2150 = vmatpush1.msra.mxu0 0.0
      %2151 = vmatprep.subr.mxu0 0.0
      %2152 = vmatpush1.msra.mxu0 0.0
      %2153 = vmatprep.subr.mxu0 0.0
      %2154 = vmatpush1.msra.mxu0 0.0
      %2155 = vmatprep.subr.mxu0 0.0
      %2156 = vmatpush1.msra.mxu0 0.0
      %2157 = vmatprep.subr.mxu0 0.0
      %2158 = vmatpush1.msra.mxu0 0.0
      %2159 = vmatprep.subr.mxu0 0.0
      %2160 = vmatpush1.msra.mxu0 0.0
      %2161 = vmatprep.subr.mxu0 0.0
      %2162 = vmatpush1.msra.mxu0 0.0
      %2163 = vmatprep.subr.mxu0 0.0
      %2164 = vmatpush1.msra.mxu0 0.0
      %2165 = vmatprep.subr.mxu0 0.0
      %2166 = vmatpush1.msra.mxu0 0.0
      %2167 = vmatprep.subr.mxu0 0.0
      %2168 = vmatpush1.msra.mxu0 0.0
      %2169 = vmatprep.subr.mxu0 0.0
      %2170 = vmatpush1.msra.mxu0 0.0
      %2171 = vmatprep.subr.mxu0 0.0
      %2172 = vmatpush1.msra.mxu0 0.0
      %2173 = vmatprep.subr.mxu0 0.0
      %2174 = vmatpush1.msra.mxu0 0.0
      %2175 = vmatprep.subr.mxu0 0.0
      %2176 = vmatpush1.msra.mxu0 0.0
      %2177 = vmatprep.subr.mxu0 0.0
      %2178 = vmatpush1.msra.mxu0 0.0
      %2179 = vmatprep.subr.mxu0 0.0
      %2180 = vmatpush1.msra.mxu0 0.0
      %2181 = vmatprep.subr.mxu0 0.0
      %2182 = vmatpush1.msra.mxu0 0.0
      %2183 = vmatprep.subr.mxu0 0.0
      %2184 = vmatpush1.msra.mxu0 0.0
      %2185 = vmatprep.subr.mxu0 0.0
      %2186 = vmatpush1.msra.mxu0 0.0
      %2187 = vmatprep.subr.mxu0 0.0
      %2188 = vmatpush1.msra.mxu0 0.0
      %2189 = vmatprep.subr.mxu0 0.0
      %2190 = vmatpush1.msra.mxu0 0.0
      %2191 = vmatprep.subr.mxu0 0.0
      %2192 = vmatpush1.msra.mxu0 0.0
      %2193 = vmatprep.subr.mxu0 0.0
      %2194 = vmatpush1.msra.mxu0 0.0
      %2195 = vmatprep.subr.mxu0 0.0
      %2196 = vmatpush1.msra.mxu0 0.0
      %2197 = vmatprep.subr.mxu0 0.0
      %2198 = vmatpush1.msra.mxu0 0.0
      %2199 = vmatprep.subr.mxu0 0.0
      %2200 = vmatpush1.msra.mxu0 0.0
      %2201 = vmatprep.subr.mxu0 0.0
      %2202 = vmatpush1.msra.mxu0 0.0
      %2203 = vmatprep.subr.mxu0 0.0
      %2204 = vmatpush1.msra.mxu0 0.0
      %2205 = vmatprep.mubr.f32.mxu0 0.0
      %2206 = vmatmul.mubr.f32.gmra.mrb[0].mxu0 %v2091
      %v2207 = vpop.f32.mrb[0].mxu0
      %v2208 = vadd.f32 0.0, %v2207
      %v2209 = vpop.f32.mrb[0].mxu0
      %2210 = vmatprep.mubr.f32.mxu0 0.0
      %2211 = vmatmul.mubr.f32.gmra.mrb[0].mxu0 %v2094
      %v2212 = vpop.f32.mrb[0].mxu0
      %v2213 = vadd.f32 0.0, %v2212
      %v2214 = vpop.f32.mrb[0].mxu0
      %2215 = vmatprep.mubr.f32.mxu0 0.0
      %2216 = vmatmul.mubr.f32.gmra.mrb[0].mxu0 %v2097
      %v2217 = vpop.f32.mrb[0].mxu0
      %v2218 = vadd.f32 0.0, %v2217
      %v2219 = vpop.f32.mrb[0].mxu0
      %2220 = vmatprep.mubr.f32.mxu0 0.0
      %2221 = vmatmul.mubr.f32.gmra.mrb[0].mxu0 %v2100
      %v2222 = vpop.f32.mrb[0].mxu0
      %v2223 = vadd.f32 0.0, %v2222
      %v2224 = vpop.f32.mrb[0].mxu0
      %2225 = vmatprep.mubr.f32.mxu0 0.0
      %2226 = vmatmul.mubr.f32.gmra.mrb[0].mxu0 %v2103
      %v2227 = vpop.f32.mrb[0].mxu0
      %v2228 = vadd.f32 0.0, %v2227
      %v2229 = vpop.f32.mrb[0].mxu0
      %2230 = vmatprep.mubr.f32.mxu0 0.0
      %2231 = vmatmul.mubr.f32.gmra.mrb[0].mxu0 %v2106
      %v2232 = vpop.f32.mrb[0].mxu0
      %v2233 = vadd.f32 0.0, %v2232
      %v2234 = vpop.f32.mrb[0].mxu0
      %2235 = vmatprep.mubr.f32.mxu0 0.0
      %2236 = vmatmul.mubr.f32.gmra.mrb[0].mxu0 %v2109
      %v2237 = vpop.f32.mrb[0].mxu0
      %v2238 = vadd.f32 0.0, %v2237
      %v2239 = vpop.f32.mrb[0].mxu0
      %2240 = vmatprep.mubr.f32.mxu0 0.0
      %2241 = vmatmul.mubr.f32.gmra.mrb[0].mxu0 %v2112
      %v2242 = vpop.f32.mrb[0].mxu0
      %v2243 = vadd.f32 0.0, %v2242
      %v2244 = vpop.f32.mrb[0].mxu0
      %2245 = vmatprep.mubr.f32.mxu0 0.0
      %2246 = vmatmul.mubr.f32.gmra.mrb[0].mxu0 %v2115
      %v2247 = vpop.f32.mrb[0].mxu0
      %v2248 = vadd.f32 0.0, %v2247
      %v2249 = vpop.f32.mrb[0].mxu0
      %2250 = vmatprep.mubr.f32.mxu0 0.0
      %2251 = vmatmul.mubr.f32.gmra.mrb[0].mxu0 %v2118
      %v2252 = vpop.f32.mrb[0].mxu0
      %v2253 = vadd.f32 0.0, %v2252
      %v2254 = vpop.f32.mrb[0].mxu0
      %2255 = vmatprep.mubr.f32.mxu0 0.0
      %2256 = vmatmul.mubr.f32.gmra.mrb[0].mxu0 %v2121
      %v2257 = vpop.f32.mrb[0].mxu0
      %v2258 = vadd.f32 0.0, %v2257
      %v2259 = vpop.f32.mrb[0].mxu0
      %2260 = vmatprep.mubr.f32.mxu0 0.0
      %2261 = vmatmul.mubr.f32.gmra.mrb[0].mxu0 %v2124
      %v2262 = vpop.f32.mrb[0].mxu0
      %v2263 = vadd.f32 0.0, %v2262
      %v2264 = vpop.f32.mrb[0].mxu0
      %2265 = vmatprep.mubr.f32.mxu0 0.0
      %2266 = vmatmul.mubr.f32.gmra.mrb[0].mxu0 %v2127
      %v2267 = vpop.f32.mrb[0].mxu0
      %v2268 = vadd.f32 0.0, %v2267
      %v2269 = vpop.f32.mrb[0].mxu0
      %2270 = vmatprep.mubr.f32.mxu0 0.0
      %2271 = vmatmul.mubr.f32.gmra.mrb[0].mxu0 %v2130
      %v2272 = vpop.f32.mrb[0].mxu0
      %v2273 = vadd.f32 0.0, %v2272
      %v2274 = vpop.f32.mrb[0].mxu0
      %2275 = vmatprep.mubr.f32.mxu0 0.0
      %2276 = vmatmul.mubr.f32.gmra.mrb[0].mxu0 %v2133
      %v2277 = vpop.f32.mrb[0].mxu0
      %v2278 = vadd.f32 0.0, %v2277
      %v2279 = vpop.f32.mrb[0].mxu0
      %2280 = vmatprep.mubr.f32.mxu0 0.0
      %2281 = vmatmul.mubr.f32.gmra.mrb[0].mxu0 %v2136
      %v2282 = vpop.f32.mrb[0].mxu0
      %v2283 = vadd.f32 0.0, %v2282
      %v2284 = vpop.f32.mrb[0].mxu0
      %2285 = vdwg.mxu0
      %v2286 = vadd.f32 %v2073, %v2208
      %v2287 = vadd.f32 %v2074, %v2213
      %v2288 = vadd.f32 %v2075, %v2218
      %v2289 = vadd.f32 %v2076, %v2223
      %v2290 = vadd.f32 %v2077, %v2228
      %v2291 = vadd.f32 %v2078, %v2233
      %v2292 = vadd.f32 %v2079, %v2238
      %v2293 = vadd.f32 %v2080, %v2243
      %v2294 = vadd.f32 %v2081, %v2248
      %v2295 = vadd.f32 %v2082, %v2253
      %v2296 = vadd.f32 %v2083, %v2258
      %v2297 = vadd.f32 %v2084, %v2263
      %v2298 = vadd.f32 %v2085, %v2268
      %v2299 = vadd.f32 %v2086, %v2273
      %v2300 = vadd.f32 %v2087, %v2278
      %v2301 = vadd.f32 %v2088, %v2283
      %v2302 = vld [vmem:[%s4 + $0x14] sm:$0xf]
      %v2304 = vsel %vm346, %v1204, 0
      %v2307 = vsel %vm346, %v1205, 0
      %v2310 = vsel %vm346, %v1206, 0
      %v2313 = vsel %vm346, %v1207, 0
      %v2316 = vsel %vm346, %v1208, 0
      %v2319 = vsel %vm346, %v1209, 0
      %v2322 = vsel %vm346, %v1210, 0
      %v2325 = vsel %vm346, %v1211, 0
      %v2328 = vsel %vm346, %v1212, 0
      %v2331 = vsel %vm346, %v1213, 0
      %v2334 = vsel %vm346, %v1214, 0
      %v2337 = vsel %vm346, %v1215, 0
      %v2340 = vsel %vm346, %v1216, 0
      %v2343 = vsel %vm346, %v1217, 0
      %v2346 = vsel %vm346, %v1218, 0
      %v2349 = vsel %vm346, %v1219, 0
      %v2352 = vsel %vm437, %v2302, 0
      %2354 = vmatprep.subr.mxu0 0.0
      %2355 = vmatpush1.msra.mxu0 %v2352
      %2356 = vmatprep.subr.mxu0 0.0
      %2357 = vmatpush1.msra.mxu0 0.0
      %2358 = vmatprep.subr.mxu0 0.0
      %2359 = vmatpush1.msra.mxu0 0.0
      %2360 = vmatprep.subr.mxu0 0.0
      %2361 = vmatpush1.msra.mxu0 0.0
      %2362 = vmatprep.subr.mxu0 0.0
      %2363 = vmatpush1.msra.mxu0 0.0
      %2364 = vmatprep.subr.mxu0 0.0
      %2365 = vmatpush1.msra.mxu0 0.0
      %2366 = vmatprep.subr.mxu0 0.0
      %2367 = vmatpush1.msra.mxu0 0.0
      %2368 = vmatprep.subr.mxu0 0.0
      %2369 = vmatpush1.msra.mxu0 0.0
      %2370 = vmatprep.subr.mxu0 0.0
      %2371 = vmatpush1.msra.mxu0 0.0
      %2372 = vmatprep.subr.mxu0 0.0
      %2373 = vmatpush1.msra.mxu0 0.0
      %2374 = vmatprep.subr.mxu0 0.0
      %2375 = vmatpush1.msra.mxu0 0.0
      %2376 = vmatprep.subr.mxu0 0.0
      %2377 = vmatpush1.msra.mxu0 0.0
      %2378 = vmatprep.subr.mxu0 0.0
      %2379 = vmatpush1.msra.mxu0 0.0
      %2380 = vmatprep.subr.mxu0 0.0
      %2381 = vmatpush1.msra.mxu0 0.0
      %2382 = vmatprep.subr.mxu0 0.0
      %2383 = vmatpush1.msra.mxu0 0.0
      %2384 = vmatprep.subr.mxu0 0.0
      %2385 = vmatpush1.msra.mxu0 0.0
      %2386 = vmatprep.subr.mxu0 0.0
      %2387 = vmatpush1.msra.mxu0 0.0
      %2388 = vmatprep.subr.mxu0 0.0
      %2389 = vmatpush1.msra.mxu0 0.0
      %2390 = vmatprep.subr.mxu0 0.0
      %2391 = vmatpush1.msra.mxu0 0.0
      %2392 = vmatprep.subr.mxu0 0.0
      %2393 = vmatpush1.msra.mxu0 0.0
      %2394 = vmatprep.subr.mxu0 0.0
      %2395 = vmatpush1.msra.mxu0 0.0
      %2396 = vmatprep.subr.mxu0 0.0
      %2397 = vmatpush1.msra.mxu0 0.0
      %2398 = vmatprep.subr.mxu0 0.0
      %2399 = vmatpush1.msra.mxu0 0.0
      %2400 = vmatprep.subr.mxu0 0.0
      %2401 = vmatpush1.msra.mxu0 0.0
      %2402 = vmatprep.subr.mxu0 0.0
      %2403 = vmatpush1.msra.mxu0 0.0
      %2404 = vmatprep.subr.mxu0 0.0
      %2405 = vmatpush1.msra.mxu0 0.0
      %2406 = vmatprep.subr.mxu0 0.0
      %2407 = vmatpush1.msra.mxu0 0.0
      %2408 = vmatprep.subr.mxu0 0.0
      %2409 = vmatpush1.msra.mxu0 0.0
      %2410 = vmatprep.subr.mxu0 0.0
      %2411 = vmatpush1.msra.mxu0 0.0
      %2412 = vmatprep.subr.mxu0 0.0
      %2413 = vmatpush1.msra.mxu0 0.0
      %2414 = vmatprep.subr.mxu0 0.0
      %2415 = vmatpush1.msra.mxu0 0.0
      %2416 = vmatprep.subr.mxu0 0.0
      %2417 = vmatpush1.msra.mxu0 0.0
      %2418 = vmatprep.mubr.f32.mxu0 0.0
      %2419 = vmatmul.mubr.f32.gmra.mrb[0].mxu0 %v2304
      %v2420 = vpop.f32.mrb[0].mxu0
      %v2421 = vadd.f32 0.0, %v2420
      %v2422 = vpop.f32.mrb[0].mxu0
      %2423 = vmatprep.mubr.f32.mxu0 0.0
      %2424 = vmatmul.mubr.f32.gmra.mrb[0].mxu0 %v2307
      %v2425 = vpop.f32.mrb[0].mxu0
      %v2426 = vadd.f32 0.0, %v2425
      %v2427 = vpop.f32.mrb[0].mxu0
      %2428 = vmatprep.mubr.f32.mxu0 0.0
      %2429 = vmatmul.mubr.f32.gmra.mrb[0].mxu0 %v2310
      %v2430 = vpop.f32.mrb[0].mxu0
      %v2431 = vadd.f32 0.0, %v2430
      %v2432 = vpop.f32.mrb[0].mxu0
      %2433 = vmatprep.mubr.f32.mxu0 0.0
      %2434 = vmatmul.mubr.f32.gmra.mrb[0].mxu0 %v2313
      %v2435 = vpop.f32.mrb[0].mxu0
      %v2436 = vadd.f32 0.0, %v2435
      %v2437 = vpop.f32.mrb[0].mxu0
      %2438 = vmatprep.mubr.f32.mxu0 0.0
      %2439 = vmatmul.mubr.f32.gmra.mrb[0].mxu0 %v2316
      %v2440 = vpop.f32.mrb[0].mxu0
      %v2441 = vadd.f32 0.0, %v2440
      %v2442 = vpop.f32.mrb[0].mxu0
      %2443 = vmatprep.mubr.f32.mxu0 0.0
      %2444 = vmatmul.mubr.f32.gmra.mrb[0].mxu0 %v2319
      %v2445 = vpop.f32.mrb[0].mxu0
      %v2446 = vadd.f32 0.0, %v2445
      %v2447 = vpop.f32.mrb[0].mxu0
      %2448 = vmatprep.mubr.f32.mxu0 0.0
      %2449 = vmatmul.mubr.f32.gmra.mrb[0].mxu0 %v2322
      %v2450 = vpop.f32.mrb[0].mxu0
      %v2451 = vadd.f32 0.0, %v2450
      %v2452 = vpop.f32.mrb[0].mxu0
      %2453 = vmatprep.mubr.f32.mxu0 0.0
      %2454 = vmatmul.mubr.f32.gmra.mrb[0].mxu0 %v2325
      %v2455 = vpop.f32.mrb[0].mxu0
      %v2456 = vadd.f32 0.0, %v2455
      %v2457 = vpop.f32.mrb[0].mxu0
      %2458 = vmatprep.mubr.f32.mxu0 0.0
      %2459 = vmatmul.mubr.f32.gmra.mrb[0].mxu0 %v2328
      %v2460 = vpop.f32.mrb[0].mxu0
      %v2461 = vadd.f32 0.0, %v2460
      %v2462 = vpop.f32.mrb[0].mxu0
      %2463 = vmatprep.mubr.f32.mxu0 0.0
      %2464 = vmatmul.mubr.f32.gmra.mrb[0].mxu0 %v2331
      %v2465 = vpop.f32.mrb[0].mxu0
      %v2466 = vadd.f32 0.0, %v2465
      %v2467 = vpop.f32.mrb[0].mxu0
      %2468 = vmatprep.mubr.f32.mxu0 0.0
      %2469 = vmatmul.mubr.f32.gmra.mrb[0].mxu0 %v2334
      %v2470 = vpop.f32.mrb[0].mxu0
      %v2471 = vadd.f32 0.0, %v2470
      %v2472 = vpop.f32.mrb[0].mxu0
      %2473 = vmatprep.mubr.f32.mxu0 0.0
      %2474 = vmatmul.mubr.f32.gmra.mrb[0].mxu0 %v2337
      %v2475 = vpop.f32.mrb[0].mxu0
      %v2476 = vadd.f32 0.0, %v2475
      %v2477 = vpop.f32.mrb[0].mxu0
      %2478 = vmatprep.mubr.f32.mxu0 0.0
      %2479 = vmatmul.mubr.f32.gmra.mrb[0].mxu0 %v2340
      %v2480 = vpop.f32.mrb[0].mxu0
      %v2481 = vadd.f32 0.0, %v2480
      %v2482 = vpop.f32.mrb[0].mxu0
      %2483 = vmatprep.mubr.f32.mxu0 0.0
      %2484 = vmatmul.mubr.f32.gmra.mrb[0].mxu0 %v2343
      %v2485 = vpop.f32.mrb[0].mxu0
      %v2486 = vadd.f32 0.0, %v2485
      %v2487 = vpop.f32.mrb[0].mxu0
      %2488 = vmatprep.mubr.f32.mxu0 0.0
      %2489 = vmatmul.mubr.f32.gmra.mrb[0].mxu0 %v2346
      %v2490 = vpop.f32.mrb[0].mxu0
      %v2491 = vadd.f32 0.0, %v2490
      %v2492 = vpop.f32.mrb[0].mxu0
      %2493 = vmatprep.mubr.f32.mxu0 0.0
      %2494 = vmatmul.mubr.f32.gmra.mrb[0].mxu0 %v2349
      %v2495 = vpop.f32.mrb[0].mxu0
      %v2496 = vadd.f32 0.0, %v2495
      %v2497 = vpop.f32.mrb[0].mxu0
      %2498 = vdwg.mxu0
      %v2499 = vadd.f32 %v2286, %v2421
      %v2500 = vadd.f32 %v2287, %v2426
      %v2501 = vadd.f32 %v2288, %v2431
      %v2502 = vadd.f32 %v2289, %v2436
      %v2503 = vadd.f32 %v2290, %v2441
      %v2504 = vadd.f32 %v2291, %v2446
      %v2505 = vadd.f32 %v2292, %v2451
      %v2506 = vadd.f32 %v2293, %v2456
      %v2507 = vadd.f32 %v2294, %v2461
      %v2508 = vadd.f32 %v2295, %v2466
      %v2509 = vadd.f32 %v2296, %v2471
      %v2510 = vadd.f32 %v2297, %v2476
      %v2511 = vadd.f32 %v2298, %v2481
      %v2512 = vadd.f32 %v2299, %v2486
      %v2513 = vadd.f32 %v2300, %v2491
      %v2514 = vadd.f32 %v2301, %v2496
      %v2515 = vld [vmem:[%s4 + $0x18] sm:$0xf]
      %v2517 = vsel %vm346, %v1221, 0
      %v2520 = vsel %vm346, %v1222, 0
      %v2523 = vsel %vm346, %v1223, 0
      %v2526 = vsel %vm346, %v1224, 0
      %v2529 = vsel %vm346, %v1225, 0
      %v2532 = vsel %vm346, %v1226, 0
      %v2535 = vsel %vm346, %v1227, 0
      %v2538 = vsel %vm346, %v1228, 0
      %v2541 = vsel %vm346, %v1229, 0
      %v2544 = vsel %vm346, %v1230, 0
      %v2547 = vsel %vm346, %v1231, 0
      %v2550 = vsel %vm346, %v1232, 0
      %v2553 = vsel %vm346, %v1233, 0
      %v2556 = vsel %vm346, %v1234, 0
      %v2559 = vsel %vm346, %v1235, 0
      %v2562 = vsel %vm346, %v1236, 0
      %v2565 = vsel %vm437, %v2515, 0
      %2567 = vmatprep.subr.mxu0 0.0
      %2568 = vmatpush1.msra.mxu0 %v2565
      %2569 = vmatprep.subr.mxu0 0.0
      %2570 = vmatpush1.msra.mxu0 0.0
      %2571 = vmatprep.subr.mxu0 0.0
      %2572 = vmatpush1.msra.mxu0 0.0
      %2573 = vmatprep.subr.mxu0 0.0
      %2574 = vmatpush1.msra.mxu0 0.0
      %2575 = vmatprep.subr.mxu0 0.0
      %2576 = vmatpush1.msra.mxu0 0.0
      %2577 = vmatprep.subr.mxu0 0.0
      %2578 = vmatpush1.msra.mxu0 0.0
      %2579 = vmatprep.subr.mxu0 0.0
      %2580 = vmatpush1.msra.mxu0 0.0
      %2581 = vmatprep.subr.mxu0 0.0
      %2582 = vmatpush1.msra.mxu0 0.0
      %2583 = vmatprep.subr.mxu0 0.0
      %2584 = vmatpush1.msra.mxu0 0.0
      %2585 = vmatprep.subr.mxu0 0.0
      %2586 = vmatpush1.msra.mxu0 0.0
      %2587 = vmatprep.subr.mxu0 0.0
      %2588 = vmatpush1.msra.mxu0 0.0
      %2589 = vmatprep.subr.mxu0 0.0
      %2590 = vmatpush1.msra.mxu0 0.0
      %2591 = vmatprep.subr.mxu0 0.0
      %2592 = vmatpush1.msra.mxu0 0.0
      %2593 = vmatprep.subr.mxu0 0.0
      %2594 = vmatpush1.msra.mxu0 0.0
      %2595 = vmatprep.subr.mxu0 0.0
      %2596 = vmatpush1.msra.mxu0 0.0
      %2597 = vmatprep.subr.mxu0 0.0
      %2598 = vmatpush1.msra.mxu0 0.0
      %2599 = vmatprep.subr.mxu0 0.0
      %2600 = vmatpush1.msra.mxu0 0.0
      %2601 = vmatprep.subr.mxu0 0.0
      %2602 = vmatpush1.msra.mxu0 0.0
      %2603 = vmatprep.subr.mxu0 0.0
      %2604 = vmatpush1.msra.mxu0 0.0
      %2605 = vmatprep.subr.mxu0 0.0
      %2606 = vmatpush1.msra.mxu0 0.0
      %2607 = vmatprep.subr.mxu0 0.0
      %2608 = vmatpush1.msra.mxu0 0.0
      %2609 = vmatprep.subr.mxu0 0.0
      %2610 = vmatpush1.msra.mxu0 0.0
      %2611 = vmatprep.subr.mxu0 0.0
      %2612 = vmatpush1.msra.mxu0 0.0
      %2613 = vmatprep.subr.mxu0 0.0
      %2614 = vmatpush1.msra.mxu0 0.0
      %2615 = vmatprep.subr.mxu0 0.0
      %2616 = vmatpush1.msra.mxu0 0.0
      %2617 = vmatprep.subr.mxu0 0.0
      %2618 = vmatpush1.msra.mxu0 0.0
      %2619 = vmatprep.subr.mxu0 0.0
      %2620 = vmatpush1.msra.mxu0 0.0
      %2621 = vmatprep.subr.mxu0 0.0
      %2622 = vmatpush1.msra.mxu0 0.0
      %2623 = vmatprep.subr.mxu0 0.0
      %2624 = vmatpush1.msra.mxu0 0.0
      %2625 = vmatprep.subr.mxu0 0.0
      %2626 = vmatpush1.msra.mxu0 0.0
      %2627 = vmatprep.subr.mxu0 0.0
      %2628 = vmatpush1.msra.mxu0 0.0
      %2629 = vmatprep.subr.mxu0 0.0
      %2630 = vmatpush1.msra.mxu0 0.0
      %2631 = vmatprep.mubr.f32.mxu0 0.0
      %2632 = vmatmul.mubr.f32.gmra.mrb[0].mxu0 %v2517
      %v2633 = vpop.f32.mrb[0].mxu0
      %v2634 = vadd.f32 0.0, %v2633
      %v2635 = vpop.f32.mrb[0].mxu0
      %2636 = vmatprep.mubr.f32.mxu0 0.0
      %2637 = vmatmul.mubr.f32.gmra.mrb[0].mxu0 %v2520
      %v2638 = vpop.f32.mrb[0].mxu0
      %v2639 = vadd.f32 0.0, %v2638
      %v2640 = vpop.f32.mrb[0].mxu0
      %2641 = vmatprep.mubr.f32.mxu0 0.0
      %2642 = vmatmul.mubr.f32.gmra.mrb[0].mxu0 %v2523
      %v2643 = vpop.f32.mrb[0].mxu0
      %v2644 = vadd.f32 0.0, %v2643
      %v2645 = vpop.f32.mrb[0].mxu0
      %2646 = vmatprep.mubr.f32.mxu0 0.0
      %2647 = vmatmul.mubr.f32.gmra.mrb[0].mxu0 %v2526
      %v2648 = vpop.f32.mrb[0].mxu0
      %v2649 = vadd.f32 0.0, %v2648
      %v2650 = vpop.f32.mrb[0].mxu0
      %2651 = vmatprep.mubr.f32.mxu0 0.0
      %2652 = vmatmul.mubr.f32.gmra.mrb[0].mxu0 %v2529
      %v2653 = vpop.f32.mrb[0].mxu0
      %v2654 = vadd.f32 0.0, %v2653
      %v2655 = vpop.f32.mrb[0].mxu0
      %2656 = vmatprep.mubr.f32.mxu0 0.0
      %2657 = vmatmul.mubr.f32.gmra.mrb[0].mxu0 %v2532
      %v2658 = vpop.f32.mrb[0].mxu0
      %v2659 = vadd.f32 0.0, %v2658
      %v2660 = vpop.f32.mrb[0].mxu0
      %2661 = vmatprep.mubr.f32.mxu0 0.0
      %2662 = vmatmul.mubr.f32.gmra.mrb[0].mxu0 %v2535
      %v2663 = vpop.f32.mrb[0].mxu0
      %v2664 = vadd.f32 0.0, %v2663
      %v2665 = vpop.f32.mrb[0].mxu0
      %2666 = vmatprep.mubr.f32.mxu0 0.0
      %2667 = vmatmul.mubr.f32.gmra.mrb[0].mxu0 %v2538
      %v2668 = vpop.f32.mrb[0].mxu0
      %v2669 = vadd.f32 0.0, %v2668
      %v2670 = vpop.f32.mrb[0].mxu0
      %2671 = vmatprep.mubr.f32.mxu0 0.0
      %2672 = vmatmul.mubr.f32.gmra.mrb[0].mxu0 %v2541
      %v2673 = vpop.f32.mrb[0].mxu0
      %v2674 = vadd.f32 0.0, %v2673
      %v2675 = vpop.f32.mrb[0].mxu0
      %2676 = vmatprep.mubr.f32.mxu0 0.0
      %2677 = vmatmul.mubr.f32.gmra.mrb[0].mxu0 %v2544
      %v2678 = vpop.f32.mrb[0].mxu0
      %v2679 = vadd.f32 0.0, %v2678
      %v2680 = vpop.f32.mrb[0].mxu0
      %2681 = vmatprep.mubr.f32.mxu0 0.0
      %2682 = vmatmul.mubr.f32.gmra.mrb[0].mxu0 %v2547
      %v2683 = vpop.f32.mrb[0].mxu0
      %v2684 = vadd.f32 0.0, %v2683
      %v2685 = vpop.f32.mrb[0].mxu0
      %2686 = vmatprep.mubr.f32.mxu0 0.0
      %2687 = vmatmul.mubr.f32.gmra.mrb[0].mxu0 %v2550
      %v2688 = vpop.f32.mrb[0].mxu0
      %v2689 = vadd.f32 0.0, %v2688
      %v2690 = vpop.f32.mrb[0].mxu0
      %2691 = vmatprep.mubr.f32.mxu0 0.0
      %2692 = vmatmul.mubr.f32.gmra.mrb[0].mxu0 %v2553
      %v2693 = vpop.f32.mrb[0].mxu0
      %v2694 = vadd.f32 0.0, %v2693
      %v2695 = vpop.f32.mrb[0].mxu0
      %2696 = vmatprep.mubr.f32.mxu0 0.0
      %2697 = vmatmul.mubr.f32.gmra.mrb[0].mxu0 %v2556
      %v2698 = vpop.f32.mrb[0].mxu0
      %v2699 = vadd.f32 0.0, %v2698
      %v2700 = vpop.f32.mrb[0].mxu0
      %2701 = vmatprep.mubr.f32.mxu0 0.0
      %2702 = vmatmul.mubr.f32.gmra.mrb[0].mxu0 %v2559
      %v2703 = vpop.f32.mrb[0].mxu0
      %v2704 = vadd.f32 0.0, %v2703
      %v2705 = vpop.f32.mrb[0].mxu0
      %2706 = vmatprep.mubr.f32.mxu0 0.0
      %2707 = vmatmul.mubr.f32.gmra.mrb[0].mxu0 %v2562
      %v2708 = vpop.f32.mrb[0].mxu0
      %v2709 = vadd.f32 0.0, %v2708
      %v2710 = vpop.f32.mrb[0].mxu0
      %2711 = vdwg.mxu0
      %v2712 = vadd.f32 %v2499, %v2634
      %v2713 = vadd.f32 %v2500, %v2639
      %v2714 = vadd.f32 %v2501, %v2644
      %v2715 = vadd.f32 %v2502, %v2649
      %v2716 = vadd.f32 %v2503, %v2654
      %v2717 = vadd.f32 %v2504, %v2659
      %v2718 = vadd.f32 %v2505, %v2664
      %v2719 = vadd.f32 %v2506, %v2669
      %v2720 = vadd.f32 %v2507, %v2674
      %v2721 = vadd.f32 %v2508, %v2679
      %v2722 = vadd.f32 %v2509, %v2684
      %v2723 = vadd.f32 %v2510, %v2689
      %v2724 = vadd.f32 %v2511, %v2694
      %v2725 = vadd.f32 %v2512, %v2699
      %v2726 = vadd.f32 %v2513, %v2704
      %v2727 = vadd.f32 %v2514, %v2709
      %v2728 = vld [vmem:[%s4 + $0x1c] sm:$0xf]
      %v2730 = vsel %vm346, %v1237, 0
      %v2733 = vsel %vm346, %v1238, 0
      %v2736 = vsel %vm346, %v1239, 0
      %v2739 = vsel %vm346, %v1240, 0
      %v2742 = vsel %vm346, %v1241, 0
      %v2745 = vsel %vm346, %v1242, 0
      %v2748 = vsel %vm346, %v1243, 0
      %v2751 = vsel %vm346, %v1244, 0
      %v2754 = vsel %vm346, %v1245, 0
      %v2757 = vsel %vm346, %v1246, 0
      %v2760 = vsel %vm346, %v1247, 0
      %v2763 = vsel %vm346, %v1248, 0
      %v2766 = vsel %vm346, %v1249, 0
      %v2769 = vsel %vm346, %v1250, 0
      %v2772 = vsel %vm346, %v1251, 0
      %v2775 = vsel %vm346, %v1252, 0
      %v2778 = vsel %vm437, %v2728, 0
      %2780 = vmatprep.subr.mxu0 0.0
      %2781 = vmatpush1.msra.mxu0 %v2778
      %2782 = vmatprep.subr.mxu0 0.0
      %2783 = vmatpush1.msra.mxu0 0.0
      %2784 = vmatprep.subr.mxu0 0.0
      %2785 = vmatpush1.msra.mxu0 0.0
      %2786 = vmatprep.subr.mxu0 0.0
      %2787 = vmatpush1.msra.mxu0 0.0
      %2788 = vmatprep.subr.mxu0 0.0
      %2789 = vmatpush1.msra.mxu0 0.0
      %2790 = vmatprep.subr.mxu0 0.0
      %2791 = vmatpush1.msra.mxu0 0.0
      %2792 = vmatprep.subr.mxu0 0.0
      %2793 = vmatpush1.msra.mxu0 0.0
      %2794 = vmatprep.subr.mxu0 0.0
      %2795 = vmatpush1.msra.mxu0 0.0
      %2796 = vmatprep.subr.mxu0 0.0
      %2797 = vmatpush1.msra.mxu0 0.0
      %2798 = vmatprep.subr.mxu0 0.0
      %2799 = vmatpush1.msra.mxu0 0.0
      %2800 = vmatprep.subr.mxu0 0.0
      %2801 = vmatpush1.msra.mxu0 0.0
      %2802 = vmatprep.subr.mxu0 0.0
      %2803 = vmatpush1.msra.mxu0 0.0
      %2804 = vmatprep.subr.mxu0 0.0
      %2805 = vmatpush1.msra.mxu0 0.0
      %2806 = vmatprep.subr.mxu0 0.0
      %2807 = vmatpush1.msra.mxu0 0.0
      %2808 = vmatprep.subr.mxu0 0.0
      %2809 = vmatpush1.msra.mxu0 0.0
      %2810 = vmatprep.subr.mxu0 0.0
      %2811 = vmatpush1.msra.mxu0 0.0
      %2812 = vmatprep.subr.mxu0 0.0
      %2813 = vmatpush1.msra.mxu0 0.0
      %2814 = vmatprep.subr.mxu0 0.0
      %2815 = vmatpush1.msra.mxu0 0.0
      %2816 = vmatprep.subr.mxu0 0.0
      %2817 = vmatpush1.msra.mxu0 0.0
      %2818 = vmatprep.subr.mxu0 0.0
      %2819 = vmatpush1.msra.mxu0 0.0
      %2820 = vmatprep.subr.mxu0 0.0
      %2821 = vmatpush1.msra.mxu0 0.0
      %2822 = vmatprep.subr.mxu0 0.0
      %2823 = vmatpush1.msra.mxu0 0.0
      %2824 = vmatprep.subr.mxu0 0.0
      %2825 = vmatpush1.msra.mxu0 0.0
      %2826 = vmatprep.subr.mxu0 0.0
      %2827 = vmatpush1.msra.mxu0 0.0
      %2828 = vmatprep.subr.mxu0 0.0
      %2829 = vmatpush1.msra.mxu0 0.0
      %2830 = vmatprep.subr.mxu0 0.0
      %2831 = vmatpush1.msra.mxu0 0.0
      %2832 = vmatprep.subr.mxu0 0.0
      %2833 = vmatpush1.msra.mxu0 0.0
      %2834 = vmatprep.subr.mxu0 0.0
      %2835 = vmatpush1.msra.mxu0 0.0
      %2836 = vmatprep.subr.mxu0 0.0
      %2837 = vmatpush1.msra.mxu0 0.0
      %2838 = vmatprep.subr.mxu0 0.0
      %2839 = vmatpush1.msra.mxu0 0.0
      %2840 = vmatprep.subr.mxu0 0.0
      %2841 = vmatpush1.msra.mxu0 0.0
      %2842 = vmatprep.subr.mxu0 0.0
      %2843 = vmatpush1.msra.mxu0 0.0
      %2844 = vmatprep.mubr.f32.mxu0 0.0
      %2845 = vmatmul.mubr.f32.gmra.mrb[0].mxu0 %v2730
      %v2846 = vpop.f32.mrb[0].mxu0
      %v2847 = vadd.f32 0.0, %v2846
      %v2848 = vpop.f32.mrb[0].mxu0
      %2849 = vmatprep.mubr.f32.mxu0 0.0
      %2850 = vmatmul.mubr.f32.gmra.mrb[0].mxu0 %v2733
      %v2851 = vpop.f32.mrb[0].mxu0
      %v2852 = vadd.f32 0.0, %v2851
      %v2853 = vpop.f32.mrb[0].mxu0
      %2854 = vmatprep.mubr.f32.mxu0 0.0
      %2855 = vmatmul.mubr.f32.gmra.mrb[0].mxu0 %v2736
      %v2856 = vpop.f32.mrb[0].mxu0
      %v2857 = vadd.f32 0.0, %v2856
      %v2858 = vpop.f32.mrb[0].mxu0
      %2859 = vmatprep.mubr.f32.mxu0 0.0
      %2860 = vmatmul.mubr.f32.gmra.mrb[0].mxu0 %v2739
      %v2861 = vpop.f32.mrb[0].mxu0
      %v2862 = vadd.f32 0.0, %v2861
      %v2863 = vpop.f32.mrb[0].mxu0
      %2864 = vmatprep.mubr.f32.mxu0 0.0
      %2865 = vmatmul.mubr.f32.gmra.mrb[0].mxu0 %v2742
      %v2866 = vpop.f32.mrb[0].mxu0
      %v2867 = vadd.f32 0.0, %v2866
      %v2868 = vpop.f32.mrb[0].mxu0
      %2869 = vmatprep.mubr.f32.mxu0 0.0
      %2870 = vmatmul.mubr.f32.gmra.mrb[0].mxu0 %v2745
      %v2871 = vpop.f32.mrb[0].mxu0
      %v2872 = vadd.f32 0.0, %v2871
      %v2873 = vpop.f32.mrb[0].mxu0
      %2874 = vmatprep.mubr.f32.mxu0 0.0
      %2875 = vmatmul.mubr.f32.gmra.mrb[0].mxu0 %v2748
      %v2876 = vpop.f32.mrb[0].mxu0
      %v2877 = vadd.f32 0.0, %v2876
      %v2878 = vpop.f32.mrb[0].mxu0
      %2879 = vmatprep.mubr.f32.mxu0 0.0
      %2880 = vmatmul.mubr.f32.gmra.mrb[0].mxu0 %v2751
      %v2881 = vpop.f32.mrb[0].mxu0
      %v2882 = vadd.f32 0.0, %v2881
      %v2883 = vpop.f32.mrb[0].mxu0
      %2884 = vmatprep.mubr.f32.mxu0 0.0
      %2885 = vmatmul.mubr.f32.gmra.mrb[0].mxu0 %v2754
      %v2886 = vpop.f32.mrb[0].mxu0
      %v2887 = vadd.f32 0.0, %v2886
      %v2888 = vpop.f32.mrb[0].mxu0
      %2889 = vmatprep.mubr.f32.mxu0 0.0
      %2890 = vmatmul.mubr.f32.gmra.mrb[0].mxu0 %v2757
      %v2891 = vpop.f32.mrb[0].mxu0
      %v2892 = vadd.f32 0.0, %v2891
      %v2893 = vpop.f32.mrb[0].mxu0
      %2894 = vmatprep.mubr.f32.mxu0 0.0
      %2895 = vmatmul.mubr.f32.gmra.mrb[0].mxu0 %v2760
      %v2896 = vpop.f32.mrb[0].mxu0
      %v2897 = vadd.f32 0.0, %v2896
      %v2898 = vpop.f32.mrb[0].mxu0
      %2899 = vmatprep.mubr.f32.mxu0 0.0
      %2900 = vmatmul.mubr.f32.gmra.mrb[0].mxu0 %v2763
      %v2901 = vpop.f32.mrb[0].mxu0
      %v2902 = vadd.f32 0.0, %v2901
      %v2903 = vpop.f32.mrb[0].mxu0
      %2904 = vmatprep.mubr.f32.mxu0 0.0
      %2905 = vmatmul.mubr.f32.gmra.mrb[0].mxu0 %v2766
      %v2906 = vpop.f32.mrb[0].mxu0
      %v2907 = vadd.f32 0.0, %v2906
      %v2908 = vpop.f32.mrb[0].mxu0
      %2909 = vmatprep.mubr.f32.mxu0 0.0
      %2910 = vmatmul.mubr.f32.gmra.mrb[0].mxu0 %v2769
      %v2911 = vpop.f32.mrb[0].mxu0
      %v2912 = vadd.f32 0.0, %v2911
      %v2913 = vpop.f32.mrb[0].mxu0
      %2914 = vmatprep.mubr.f32.mxu0 0.0
      %2915 = vmatmul.mubr.f32.gmra.mrb[0].mxu0 %v2772
      %v2916 = vpop.f32.mrb[0].mxu0
      %v2917 = vadd.f32 0.0, %v2916
      %v2918 = vpop.f32.mrb[0].mxu0
      %2919 = vmatprep.mubr.f32.mxu0 0.0
      %2920 = vmatmul.mubr.f32.gmra.mrb[0].mxu0 %v2775
      %v2921 = vpop.f32.mrb[0].mxu0
      %v2922 = vadd.f32 0.0, %v2921
      %v2923 = vpop.f32.mrb[0].mxu0
      %2924 = vdwg.mxu0
      %v2925 = vadd.f32 %v2712, %v2847
      %v2926 = vadd.f32 %v2713, %v2852
      %v2927 = vadd.f32 %v2714, %v2857
      %v2928 = vadd.f32 %v2715, %v2862
      %v2929 = vadd.f32 %v2716, %v2867
      %v2930 = vadd.f32 %v2717, %v2872
      %v2931 = vadd.f32 %v2718, %v2877
      %v2932 = vadd.f32 %v2719, %v2882
      %v2933 = vadd.f32 %v2720, %v2887
      %v2934 = vadd.f32 %v2721, %v2892
      %v2935 = vadd.f32 %v2722, %v2897
      %v2936 = vadd.f32 %v2723, %v2902
      %v2937 = vadd.f32 %v2724, %v2907
      %v2938 = vadd.f32 %v2725, %v2912
      %v2939 = vadd.f32 %v2726, %v2917
      %v2940 = vadd.f32 %v2727, %v2922
      %v2941 = vld [vmem:[%s4 + $0x20] sm:$0xf]
      %v2943 = vsel %vm346, %v1253, 0
      %v2946 = vsel %vm346, %v1254, 0
      %v2949 = vsel %vm346, %v1255, 0
      %v2952 = vsel %vm346, %v1256, 0
      %v2955 = vsel %vm346, %v1257, 0
      %v2958 = vsel %vm346, %v1258, 0
      %v2961 = vsel %vm346, %v1259, 0
      %v2964 = vsel %vm346, %v1260, 0
      %v2967 = vsel %vm346, %v1261, 0
      %v2970 = vsel %vm346, %v1262, 0
      %v2973 = vsel %vm346, %v1263, 0
      %v2976 = vsel %vm346, %v1264, 0
      %v2979 = vsel %vm346, %v1265, 0
      %v2982 = vsel %vm346, %v1266, 0
      %v2985 = vsel %vm346, %v1267, 0
      %v2988 = vsel %vm346, %v1268, 0
      %v2991 = vsel %vm437, %v2941, 0
      %2993 = vmatprep.subr.mxu0 0.0
      %2994 = vmatpush1.msra.mxu0 %v2991
      %2995 = vmatprep.subr.mxu0 0.0
      %2996 = vmatpush1.msra.mxu0 0.0
      %2997 = vmatprep.subr.mxu0 0.0
      %2998 = vmatpush1.msra.mxu0 0.0
      %2999 = vmatprep.subr.mxu0 0.0
      %3000 = vmatpush1.msra.mxu0 0.0
      %3001 = vmatprep.subr.mxu0 0.0
      %3002 = vmatpush1.msra.mxu0 0.0
      %3003 = vmatprep.subr.mxu0 0.0
      %3004 = vmatpush1.msra.mxu0 0.0
      %3005 = vmatprep.subr.mxu0 0.0
      %3006 = vmatpush1.msra.mxu0 0.0
      %3007 = vmatprep.subr.mxu0 0.0
      %3008 = vmatpush1.msra.mxu0 0.0
      %3009 = vmatprep.subr.mxu0 0.0
      %3010 = vmatpush1.msra.mxu0 0.0
      %3011 = vmatprep.subr.mxu0 0.0
      %3012 = vmatpush1.msra.mxu0 0.0
      %3013 = vmatprep.subr.mxu0 0.0
      %3014 = vmatpush1.msra.mxu0 0.0
      %3015 = vmatprep.subr.mxu0 0.0
      %3016 = vmatpush1.msra.mxu0 0.0
      %3017 = vmatprep.subr.mxu0 0.0
      %3018 = vmatpush1.msra.mxu0 0.0
      %3019 = vmatprep.subr.mxu0 0.0
      %3020 = vmatpush1.msra.mxu0 0.0
      %3021 = vmatprep.subr.mxu0 0.0
      %3022 = vmatpush1.msra.mxu0 0.0
      %3023 = vmatprep.subr.mxu0 0.0
      %3024 = vmatpush1.msra.mxu0 0.0
      %3025 = vmatprep.subr.mxu0 0.0
      %3026 = vmatpush1.msra.mxu0 0.0
      %3027 = vmatprep.subr.mxu0 0.0
      %3028 = vmatpush1.msra.mxu0 0.0
      %3029 = vmatprep.subr.mxu0 0.0
      %3030 = vmatpush1.msra.mxu0 0.0
      %3031 = vmatprep.subr.mxu0 0.0
      %3032 = vmatpush1.msra.mxu0 0.0
      %3033 = vmatprep.subr.mxu0 0.0
      %3034 = vmatpush1.msra.mxu0 0.0
      %3035 = vmatprep.subr.mxu0 0.0
      %3036 = vmatpush1.msra.mxu0 0.0
      %3037 = vmatprep.subr.mxu0 0.0
      %3038 = vmatpush1.msra.mxu0 0.0
      %3039 = vmatprep.subr.mxu0 0.0
      %3040 = vmatpush1.msra.mxu0 0.0
      %3041 = vmatprep.subr.mxu0 0.0
      %3042 = vmatpush1.msra.mxu0 0.0
      %3043 = vmatprep.subr.mxu0 0.0
      %3044 = vmatpush1.msra.mxu0 0.0
      %3045 = vmatprep.subr.mxu0 0.0
      %3046 = vmatpush1.msra.mxu0 0.0
      %3047 = vmatprep.subr.mxu0 0.0
      %3048 = vmatpush1.msra.mxu0 0.0
      %3049 = vmatprep.subr.mxu0 0.0
      %3050 = vmatpush1.msra.mxu0 0.0
      %3051 = vmatprep.subr.mxu0 0.0
      %3052 = vmatpush1.msra.mxu0 0.0
      %3053 = vmatprep.subr.mxu0 0.0
      %3054 = vmatpush1.msra.mxu0 0.0
      %3055 = vmatprep.subr.mxu0 0.0
      %3056 = vmatpush1.msra.mxu0 0.0
      %3057 = vmatprep.mubr.f32.mxu0 0.0
      %3058 = vmatmul.mubr.f32.gmra.mrb[0].mxu0 %v2943
      %v3059 = vpop.f32.mrb[0].mxu0
      %v3060 = vadd.f32 0.0, %v3059
      %v3061 = vpop.f32.mrb[0].mxu0
      %3062 = vmatprep.mubr.f32.mxu0 0.0
      %3063 = vmatmul.mubr.f32.gmra.mrb[0].mxu0 %v2946
      %v3064 = vpop.f32.mrb[0].mxu0
      %v3065 = vadd.f32 0.0, %v3064
      %v3066 = vpop.f32.mrb[0].mxu0
      %3067 = vmatprep.mubr.f32.mxu0 0.0
      %3068 = vmatmul.mubr.f32.gmra.mrb[0].mxu0 %v2949
      %v3069 = vpop.f32.mrb[0].mxu0
      %v3070 = vadd.f32 0.0, %v3069
      %v3071 = vpop.f32.mrb[0].mxu0
      %3072 = vmatprep.mubr.f32.mxu0 0.0
      %3073 = vmatmul.mubr.f32.gmra.mrb[0].mxu0 %v2952
      %v3074 = vpop.f32.mrb[0].mxu0
      %v3075 = vadd.f32 0.0, %v3074
      %v3076 = vpop.f32.mrb[0].mxu0
      %3077 = vmatprep.mubr.f32.mxu0 0.0
      %3078 = vmatmul.mubr.f32.gmra.mrb[0].mxu0 %v2955
      %v3079 = vpop.f32.mrb[0].mxu0
      %v3080 = vadd.f32 0.0, %v3079
      %v3081 = vpop.f32.mrb[0].mxu0
      %3082 = vmatprep.mubr.f32.mxu0 0.0
      %3083 = vmatmul.mubr.f32.gmra.mrb[0].mxu0 %v2958
      %v3084 = vpop.f32.mrb[0].mxu0
      %v3085 = vadd.f32 0.0, %v3084
      %v3086 = vpop.f32.mrb[0].mxu0
      %3087 = vmatprep.mubr.f32.mxu0 0.0
      %3088 = vmatmul.mubr.f32.gmra.mrb[0].mxu0 %v2961
      %v3089 = vpop.f32.mrb[0].mxu0
      %v3090 = vadd.f32 0.0, %v3089
      %v3091 = vpop.f32.mrb[0].mxu0
      %3092 = vmatprep.mubr.f32.mxu0 0.0
      %3093 = vmatmul.mubr.f32.gmra.mrb[0].mxu0 %v2964
      %v3094 = vpop.f32.mrb[0].mxu0
      %v3095 = vadd.f32 0.0, %v3094
      %v3096 = vpop.f32.mrb[0].mxu0
      %3097 = vmatprep.mubr.f32.mxu0 0.0
      %3098 = vmatmul.mubr.f32.gmra.mrb[0].mxu0 %v2967
      %v3099 = vpop.f32.mrb[0].mxu0
      %v3100 = vadd.f32 0.0, %v3099
      %v3101 = vpop.f32.mrb[0].mxu0
      %3102 = vmatprep.mubr.f32.mxu0 0.0
      %3103 = vmatmul.mubr.f32.gmra.mrb[0].mxu0 %v2970
      %v3104 = vpop.f32.mrb[0].mxu0
      %v3105 = vadd.f32 0.0, %v3104
      %v3106 = vpop.f32.mrb[0].mxu0
      %3107 = vmatprep.mubr.f32.mxu0 0.0
      %3108 = vmatmul.mubr.f32.gmra.mrb[0].mxu0 %v2973
      %v3109 = vpop.f32.mrb[0].mxu0
      %v3110 = vadd.f32 0.0, %v3109
      %v3111 = vpop.f32.mrb[0].mxu0
      %3112 = vmatprep.mubr.f32.mxu0 0.0
      %3113 = vmatmul.mubr.f32.gmra.mrb[0].mxu0 %v2976
      %v3114 = vpop.f32.mrb[0].mxu0
      %v3115 = vadd.f32 0.0, %v3114
      %v3116 = vpop.f32.mrb[0].mxu0
      %3117 = vmatprep.mubr.f32.mxu0 0.0
      %3118 = vmatmul.mubr.f32.gmra.mrb[0].mxu0 %v2979
      %v3119 = vpop.f32.mrb[0].mxu0
      %v3120 = vadd.f32 0.0, %v3119
      %v3121 = vpop.f32.mrb[0].mxu0
      %3122 = vmatprep.mubr.f32.mxu0 0.0
      %3123 = vmatmul.mubr.f32.gmra.mrb[0].mxu0 %v2982
      %v3124 = vpop.f32.mrb[0].mxu0
      %v3125 = vadd.f32 0.0, %v3124
      %v3126 = vpop.f32.mrb[0].mxu0
      %3127 = vmatprep.mubr.f32.mxu0 0.0
      %3128 = vmatmul.mubr.f32.gmra.mrb[0].mxu0 %v2985
      %v3129 = vpop.f32.mrb[0].mxu0
      %v3130 = vadd.f32 0.0, %v3129
      %v3131 = vpop.f32.mrb[0].mxu0
      %3132 = vmatprep.mubr.f32.mxu0 0.0
      %3133 = vmatmul.mubr.f32.gmra.mrb[0].mxu0 %v2988
      %v3134 = vpop.f32.mrb[0].mxu0
      %v3135 = vadd.f32 0.0, %v3134
      %v3136 = vpop.f32.mrb[0].mxu0
      %3137 = vdwg.mxu0
      %v3138 = vadd.f32 %v2925, %v3060
      %v3139 = vadd.f32 %v2926, %v3065
      %v3140 = vadd.f32 %v2927, %v3070
      %v3141 = vadd.f32 %v2928, %v3075
      %v3142 = vadd.f32 %v2929, %v3080
      %v3143 = vadd.f32 %v2930, %v3085
      %v3144 = vadd.f32 %v2931, %v3090
      %v3145 = vadd.f32 %v2932, %v3095
      %v3146 = vadd.f32 %v2933, %v3100
      %v3147 = vadd.f32 %v2934, %v3105
      %v3148 = vadd.f32 %v2935, %v3110
      %v3149 = vadd.f32 %v2936, %v3115
      %v3150 = vadd.f32 %v2937, %v3120
      %v3151 = vadd.f32 %v2938, %v3125
      %v3152 = vadd.f32 %v2939, %v3130
      %v3153 = vadd.f32 %v2940, %v3135
      %v3154 = vld [vmem:[%s5] sm:$0x1]
      %v3156 = vlaneseq
      %v3157 = vshrl.u32 %v3156, 7
      %v3158 = vsub.s32 0, %v3157
      %v3159 = vrot.slane %v3154, %v3158
      %v3161 = vmul.f32 %v3138, %v3159
      %v3162 = vmul.f32 %v3139, %v3159
      %v3163 = vmul.f32 %v3140, %v3159
      %v3164 = vmul.f32 %v3141, %v3159
      %v3165 = vmul.f32 %v3142, %v3159
      %v3166 = vmul.f32 %v3143, %v3159
      %v3167 = vmul.f32 %v3144, %v3159
      %v3168 = vmul.f32 %v3145, %v3159
      %v3169 = vmul.f32 %v3146, %v3159
      %v3170 = vmul.f32 %v3147, %v3159
      %v3171 = vmul.f32 %v3148, %v3159
      %v3172 = vmul.f32 %v3149, %v3159
      %v3173 = vmul.f32 %v3150, %v3159
      %v3174 = vmul.f32 %v3151, %v3159
      %v3175 = vmul.f32 %v3152, %v3159
      %v3176 = vmul.f32 %v3153, %v3159
      %v3177 = vld [vmem:[%s6] sm:$0x1]
      %v3179 = vlaneseq
      %v3180 = vshrl.u32 %v3179, 7
      %v3181 = vsub.s32 0, %v3180
      %v3182 = vrot.slane %v3177, %v3181
      %v3184 = vadd.f32 %v3161, %v3182
      %v3185 = vadd.f32 %v3162, %v3182
      %v3186 = vadd.f32 %v3163, %v3182
      %v3187 = vadd.f32 %v3164, %v3182
      %v3188 = vadd.f32 %v3165, %v3182
      %v3189 = vadd.f32 %v3166, %v3182
      %v3190 = vadd.f32 %v3167, %v3182
      %v3191 = vadd.f32 %v3168, %v3182
      %v3192 = vadd.f32 %v3169, %v3182
      %v3193 = vadd.f32 %v3170, %v3182
      %v3194 = vadd.f32 %v3171, %v3182
      %v3195 = vadd.f32 %v3172, %v3182
      %v3196 = vadd.f32 %v3173, %v3182
      %v3197 = vadd.f32 %v3174, %v3182
      %v3198 = vadd.f32 %v3175, %v3182
      %v3199 = vadd.f32 %v3176, %v3182
      %v3200 = vmin.f32 %v3184, 20.0
      %v3201 = vmin.f32 %v3185, 20.0
      %v3202 = vmin.f32 %v3186, 20.0
      %v3203 = vmin.f32 %v3187, 20.0
      %v3204 = vmin.f32 %v3188, 20.0
      %v3205 = vmin.f32 %v3189, 20.0
      %v3206 = vmin.f32 %v3190, 20.0
      %v3207 = vmin.f32 %v3191, 20.0
      %v3208 = vmin.f32 %v3192, 20.0
      %v3209 = vmin.f32 %v3193, 20.0
      %v3210 = vmin.f32 %v3194, 20.0
      %v3211 = vmin.f32 %v3195, 20.0
      %v3212 = vmin.f32 %v3196, 20.0
      %v3213 = vmin.f32 %v3197, 20.0
      %v3214 = vmin.f32 %v3198, 20.0
      %v3215 = vmin.f32 %v3199, 20.0
      %v3216 = vmul.f32 %v3200, 1.442695
      %v3217 = vpow.pop %v3216
      %v3218 = vmul.f32 %v3201, 1.442695
      %v3219 = vpow.pop %v3218
      %v3220 = vmul.f32 %v3202, 1.442695
      %v3221 = vpow.pop %v3220
      %v3222 = vmul.f32 %v3203, 1.442695
      %v3223 = vpow.pop %v3222
      %v3224 = vmul.f32 %v3204, 1.442695
      %v3225 = vpow.pop %v3224
      %v3226 = vmul.f32 %v3205, 1.442695
      %v3227 = vpow.pop %v3226
      %v3228 = vmul.f32 %v3206, 1.442695
      %v3229 = vpow.pop %v3228
      %v3230 = vmul.f32 %v3207, 1.442695
      %v3231 = vpow.pop %v3230
      %v3232 = vmul.f32 %v3208, 1.442695
      %v3233 = vpow.pop %v3232
      %v3234 = vmul.f32 %v3209, 1.442695
      %v3235 = vpow.pop %v3234
      %v3236 = vmul.f32 %v3210, 1.442695
      %v3237 = vpow.pop %v3236
      %v3238 = vmul.f32 %v3211, 1.442695
      %v3239 = vpow.pop %v3238
      %v3240 = vmul.f32 %v3212, 1.442695
      %v3241 = vpow.pop %v3240
      %v3242 = vmul.f32 %v3213, 1.442695
      %v3243 = vpow.pop %v3242
      %v3244 = vmul.f32 %v3214, 1.442695
      %v3245 = vpow.pop %v3244
      %v3246 = vmul.f32 %v3215, 1.442695
      %v3247 = vpow.pop %v3246
      %v3248 = vadd.f32 %v3217, 1.0
      %v3249 = vadd.f32 %v3219, 1.0
      %v3250 = vadd.f32 %v3221, 1.0
      %v3251 = vadd.f32 %v3223, 1.0
      %v3252 = vadd.f32 %v3225, 1.0
      %v3253 = vadd.f32 %v3227, 1.0
      %v3254 = vadd.f32 %v3229, 1.0
      %v3255 = vadd.f32 %v3231, 1.0
      %v3256 = vadd.f32 %v3233, 1.0
      %v3257 = vadd.f32 %v3235, 1.0
      %v3258 = vadd.f32 %v3237, 1.0
      %v3259 = vadd.f32 %v3239, 1.0
      %v3260 = vadd.f32 %v3241, 1.0
      %v3261 = vadd.f32 %v3243, 1.0
      %v3262 = vadd.f32 %v3245, 1.0
      %v3263 = vadd.f32 %v3247, 1.0
      %v3264 = vmul.f32 %v3248, %v3248
      %v3265 = vmul.f32 %v3249, %v3249
      %v3266 = vmul.f32 %v3250, %v3250
      %v3267 = vmul.f32 %v3251, %v3251
      %v3268 = vmul.f32 %v3252, %v3252
      %v3269 = vmul.f32 %v3253, %v3253
      %v3270 = vmul.f32 %v3254, %v3254
      %v3271 = vmul.f32 %v3255, %v3255
      %v3272 = vmul.f32 %v3256, %v3256
      %v3273 = vmul.f32 %v3257, %v3257
      %v3274 = vmul.f32 %v3258, %v3258
      %v3275 = vmul.f32 %v3259, %v3259
      %v3276 = vmul.f32 %v3260, %v3260
      %v3277 = vmul.f32 %v3261, %v3261
      %v3278 = vmul.f32 %v3262, %v3262
      %v3279 = vmul.f32 %v3263, %v3263
      %v3280 = vsub.f32 %v3264, 1.0
      %v3281 = vsub.f32 %v3265, 1.0
      %v3282 = vsub.f32 %v3266, 1.0
      %v3283 = vsub.f32 %v3267, 1.0
      %v3284 = vsub.f32 %v3268, 1.0
      %v3285 = vsub.f32 %v3269, 1.0
      %v3286 = vsub.f32 %v3270, 1.0
      %v3287 = vsub.f32 %v3271, 1.0
      %v3288 = vsub.f32 %v3272, 1.0
      %v3289 = vsub.f32 %v3273, 1.0
      %v3290 = vsub.f32 %v3274, 1.0
      %v3291 = vsub.f32 %v3275, 1.0
      %v3292 = vsub.f32 %v3276, 1.0
      %v3293 = vsub.f32 %v3277, 1.0
      %v3294 = vsub.f32 %v3278, 1.0
      %v3295 = vsub.f32 %v3279, 1.0
      %v3296 = vadd.f32 %v3264, 1.0
      %v3297 = vadd.f32 %v3265, 1.0
      %v3298 = vadd.f32 %v3266, 1.0
      %v3299 = vadd.f32 %v3267, 1.0
      %v3300 = vadd.f32 %v3268, 1.0
      %v3301 = vadd.f32 %v3269, 1.0
      %v3302 = vadd.f32 %v3270, 1.0
      %v3303 = vadd.f32 %v3271, 1.0
      %v3304 = vadd.f32 %v3272, 1.0
      %v3305 = vadd.f32 %v3273, 1.0
      %v3306 = vadd.f32 %v3274, 1.0
      %v3307 = vadd.f32 %v3275, 1.0
      %v3308 = vadd.f32 %v3276, 1.0
      %v3309 = vadd.f32 %v3277, 1.0
      %v3310 = vadd.f32 %v3278, 1.0
      %v3311 = vadd.f32 %v3279, 1.0
      %v3312 = vrcp.pop %v3296
      %v3313 = vmul.f32 %v3280, %v3312
      %v3314 = vrcp.pop %v3297
      %v3315 = vmul.f32 %v3281, %v3314
      %v3316 = vrcp.pop %v3298
      %v3317 = vmul.f32 %v3282, %v3316
      %v3318 = vrcp.pop %v3299
      %v3319 = vmul.f32 %v3283, %v3318
      %v3320 = vrcp.pop %v3300
      %v3321 = vmul.f32 %v3284, %v3320
      %v3322 = vrcp.pop %v3301
      %v3323 = vmul.f32 %v3285, %v3322
      %v3324 = vrcp.pop %v3302
      %v3325 = vmul.f32 %v3286, %v3324
      %v3326 = vrcp.pop %v3303
      %v3327 = vmul.f32 %v3287, %v3326
      %v3328 = vrcp.pop %v3304
      %v3329 = vmul.f32 %v3288, %v3328
      %v3330 = vrcp.pop %v3305
      %v3331 = vmul.f32 %v3289, %v3330
      %v3332 = vrcp.pop %v3306
      %v3333 = vmul.f32 %v3290, %v3332
      %v3334 = vrcp.pop %v3307
      %v3335 = vmul.f32 %v3291, %v3334
      %v3336 = vrcp.pop %v3308
      %v3337 = vmul.f32 %v3292, %v3336
      %v3338 = vrcp.pop %v3309
      %v3339 = vmul.f32 %v3293, %v3338
      %v3340 = vrcp.pop %v3310
      %v3341 = vmul.f32 %v3294, %v3340
      %v3342 = vrcp.pop %v3311
      %v3343 = vmul.f32 %v3295, %v3342
      %v3344 = vmul.f32 %v3184, %v3313
      %v3345 = vmul.f32 %v3185, %v3315
      %v3346 = vmul.f32 %v3186, %v3317
      %v3347 = vmul.f32 %v3187, %v3319
      %v3348 = vmul.f32 %v3188, %v3321
      %v3349 = vmul.f32 %v3189, %v3323
      %v3350 = vmul.f32 %v3190, %v3325
      %v3351 = vmul.f32 %v3191, %v3327
      %v3352 = vmul.f32 %v3192, %v3329
      %v3353 = vmul.f32 %v3193, %v3331
      %v3354 = vmul.f32 %v3194, %v3333
      %v3355 = vmul.f32 %v3195, %v3335
      %v3356 = vmul.f32 %v3196, %v3337
      %v3357 = vmul.f32 %v3197, %v3339
      %v3358 = vmul.f32 %v3198, %v3341
      %v3359 = vmul.f32 %v3199, %v3343
      %s3360 = scalar_lea.vmem %s303, 24
      %v3361 = vld [vmem:[%s3360 + $0x1] sm:$0xff]
      %v3362 = vld [vmem:[%s3360 + $0x9] sm:$0xff]
      %v3363 = vld [vmem:[%s3360 + $0x19] sm:$0xff]
      %v3364 = vld [vmem:[%s3360 + $0x21] sm:$0xff]
      %v3365 = vld [vmem:[%s3360 + $0x31] sm:$0xff]
      %v3366 = vld [vmem:[%s3360 + $0x39] sm:$0xff]
      %v3367 = vld [vmem:[%s3360 + $0x49] sm:$0xff]
      %v3368 = vld [vmem:[%s3360 + $0x51] sm:$0xff]
      %v3369 = vld [vmem:[%s3360 + $0x61] sm:$0xff]
      %v3370 = vld [vmem:[%s3360 + $0x69] sm:$0xff]
      %v3371 = vld [vmem:[%s3360 + $0x79] sm:$0xff]
      %v3372 = vld [vmem:[%s3360 + $0x81] sm:$0xff]
      %v3373 = vld [vmem:[%s3360 + $0x91] sm:$0xff]
      %v3374 = vld [vmem:[%s3360 + $0x99] sm:$0xff]
      %v3375 = vld [vmem:[%s3360 + $0xa9] sm:$0xff]
      %v3376 = vld [vmem:[%s3360 + $0xb1] sm:$0xff]
      %v3377 = vadd.f32 %v3361, %v3344
      %v3378 = vadd.f32 %v3362, %v3345
      %v3379 = vadd.f32 %v3363, %v3346
      %v3380 = vadd.f32 %v3364, %v3347
      %v3381 = vadd.f32 %v3365, %v3348
      %v3382 = vadd.f32 %v3366, %v3349
      %v3383 = vadd.f32 %v3367, %v3350
      %v3384 = vadd.f32 %v3368, %v3351
      %v3385 = vadd.f32 %v3369, %v3352
      %v3386 = vadd.f32 %v3370, %v3353
      %v3387 = vadd.f32 %v3371, %v3354
      %v3388 = vadd.f32 %v3372, %v3355
      %v3389 = vadd.f32 %v3373, %v3356
      %v3390 = vadd.f32 %v3374, %v3357
      %v3391 = vadd.f32 %v3375, %v3358
      %v3392 = vadd.f32 %v3376, %v3359
      %3393 = vst.msk [vmem:[%s312] sm:$0xff] %vm346, %v3377
      %3394 = vst.msk [vmem:[%s312 + $0x8] sm:$0xff] %vm346, %v3378
      %3395 = vst.msk [vmem:[%s312 + $0x10] sm:$0xff] %vm346, %v3379
      %3396 = vst.msk [vmem:[%s312 + $0x18] sm:$0xff] %vm346, %v3380
      %3397 = vst.msk [vmem:[%s312 + $0x20] sm:$0xff] %vm346, %v3381
      %3398 = vst.msk [vmem:[%s312 + $0x28] sm:$0xff] %vm346, %v3382
      %3399 = vst.msk [vmem:[%s312 + $0x30] sm:$0xff] %vm346, %v3383
      %3400 = vst.msk [vmem:[%s312 + $0x38] sm:$0xff] %vm346, %v3384
      %3401 = vst.msk [vmem:[%s312 + $0x40] sm:$0xff] %vm346, %v3385
      %3402 = vst.msk [vmem:[%s312 + $0x48] sm:$0xff] %vm346, %v3386
      %3403 = vst.msk [vmem:[%s312 + $0x50] sm:$0xff] %vm346, %v3387
      %3404 = vst.msk [vmem:[%s312 + $0x58] sm:$0xff] %vm346, %v3388
      %3405 = vst.msk [vmem:[%s312 + $0x60] sm:$0xff] %vm346, %v3389
      %3406 = vst.msk [vmem:[%s312 + $0x68] sm:$0xff] %vm346, %v3390
      %3407 = vst.msk [vmem:[%s312 + $0x70] sm:$0xff] %vm346, %v3391
      %3408 = vst.msk [vmem:[%s312 + $0x78] sm:$0xff] %vm346, %v3392
      %s3409 = smul.u32 %s22, 2
      %s3410 = sadd.s32 %s3409, %s23
      %p3411 = scmp.lt.s32.totalorder %s3410, 3
      %s3412 = scalar_select %p3411, %s3410, 3
      %s3413 = smul.addr %s3412, 16
      %s3414 = smul.addr %s3413, 8
      %s3415 = scalar_lea.vmem %s7, %s3414
      // Predicated region
      $region49: #{tpu_custom_call.1} parent=47 // pred_check
        %p3416 = pneg %p208
      $region50: #{tpu_custom_call.1} parent=47 // pred_check_branch
        %3418 = sbr.rel (%p3416) target = $region52
      $region51: #{tpu_custom_call.1} parent=47 // pred_region
        %s3419 = smul.u32 %s22, 2
        %s3420 = sadd.s32 %s3419, %s23
      $region52: #{tpu_custom_call.1} parent=47 // pred_fallthru
        _
    $region48: #{tpu_custom_call.1} parent=5 // pred_fallthru
      _
    %p3421 = scmp.le.s32.totalorder 2, %s13
    // Predicated region
    $region53: #{tpu_custom_call.1} parent=5 // pred_check
      %p3422 = pneg %p3421
    $region54: #{tpu_custom_call.1} parent=5 // pred_check_branch
      %3424 = sbr.rel (%p3422) target = $region56
    $region55: #{tpu_custom_call.1} parent=5 // pred_region
      %s3425 = ssub.s32 %s13, 2
      // Predicated region
      $region57: #{tpu_custom_call.1} parent=55 // pred_check
        %p3426 = pneg %p214
      $region58: #{tpu_custom_call.1} parent=55 // pred_check_branch
        %3428 = sbr.rel (%p3426) target = $region60
      $region59: #{tpu_custom_call.1} parent=55 // pred_region
        %s3429 = smul.u32 %s24, 2
        %s3430 = sadd.s32 %s3429, %s25
        %p3431 = scmp.lt.s32.totalorder %s3430, 3
        %s3432 = scalar_select %p3431, %s3430, 3
        %s3433 = smul.addr %s3432, 16
        %s3434 = smul.addr %s3433, 8
        %s3435 = scalar_lea.vmem %s7, %s3434
      $region60: #{tpu_custom_call.1} parent=55 // pred_fallthru
        _
    $region56: #{tpu_custom_call.1} parent=5 // pred_fallthru
      _
  $region6: #{tpu_custom_call.1} parent=0 // loop_footer
    %s17 = sadd.s32 1, %s13
  $region7: #{tpu_custom_call.1} parent=0 // loop_footer_branch
    %12 = sbr.rel target = $region3
  $region8: #{tpu_custom_call.1} parent=0 // loop_exit
    _

</llo_original>
